<compile_context>
chip_gen: v7x
topology: tpu7x:2x2x1
jax: 0.10.0
libtpu: 0.0.40
codegen_flags: <defaults>
</compile_context>

<pallas_src>
import functools

import jax
import jax.numpy as jnp
from jax.experimental import pallas as pl
from jax.experimental.pallas import tpu as pltpu

HIDDEN = (64, 128, 256, 512, 512)
LANE = 128
MIN_TB = 16  # bf16 packs (16, 128) rows per vreg


def _round_up(n, m):
    return (n + m - 1) // m * m


# ----------------------------------------------------------------------------
# Kernel
# ----------------------------------------------------------------------------
def _dqn_kernel(x_ref,
                w1, b1, w2, b2, w3, b3, w4, b4, w5, b5,
                wh, bh,
                out_ref, *, dueling, out_dim):
    # Trunk: 5x (Linear -> relu6). bf16 operands, f32 MXU accumulation.
    h = x_ref[...]  # already bf16 (cast in the wrapper)
    for w_ref, b_ref in ((w1, b1), (w2, b2), (w3, b3), (w4, b4), (w5, b5)):
        z = jnp.dot(h, w_ref[...], preferred_element_type=jnp.float32) + b_ref[...]
        # clip kept in f32: exact reference parity; VALU has slack under the MXU.
        h = jnp.clip(z, 0.0, 6.0).astype(jnp.bfloat16)

    # Head: single lane-padded (512, 128) matmul.
    y = jnp.dot(h, wh[...], preferred_element_type=jnp.float32) + bh[...]  # (TB, 128) f32

    if dueling:
        # Head layout: cols [0, out_dim) = advantages, col out_dim = state value.
        col = jax.lax.broadcasted_iota(jnp.int32, y.shape, 1)
        adv_max = jnp.max(jnp.where(col < out_dim, y, -jnp.inf), axis=1, keepdims=True)
        sv = jnp.sum(jnp.where(col == out_dim, y, 0.0), axis=1, keepdims=True)
        # Columns >= out_dim hold junk; the wrapper slices them away.
        out_ref[...] = (sv + (y - adv_max)).astype(out_ref.dtype)
    else:
        out_ref[...] = y.astype(out_ref.dtype)


# ----------------------------------------------------------------------------
# Parameter init (PyTorch nn.Linear-style) and preparation (bf16, pad, fuse)
# ----------------------------------------------------------------------------
def init_dqn_params(key, input_dim, output_dim, network_type="DQN"):
    """U(-1/sqrt(fan_in), 1/sqrt(fan_in)) like torch nn.Linear. W is [in, out]."""
    dims = (input_dim,) + HIDDEN
    params = {}
    for i in range(5):
        key, kw, kb = jax.random.split(key, 3)
        fan_in, fan_out = dims[i], dims[i + 1]
        bound = 1.0 / jnp.sqrt(fan_in)
        params[f"w{i+1}"] = jax.random.uniform(kw, (fan_in, fan_out), jnp.float32, -bound, bound)
        params[f"b{i+1}"] = jax.random.uniform(kb, (1, fan_out), jnp.float32, -bound, bound)
    bound = 1.0 / jnp.sqrt(512)
    if network_type == "DuelingDQN":
        key, k1, k2, k3, k4 = jax.random.split(key, 5)
        params["wv"] = jax.random.uniform(k1, (512, 1), jnp.float32, -bound, bound)
        params["bv"] = jax.random.uniform(k2, (1, 1), jnp.float32, -bound, bound)
        params["wa"] = jax.random.uniform(k3, (512, output_dim), jnp.float32, -bound, bound)
        params["ba"] = jax.random.uniform(k4, (1, output_dim), jnp.float32, -bound, bound)
    else:
        key, k1, k2 = jax.random.split(key, 3)
        params["wo"] = jax.random.uniform(k1, (512, output_dim), jnp.float32, -bound, bound)
        params["bo"] = jax.random.uniform(k2, (1, output_dim), jnp.float32, -bound, bound)
    return params


def prepare_params(params, network_type="DQN"):
    """Cast trunk weights to bf16; fuse + lane-pad the head to 128 columns."""
    prep = {}
    for i in range(1, 6):
        prep[f"w{i}"] = params[f"w{i}"].astype(jnp.bfloat16)
        prep[f"b{i}"] = params[f"b{i}"].astype(jnp.float32)
    if network_type == "DuelingDQN":
        wh = jnp.concatenate([params["wa"], params["wv"]], axis=1)  # [512, A+1]
        bh = jnp.concatenate([params["ba"], params["bv"]], axis=1)  # [1,   A+1]
    else:
        wh = params["wo"]
        bh = params["bo"]
    head_cols = _round_up(wh.shape[1], LANE)
    prep["wh"] = jnp.pad(wh, ((0, 0), (0, head_cols - wh.shape[1]))).astype(jnp.bfloat16)
    prep["bh"] = jnp.pad(bh, ((0, 0), (0, head_cols - bh.shape[1]))).astype(jnp.float32)
    return prep


# ----------------------------------------------------------------------------
# Forward wrapper
# ----------------------------------------------------------------------------
def dqn_forward(x, prep, output_dim, network_type="DQN", tb=1024):
    B, input_dim = x.shape
    dueling = network_type == "DuelingDQN"
    head_cols = prep["wh"].shape[1]

    # bf16 input stream: halves x HBM->VMEM traffic and its double-buffer VMEM.
    x = x.astype(jnp.bfloat16)

    # ---- batch tiling -------------------------------------------------------
    # TB: multiple of 16 (bf16 sublane pack), <= tb (default 1024 keeps the
    # 256-deep v6e/v7x MXU fed; live VMEM stays at a few MiB on every gen).
    # n_tiles is forced even (>=2) once the batch allows, so the "parallel"
    # axis shards across both v7x TensorCores; TB ~= B/n_tiles limits
    # last-tile padding waste to <16 rows.
    B16 = _round_up(B, MIN_TB)
    if B16 <= MIN_TB:
        n_tiles = 1
    else:
        n_tiles = max(2, pl.cdiv(B16, tb))
        if n_tiles % 2:
            n_tiles += 1
    TB = _round_up(pl.cdiv(B16, n_tiles), MIN_TB)
    B_pad = n_tiles * TB
    if B_pad != B:
        x = jnp.pad(x, ((0, B_pad - B), (0, 0)))

    weight_keys = ("w1", "b1", "w2", "b2", "w3", "b3", "w4", "b4", "w5", "b5", "wh", "bh")
    weight_args = tuple(prep[k] for k in weight_keys)

    # Cost estimate: trunk + head matmul flops; weights + bf16 x + bf16 out bytes.
    dims = (input_dim,) + HIDDEN
    flops_per_row = sum(2 * dims[i] * dims[i + 1] for i in range(5)) + 2 * 512 * head_cols
    bytes_accessed = (x.size * x.dtype.itemsize
                      + sum(a.size * a.dtype.itemsize for a in weight_args)
                      + B_pad * head_cols * 2)  # bf16 output slab
    cost = pl.CostEstimate(flops=int(flops_per_row * B_pad),
                           transcendentals=0,
                           bytes_accessed=int(bytes_accessed))

    kernel = functools.partial(_dqn_kernel, dueling=dueling, out_dim=output_dim)

    def make_call(weight_mode):
        # Weights/biases are grid-invariant: constant index_map keeps them
        # VMEM-resident across grid steps; Buffered(1) drops the unused second
        # pipeline buffer (~1 MiB of VMEM headroom, mostly relevant on v7x).
        def wspec(arr):
            if weight_mode is None:
                return pl.BlockSpec(arr.shape, lambda i: (0, 0))
            return pl.BlockSpec(arr.shape, lambda i: (0, 0), pipeline_mode=weight_mode)

        in_specs = [pl.BlockSpec((TB, input_dim), lambda i: (i, 0))]
        in_specs += [wspec(a) for a in weight_args]
        return pl.pallas_call(
            kernel,
            out_shape=jax.ShapeDtypeStruct((B_pad, head_cols), jnp.bfloat16),
            grid=(n_tiles,),
            in_specs=in_specs,
            out_specs=pl.BlockSpec((TB, head_cols), lambda i: (i, 0)),
            compiler_params=pltpu.CompilerParams(
                dimension_semantics=("parallel",)),  # megacore sharding on v7x
            cost_estimate=cost,
        )

    try:
        out = make_call(pl.Buffered(1))(x, *weight_args)
    except Exception:
        # Installed Mosaic without single-buffer pipeline_mode support: default
        # double-buffering is still correct, just keeps an extra weight copy.
        out = make_call(None)(x, *weight_args)

    # Slice off batch padding / junk lanes; return f32 like the torch module.
    return out[:B, :output_dim].astype(jnp.float32)


# ----------------------------------------------------------------------------
# Pure-JAX reference (same bf16 quantization of weights/activations)
# ----------------------------------------------------------------------------
def dqn_reference(x, params, network_type="DQN"):
    h = x.astype(jnp.bfloat16).astype(jnp.float32)
    for i in range(5):
        w = params[f"w{i+1}"].astype(jnp.bfloat16).astype(jnp.float32)
        h = jnp.clip(h @ w + params[f"b{i+1}"], 0.0, 6.0)
        h = h.astype(jnp.bfloat16).astype(jnp.float32)
    if network_type == "DuelingDQN":
        wv = params["wv"].astype(jnp.bfloat16).astype(jnp.float32)
        wa = params["wa"].astype(jnp.bfloat16).astype(jnp.float32)
        sv = h @ wv + params["bv"]
        adv = h @ wa + params["ba"]
        return sv + (adv - jnp.max(adv, axis=1, keepdims=True))
    wo = params["wo"].astype(jnp.bfloat16).astype(jnp.float32)
    return h @ wo + params["bo"]


if __name__ == "__main__":
    input_dim, output_dim = 16, 4
    key = jax.random.PRNGKey(0)

    ok = True
    for batch in (2, 37):  # grid=1 tile, and grid=2 "parallel" tiles (padded batch)
        key, kx = jax.random.split(key)
        x = jax.random.normal(kx, (batch, input_dim), jnp.float32)
        for net_type in ("DQN", "DuelingDQN"):
            params = init_dqn_params(jax.random.PRNGKey(0), input_dim, output_dim, net_type)
            prep = prepare_params(params, net_type)
            out = jax.block_until_ready(dqn_forward(x, prep, output_dim, net_type))
            ref = dqn_reference(x, params, net_type)
            assert out.shape == (batch, output_dim), out.shape
            # bf16 weights/activations + bf16 output writeback -> loose tolerance.
            ok &= bool(jnp.allclose(out, ref, atol=3e-2, rtol=3e-2))

    print("KERNEL_OK" if ok else "MISMATCH")
</pallas_src>

<mosaic_0001>
module attributes {stable_mosaic.version = 11 : i64} {
  func.func @_dqn_kernel(%arg0: i32, %arg1: memref<16x16xbf16, #tpu.memory_space<vmem>>, %arg2: memref<16x64xbf16, #tpu.memory_space<vmem>>, %arg3: memref<1x64xf32, #tpu.memory_space<vmem>>, %arg4: memref<64x128xbf16, #tpu.memory_space<vmem>>, %arg5: memref<1x128xf32, #tpu.memory_space<vmem>>, %arg6: memref<128x256xbf16, #tpu.memory_space<vmem>>, %arg7: memref<1x256xf32, #tpu.memory_space<vmem>>, %arg8: memref<256x512xbf16, #tpu.memory_space<vmem>>, %arg9: memref<1x512xf32, #tpu.memory_space<vmem>>, %arg10: memref<512x512xbf16, #tpu.memory_space<vmem>>, %arg11: memref<1x512xf32, #tpu.memory_space<vmem>>, %arg12: memref<512x128xbf16, #tpu.memory_space<vmem>>, %arg13: memref<1x128xf32, #tpu.memory_space<vmem>>, %arg14: memref<16x128xbf16, #tpu.memory_space<vmem>>) attributes {dimension_semantics = [#tpu.dimension_semantics<parallel>], iteration_bounds = array<i64: 1>, scalar_prefetch = 0 : i64, scratch_operands = 0 : i64, tpu.core_type = #tpu.core_type<tc>, window_params = [{transform_indices = @transform_0, window_bounds = array<i64: 16, 16>}, {pipeline_mode = #tpu.pipeline_mode<synchronous>, transform_indices = @transform_1, window_bounds = array<i64: 16, 64>}, {pipeline_mode = #tpu.pipeline_mode<synchronous>, transform_indices = @transform_2, window_bounds = array<i64: 1, 64>}, {pipeline_mode = #tpu.pipeline_mode<synchronous>, transform_indices = @transform_3, window_bounds = array<i64: 64, 128>}, {pipeline_mode = #tpu.pipeline_mode<synchronous>, transform_indices = @transform_4, window_bounds = array<i64: 1, 128>}, {pipeline_mode = #tpu.pipeline_mode<synchronous>, transform_indices = @transform_5, window_bounds = array<i64: 128, 256>}, {pipeline_mode = #tpu.pipeline_mode<synchronous>, transform_indices = @transform_6, window_bounds = array<i64: 1, 256>}, {pipeline_mode = #tpu.pipeline_mode<synchronous>, transform_indices = @transform_7, window_bounds = array<i64: 256, 512>}, {pipeline_mode = #tpu.pipeline_mode<synchronous>, transform_indices = @transform_8, window_bounds = array<i64: 1, 512>}, {pipeline_mode = #tpu.pipeline_mode<synchronous>, transform_indices = @transform_9, window_bounds = array<i64: 512, 512>}, {pipeline_mode = #tpu.pipeline_mode<synchronous>, transform_indices = @transform_10, window_bounds = array<i64: 1, 512>}, {pipeline_mode = #tpu.pipeline_mode<synchronous>, transform_indices = @transform_11, window_bounds = array<i64: 512, 128>}, {pipeline_mode = #tpu.pipeline_mode<synchronous>, transform_indices = @transform_12, window_bounds = array<i64: 1, 128>}, {transform_indices = @transform_13, window_bounds = array<i64: 16, 128>}]} {
    %c0 = arith.constant 0 : index
    %c0_0 = arith.constant 0 : index
    %0 = vector.load %arg1[%c0, %c0_0] : memref<16x16xbf16, #tpu.memory_space<vmem>>, vector<16x16xbf16>
    %c0_1 = arith.constant 0 : index
    %c0_2 = arith.constant 0 : index
    %1 = vector.load %arg2[%c0_1, %c0_2] : memref<16x64xbf16, #tpu.memory_space<vmem>>, vector<16x64xbf16>
    %cst = arith.constant dense<0.000000e+00> : vector<16x64xf32>
    %2 = tpu.matmul %0, %1, %cst {dimension_numbers = #tpu.dot_dimension_numbers<[1], [0], [0], [1], [0, 0, 1, 1], [], []>} : vector<16x16xbf16>, vector<16x64xbf16>, vector<16x64xf32> -> vector<16x64xf32>
    %c0_3 = arith.constant 0 : index
    %c0_4 = arith.constant 0 : index
    %3 = vector.load %arg3[%c0_3, %c0_4] : memref<1x64xf32, #tpu.memory_space<vmem>>, vector<1x64xf32>
    %4 = vector.broadcast %3 : vector<1x64xf32> to vector<16x64xf32>
    %5 = arith.addf %2, %4 : vector<16x64xf32>
    %cst_5 = arith.constant 0.000000e+00 : f32
    %cst_6 = arith.constant 6.000000e+00 : f32
    %6 = vector.broadcast %cst_5 : f32 to vector<16x64xf32>
    %7 = arith.maximumf %6, %5 : vector<16x64xf32>
    %8 = vector.broadcast %cst_6 : f32 to vector<16x64xf32>
    %9 = arith.minimumf %8, %7 : vector<16x64xf32>
    %10 = arith.truncf %9 : vector<16x64xf32> to vector<16x64xbf16>
    %c0_7 = arith.constant 0 : index
    %c0_8 = arith.constant 0 : index
    %11 = vector.load %arg4[%c0_7, %c0_8] : memref<64x128xbf16, #tpu.memory_space<vmem>>, vector<64x128xbf16>
    %cst_9 = arith.constant dense<0.000000e+00> : vector<16x128xf32>
    %12 = tpu.matmul %10, %11, %cst_9 {dimension_numbers = #tpu.dot_dimension_numbers<[1], [0], [0], [1], [0, 0, 1, 1], [], []>} : vector<16x64xbf16>, vector<64x128xbf16>, vector<16x128xf32> -> vector<16x128xf32>
    %c0_10 = arith.constant 0 : index
    %c0_11 = arith.constant 0 : index
    %13 = vector.load %arg5[%c0_10, %c0_11] : memref<1x128xf32, #tpu.memory_space<vmem>>, vector<1x128xf32>
    %14 = vector.broadcast %13 : vector<1x128xf32> to vector<16x128xf32>
    %15 = arith.addf %12, %14 : vector<16x128xf32>
    %cst_12 = arith.constant 0.000000e+00 : f32
    %cst_13 = arith.constant 6.000000e+00 : f32
    %16 = vector.broadcast %cst_12 : f32 to vector<16x128xf32>
    %17 = arith.maximumf %16, %15 : vector<16x128xf32>
    %18 = vector.broadcast %cst_13 : f32 to vector<16x128xf32>
    %19 = arith.minimumf %18, %17 : vector<16x128xf32>
    %20 = arith.truncf %19 : vector<16x128xf32> to vector<16x128xbf16>
    %c0_14 = arith.constant 0 : index
    %c0_15 = arith.constant 0 : index
    %21 = vector.load %arg6[%c0_14, %c0_15] : memref<128x256xbf16, #tpu.memory_space<vmem>>, vector<128x256xbf16>
    %cst_16 = arith.constant dense<0.000000e+00> : vector<16x256xf32>
    %22 = tpu.matmul %20, %21, %cst_16 {dimension_numbers = #tpu.dot_dimension_numbers<[1], [0], [0], [1], [0, 0, 1, 1], [], []>} : vector<16x128xbf16>, vector<128x256xbf16>, vector<16x256xf32> -> vector<16x256xf32>
    %c0_17 = arith.constant 0 : index
    %c0_18 = arith.constant 0 : index
    %23 = vector.load %arg7[%c0_17, %c0_18] : memref<1x256xf32, #tpu.memory_space<vmem>>, vector<1x256xf32>
    %24 = vector.broadcast %23 : vector<1x256xf32> to vector<16x256xf32>
    %25 = arith.addf %22, %24 : vector<16x256xf32>
    %cst_19 = arith.constant 0.000000e+00 : f32
    %cst_20 = arith.constant 6.000000e+00 : f32
    %26 = vector.broadcast %cst_19 : f32 to vector<16x256xf32>
    %27 = arith.maximumf %26, %25 : vector<16x256xf32>
    %28 = vector.broadcast %cst_20 : f32 to vector<16x256xf32>
    %29 = arith.minimumf %28, %27 : vector<16x256xf32>
    %30 = arith.truncf %29 : vector<16x256xf32> to vector<16x256xbf16>
    %c0_21 = arith.constant 0 : index
    %c0_22 = arith.constant 0 : index
    %31 = vector.load %arg8[%c0_21, %c0_22] : memref<256x512xbf16, #tpu.memory_space<vmem>>, vector<256x512xbf16>
    %cst_23 = arith.constant dense<0.000000e+00> : vector<16x512xf32>
    %32 = tpu.matmul %30, %31, %cst_23 {dimension_numbers = #tpu.dot_dimension_numbers<[1], [0], [0], [1], [0, 0, 1, 1], [], []>} : vector<16x256xbf16>, vector<256x512xbf16>, vector<16x512xf32> -> vector<16x512xf32>
    %c0_24 = arith.constant 0 : index
    %c0_25 = arith.constant 0 : index
    %33 = vector.load %arg9[%c0_24, %c0_25] : memref<1x512xf32, #tpu.memory_space<vmem>>, vector<1x512xf32>
    %34 = vector.broadcast %33 : vector<1x512xf32> to vector<16x512xf32>
    %35 = arith.addf %32, %34 : vector<16x512xf32>
    %cst_26 = arith.constant 0.000000e+00 : f32
    %cst_27 = arith.constant 6.000000e+00 : f32
    %36 = vector.broadcast %cst_26 : f32 to vector<16x512xf32>
    %37 = arith.maximumf %36, %35 : vector<16x512xf32>
    %38 = vector.broadcast %cst_27 : f32 to vector<16x512xf32>
    %39 = arith.minimumf %38, %37 : vector<16x512xf32>
    %40 = arith.truncf %39 : vector<16x512xf32> to vector<16x512xbf16>
    %c0_28 = arith.constant 0 : index
    %c0_29 = arith.constant 0 : index
    %41 = vector.load %arg10[%c0_28, %c0_29] : memref<512x512xbf16, #tpu.memory_space<vmem>>, vector<512x512xbf16>
    %cst_30 = arith.constant dense<0.000000e+00> : vector<16x512xf32>
    %42 = tpu.matmul %40, %41, %cst_30 {dimension_numbers = #tpu.dot_dimension_numbers<[1], [0], [0], [1], [0, 0, 1, 1], [], []>} : vector<16x512xbf16>, vector<512x512xbf16>, vector<16x512xf32> -> vector<16x512xf32>
    %c0_31 = arith.constant 0 : index
    %c0_32 = arith.constant 0 : index
    %43 = vector.load %arg11[%c0_31, %c0_32] : memref<1x512xf32, #tpu.memory_space<vmem>>, vector<1x512xf32>
    %44 = vector.broadcast %43 : vector<1x512xf32> to vector<16x512xf32>
    %45 = arith.addf %42, %44 : vector<16x512xf32>
    %cst_33 = arith.constant 0.000000e+00 : f32
    %cst_34 = arith.constant 6.000000e+00 : f32
    %46 = vector.broadcast %cst_33 : f32 to vector<16x512xf32>
    %47 = arith.maximumf %46, %45 : vector<16x512xf32>
    %48 = vector.broadcast %cst_34 : f32 to vector<16x512xf32>
    %49 = arith.minimumf %48, %47 : vector<16x512xf32>
    %50 = arith.truncf %49 : vector<16x512xf32> to vector<16x512xbf16>
    %c0_35 = arith.constant 0 : index
    %c0_36 = arith.constant 0 : index
    %51 = vector.load %arg12[%c0_35, %c0_36] : memref<512x128xbf16, #tpu.memory_space<vmem>>, vector<512x128xbf16>
    %cst_37 = arith.constant dense<0.000000e+00> : vector<16x128xf32>
    %52 = tpu.matmul %50, %51, %cst_37 {dimension_numbers = #tpu.dot_dimension_numbers<[1], [0], [0], [1], [0, 0, 1, 1], [], []>} : vector<16x512xbf16>, vector<512x128xbf16>, vector<16x128xf32> -> vector<16x128xf32>
    %c0_38 = arith.constant 0 : index
    %c0_39 = arith.constant 0 : index
    %53 = vector.load %arg13[%c0_38, %c0_39] : memref<1x128xf32, #tpu.memory_space<vmem>>, vector<1x128xf32>
    %54 = vector.broadcast %53 : vector<1x128xf32> to vector<16x128xf32>
    %55 = arith.addf %52, %54 : vector<16x128xf32>
    %56 = arith.truncf %55 : vector<16x128xf32> to vector<16x128xbf16>
    %c0_40 = arith.constant 0 : index
    %c0_41 = arith.constant 0 : index
    %57 = vector.load %arg14[%c0_40, %c0_41] : memref<16x128xbf16, #tpu.memory_space<vmem>>, vector<16x128xbf16>
    tpu.vector_store %arg14[%c0_40, %c0_41], %56 {strides = array<i32>} : memref<16x128xbf16, #tpu.memory_space<vmem>>, vector<16x128xbf16>,
    return
  }
  func.func @transform_0(%arg0: i32) -> (i32, i32) {
    %c0_i32 = arith.constant 0 : i32
    %c0_i32_0 = arith.constant 0 : i32
    return %arg0, %c0_i32 : i32, i32
  }
  func.func @transform_1(%arg0: i32) -> (i32, i32) {
    %c0_i32 = arith.constant 0 : i32
    %c0_i32_0 = arith.constant 0 : i32
    %c0_i32_1 = arith.constant 0 : i32
    return %c0_i32, %c0_i32_0 : i32, i32
  }
  func.func @transform_2(%arg0: i32) -> (i32, i32) {
    %c0_i32 = arith.constant 0 : i32
    %c0_i32_0 = arith.constant 0 : i32
    %c0_i32_1 = arith.constant 0 : i32
    return %c0_i32, %c0_i32_0 : i32, i32
  }
  func.func @transform_3(%arg0: i32) -> (i32, i32) {
    %c0_i32 = arith.constant 0 : i32
    %c0_i32_0 = arith.constant 0 : i32
    %c0_i32_1 = arith.constant 0 : i32
    return %c0_i32, %c0_i32_0 : i32, i32
  }
  func.func @transform_4(%arg0: i32) -> (i32, i32) {
    %c0_i32 = arith.constant 0 : i32
    %c0_i32_0 = arith.constant 0 : i32
    %c0_i32_1 = arith.constant 0 : i32
    return %c0_i32, %c0_i32_0 : i32, i32
  }
  func.func @transform_5(%arg0: i32) -> (i32, i32) {
    %c0_i32 = arith.constant 0 : i32
    %c0_i32_0 = arith.constant 0 : i32
    %c0_i32_1 = arith.constant 0 : i32
    return %c0_i32, %c0_i32_0 : i32, i32
  }
  func.func @transform_6(%arg0: i32) -> (i32, i32) {
    %c0_i32 = arith.constant 0 : i32
    %c0_i32_0 = arith.constant 0 : i32
    %c0_i32_1 = arith.constant 0 : i32
    return %c0_i32, %c0_i32_0 : i32, i32
  }
  func.func @transform_7(%arg0: i32) -> (i32, i32) {
    %c0_i32 = arith.constant 0 : i32
    %c0_i32_0 = arith.constant 0 : i32
    %c0_i32_1 = arith.constant 0 : i32
    return %c0_i32, %c0_i32_0 : i32, i32
  }
  func.func @transform_8(%arg0: i32) -> (i32, i32) {
    %c0_i32 = arith.constant 0 : i32
    %c0_i32_0 = arith.constant 0 : i32
    %c0_i32_1 = arith.constant 0 : i32
    return %c0_i32, %c0_i32_0 : i32, i32
  }
  func.func @transform_9(%arg0: i32) -> (i32, i32) {
    %c0_i32 = arith.constant 0 : i32
    %c0_i32_0 = arith.constant 0 : i32
    %c0_i32_1 = arith.constant 0 : i32
    return %c0_i32, %c0_i32_0 : i32, i32
  }
  func.func @transform_10(%arg0: i32) -> (i32, i32) {
    %c0_i32 = arith.constant 0 : i32
    %c0_i32_0 = arith.constant 0 : i32
    %c0_i32_1 = arith.constant 0 : i32
    return %c0_i32, %c0_i32_0 : i32, i32
  }
  func.func @transform_11(%arg0: i32) -> (i32, i32) {
    %c0_i32 = arith.constant 0 : i32
    %c0_i32_0 = arith.constant 0 : i32
    %c0_i32_1 = arith.constant 0 : i32
    return %c0_i32, %c0_i32_0 : i32, i32
  }
  func.func @transform_12(%arg0: i32) -> (i32, i32) {
    %c0_i32 = arith.constant 0 : i32
    %c0_i32_0 = arith.constant 0 : i32
    %c0_i32_1 = arith.constant 0 : i32
    return %c0_i32, %c0_i32_0 : i32, i32
  }
  func.func @transform_13(%arg0: i32) -> (i32, i32) {
    %c0_i32 = arith.constant 0 : i32
    %c0_i32_0 = arith.constant 0 : i32
    return %arg0, %c0_i32 : i32, i32
  }
}

module attributes {stable_mosaic.version = 11 : i64} {
  func.func @_dqn_kernel(%arg0: i32, %arg1: memref<16x16xbf16, #tpu.memory_space<vmem>>, %arg2: memref<16x64xbf16, #tpu.memory_space<vmem>>, %arg3: memref<1x64xf32, #tpu.memory_space<vmem>>, %arg4: memref<64x128xbf16, #tpu.memory_space<vmem>>, %arg5: memref<1x128xf32, #tpu.memory_space<vmem>>, %arg6: memref<128x256xbf16, #tpu.memory_space<vmem>>, %arg7: memref<1x256xf32, #tpu.memory_space<vmem>>, %arg8: memref<256x512xbf16, #tpu.memory_space<vmem>>, %arg9: memref<1x512xf32, #tpu.memory_space<vmem>>, %arg10: memref<512x512xbf16, #tpu.memory_space<vmem>>, %arg11: memref<1x512xf32, #tpu.memory_space<vmem>>, %arg12: memref<512x128xbf16, #tpu.memory_space<vmem>>, %arg13: memref<1x128xf32, #tpu.memory_space<vmem>>, %arg14: memref<16x128xbf16, #tpu.memory_space<vmem>>) attributes {dimension_semantics = [#tpu.dimension_semantics<parallel>], iteration_bounds = array<i64: 1>, scalar_prefetch = 0 : i64, scratch_operands = 0 : i64, tpu.core_type = #tpu.core_type<tc>, window_params = [{transform_indices = @transform_0, window_bounds = array<i64: 16, 16>}, {pipeline_mode = #tpu.pipeline_mode<synchronous>, transform_indices = @transform_1, window_bounds = array<i64: 16, 64>}, {pipeline_mode = #tpu.pipeline_mode<synchronous>, transform_indices = @transform_2, window_bounds = array<i64: 1, 64>}, {pipeline_mode = #tpu.pipeline_mode<synchronous>, transform_indices = @transform_3, window_bounds = array<i64: 64, 128>}, {pipeline_mode = #tpu.pipeline_mode<synchronous>, transform_indices = @transform_4, window_bounds = array<i64: 1, 128>}, {pipeline_mode = #tpu.pipeline_mode<synchronous>, transform_indices = @transform_5, window_bounds = array<i64: 128, 256>}, {pipeline_mode = #tpu.pipeline_mode<synchronous>, transform_indices = @transform_6, window_bounds = array<i64: 1, 256>}, {pipeline_mode = #tpu.pipeline_mode<synchronous>, transform_indices = @transform_7, window_bounds = array<i64: 256, 512>}, {pipeline_mode = #tpu.pipeline_mode<synchronous>, transform_indices = @transform_8, window_bounds = array<i64: 1, 512>}, {pipeline_mode = #tpu.pipeline_mode<synchronous>, transform_indices = @transform_9, window_bounds = array<i64: 512, 512>}, {pipeline_mode = #tpu.pipeline_mode<synchronous>, transform_indices = @transform_10, window_bounds = array<i64: 1, 512>}, {pipeline_mode = #tpu.pipeline_mode<synchronous>, transform_indices = @transform_11, window_bounds = array<i64: 512, 128>}, {pipeline_mode = #tpu.pipeline_mode<synchronous>, transform_indices = @transform_12, window_bounds = array<i64: 1, 128>}, {transform_indices = @transform_13, window_bounds = array<i64: 16, 128>}]} {
    %c0 = arith.constant 0 : index
    %c0_0 = arith.constant 0 : index
    %0 = vector.load %arg1[%c0, %c0_0] : memref<16x16xbf16, #tpu.memory_space<vmem>>, vector<16x16xbf16>
    %c0_1 = arith.constant 0 : index
    %c0_2 = arith.constant 0 : index
    %1 = vector.load %arg2[%c0_1, %c0_2] : memref<16x64xbf16, #tpu.memory_space<vmem>>, vector<16x64xbf16>
    %cst = arith.constant dense<0.000000e+00> : vector<16x64xf32>
    %2 = tpu.matmul %0, %1, %cst {dimension_numbers = #tpu.dot_dimension_numbers<[1], [0], [0], [1], [0, 0, 1, 1], [], []>} : vector<16x16xbf16>, vector<16x64xbf16>, vector<16x64xf32> -> vector<16x64xf32>
    %c0_3 = arith.constant 0 : index
    %c0_4 = arith.constant 0 : index
    %3 = vector.load %arg3[%c0_3, %c0_4] : memref<1x64xf32, #tpu.memory_space<vmem>>, vector<1x64xf32>
    %4 = vector.broadcast %3 : vector<1x64xf32> to vector<16x64xf32>
    %5 = arith.addf %2, %4 : vector<16x64xf32>
    %cst_5 = arith.constant 0.000000e+00 : f32
    %cst_6 = arith.constant 6.000000e+00 : f32
    %6 = vector.broadcast %cst_5 : f32 to vector<16x64xf32>
    %7 = arith.maximumf %6, %5 : vector<16x64xf32>
    %8 = vector.broadcast %cst_6 : f32 to vector<16x64xf32>
    %9 = arith.minimumf %8, %7 : vector<16x64xf32>
    %10 = arith.truncf %9 : vector<16x64xf32> to vector<16x64xbf16>
    %c0_7 = arith.constant 0 : index
    %c0_8 = arith.constant 0 : index
    %11 = vector.load %arg4[%c0_7, %c0_8] : memref<64x128xbf16, #tpu.memory_space<vmem>>, vector<64x128xbf16>
    %cst_9 = arith.constant dense<0.000000e+00> : vector<16x128xf32>
    %12 = tpu.matmul %10, %11, %cst_9 {dimension_numbers = #tpu.dot_dimension_numbers<[1], [0], [0], [1], [0, 0, 1, 1], [], []>} : vector<16x64xbf16>, vector<64x128xbf16>, vector<16x128xf32> -> vector<16x128xf32>
    %c0_10 = arith.constant 0 : index
    %c0_11 = arith.constant 0 : index
    %13 = vector.load %arg5[%c0_10, %c0_11] : memref<1x128xf32, #tpu.memory_space<vmem>>, vector<1x128xf32>
    %14 = vector.broadcast %13 : vector<1x128xf32> to vector<16x128xf32>
    %15 = arith.addf %12, %14 : vector<16x128xf32>
    %cst_12 = arith.constant 0.000000e+00 : f32
    %cst_13 = arith.constant 6.000000e+00 : f32
    %16 = vector.broadcast %cst_12 : f32 to vector<16x128xf32>
    %17 = arith.maximumf %16, %15 : vector<16x128xf32>
    %18 = vector.broadcast %cst_13 : f32 to vector<16x128xf32>
    %19 = arith.minimumf %18, %17 : vector<16x128xf32>
    %20 = arith.truncf %19 : vector<16x128xf32> to vector<16x128xbf16>
    %c0_14 = arith.constant 0 : index
    %c0_15 = arith.constant 0 : index
    %21 = vector.load %arg6[%c0_14, %c0_15] : memref<128x256xbf16, #tpu.memory_space<vmem>>, vector<128x256xbf16>
    %cst_16 = arith.constant dense<0.000000e+00> : vector<16x256xf32>
    %22 = tpu.matmul %20, %21, %cst_16 {dimension_numbers = #tpu.dot_dimension_numbers<[1], [0], [0], [1], [0, 0, 1, 1], [], []>} : vector<16x128xbf16>, vector<128x256xbf16>, vector<16x256xf32> -> vector<16x256xf32>
    %c0_17 = arith.constant 0 : index
    %c0_18 = arith.constant 0 : index
    %23 = vector.load %arg7[%c0_17, %c0_18] : memref<1x256xf32, #tpu.memory_space<vmem>>, vector<1x256xf32>
    %24 = vector.broadcast %23 : vector<1x256xf32> to vector<16x256xf32>
    %25 = arith.addf %22, %24 : vector<16x256xf32>
    %cst_19 = arith.constant 0.000000e+00 : f32
    %cst_20 = arith.constant 6.000000e+00 : f32
    %26 = vector.broadcast %cst_19 : f32 to vector<16x256xf32>
    %27 = arith.maximumf %26, %25 : vector<16x256xf32>
    %28 = vector.broadcast %cst_20 : f32 to vector<16x256xf32>
    %29 = arith.minimumf %28, %27 : vector<16x256xf32>
    %30 = arith.truncf %29 : vector<16x256xf32> to vector<16x256xbf16>
    %c0_21 = arith.constant 0 : index
    %c0_22 = arith.constant 0 : index
    %31 = vector.load %arg8[%c0_21, %c0_22] : memref<256x512xbf16, #tpu.memory_space<vmem>>, vector<256x512xbf16>
    %cst_23 = arith.constant dense<0.000000e+00> : vector<16x512xf32>
    %32 = tpu.matmul %30, %31, %cst_23 {dimension_numbers = #tpu.dot_dimension_numbers<[1], [0], [0], [1], [0, 0, 1, 1], [], []>} : vector<16x256xbf16>, vector<256x512xbf16>, vector<16x512xf32> -> vector<16x512xf32>
    %c0_24 = arith.constant 0 : index
    %c0_25 = arith.constant 0 : index
    %33 = vector.load %arg9[%c0_24, %c0_25] : memref<1x512xf32, #tpu.memory_space<vmem>>, vector<1x512xf32>
    %34 = vector.broadcast %33 : vector<1x512xf32> to vector<16x512xf32>
    %35 = arith.addf %32, %34 : vector<16x512xf32>
    %cst_26 = arith.constant 0.000000e+00 : f32
    %cst_27 = arith.constant 6.000000e+00 : f32
    %36 = vector.broadcast %cst_26 : f32 to vector<16x512xf32>
    %37 = arith.maximumf %36, %35 : vector<16x512xf32>
    %38 = vector.broadcast %cst_27 : f32 to vector<16x512xf32>
    %39 = arith.minimumf %38, %37 : vector<16x512xf32>
    %40 = arith.truncf %39 : vector<16x512xf32> to vector<16x512xbf16>
    %c0_28 = arith.constant 0 : index
    %c0_29 = arith.constant 0 : index
    %41 = vector.load %arg10[%c0_28, %c0_29] : memref<512x512xbf16, #tpu.memory_space<vmem>>, vector<512x512xbf16>
    %cst_30 = arith.constant dense<0.000000e+00> : vector<16x512xf32>
    %42 = tpu.matmul %40, %41, %cst_30 {dimension_numbers = #tpu.dot_dimension_numbers<[1], [0], [0], [1], [0, 0, 1, 1], [], []>} : vector<16x512xbf16>, vector<512x512xbf16>, vector<16x512xf32> -> vector<16x512xf32>
    %c0_31 = arith.constant 0 : index
    %c0_32 = arith.constant 0 : index
    %43 = vector.load %arg11[%c0_31, %c0_32] : memref<1x512xf32, #tpu.memory_space<vmem>>, vector<1x512xf32>
    %44 = vector.broadcast %43 : vector<1x512xf32> to vector<16x512xf32>
    %45 = arith.addf %42, %44 : vector<16x512xf32>
    %cst_33 = arith.constant 0.000000e+00 : f32
    %cst_34 = arith.constant 6.000000e+00 : f32
    %46 = vector.broadcast %cst_33 : f32 to vector<16x512xf32>
    %47 = arith.maximumf %46, %45 : vector<16x512xf32>
    %48 = vector.broadcast %cst_34 : f32 to vector<16x512xf32>
    %49 = arith.minimumf %48, %47 : vector<16x512xf32>
    %50 = arith.truncf %49 : vector<16x512xf32> to vector<16x512xbf16>
    %c0_35 = arith.constant 0 : index
    %c0_36 = arith.constant 0 : index
    %51 = vector.load %arg12[%c0_35, %c0_36] : memref<512x128xbf16, #tpu.memory_space<vmem>>, vector<512x128xbf16>
    %cst_37 = arith.constant dense<0.000000e+00> : vector<16x128xf32>
    %52 = tpu.matmul %50, %51, %cst_37 {dimension_numbers = #tpu.dot_dimension_numbers<[1], [0], [0], [1], [0, 0, 1, 1], [], []>} : vector<16x512xbf16>, vector<512x128xbf16>, vector<16x128xf32> -> vector<16x128xf32>
    %c0_38 = arith.constant 0 : index
    %c0_39 = arith.constant 0 : index
    %53 = vector.load %arg13[%c0_38, %c0_39] : memref<1x128xf32, #tpu.memory_space<vmem>>, vector<1x128xf32>
    %54 = vector.broadcast %53 : vector<1x128xf32> to vector<16x128xf32>
    %55 = arith.addf %52, %54 : vector<16x128xf32>
    %56 = arith.truncf %55 : vector<16x128xf32> to vector<16x128xbf16>
    %c0_40 = arith.constant 0 : index
    %c0_41 = arith.constant 0 : index
    %57 = vector.load %arg14[%c0_40, %c0_41] : memref<16x128xbf16, #tpu.memory_space<vmem>>, vector<16x128xbf16>
    tpu.vector_store %arg14[%c0_40, %c0_41], %56 {strides = array<i32>} : memref<16x128xbf16, #tpu.memory_space<vmem>>, vector<16x128xbf16>,
    return
  }
  func.func @transform_0(%arg0: i32) -> (i32, i32) {
    %c0_i32 = arith.constant 0 : i32
    %c0_i32_0 = arith.constant 0 : i32
    return %arg0, %c0_i32 : i32, i32
  }
  func.func @transform_1(%arg0: i32) -> (i32, i32) {
    %c0_i32 = arith.constant 0 : i32
    %c0_i32_0 = arith.constant 0 : i32
    %c0_i32_1 = arith.constant 0 : i32
    return %c0_i32, %c0_i32_0 : i32, i32
  }
  func.func @transform_2(%arg0: i32) -> (i32, i32) {
    %c0_i32 = arith.constant 0 : i32
    %c0_i32_0 = arith.constant 0 : i32
    %c0_i32_1 = arith.constant 0 : i32
    return %c0_i32, %c0_i32_0 : i32, i32
  }
  func.func @transform_3(%arg0: i32) -> (i32, i32) {
    %c0_i32 = arith.constant 0 : i32
    %c0_i32_0 = arith.constant 0 : i32
    %c0_i32_1 = arith.constant 0 : i32
    return %c0_i32, %c0_i32_0 : i32, i32
  }
  func.func @transform_4(%arg0: i32) -> (i32, i32) {
    %c0_i32 = arith.constant 0 : i32
    %c0_i32_0 = arith.constant 0 : i32
    %c0_i32_1 = arith.constant 0 : i32
    return %c0_i32, %c0_i32_0 : i32, i32
  }
  func.func @transform_5(%arg0: i32) -> (i32, i32) {
    %c0_i32 = arith.constant 0 : i32
    %c0_i32_0 = arith.constant 0 : i32
    %c0_i32_1 = arith.constant 0 : i32
    return %c0_i32, %c0_i32_0 : i32, i32
  }
  func.func @transform_6(%arg0: i32) -> (i32, i32) {
    %c0_i32 = arith.constant 0 : i32
    %c0_i32_0 = arith.constant 0 : i32
    %c0_i32_1 = arith.constant 0 : i32
    return %c0_i32, %c0_i32_0 : i32, i32
  }
  func.func @transform_7(%arg0: i32) -> (i32, i32) {
    %c0_i32 = arith.constant 0 : i32
    %c0_i32_0 = arith.constant 0 : i32
    %c0_i32_1 = arith.constant 0 : i32
    return %c0_i32, %c0_i32_0 : i32, i32
  }
  func.func @transform_8(%arg0: i32) -> (i32, i32) {
    %c0_i32 = arith.constant 0 : i32
    %c0_i32_0 = arith.constant 0 : i32
    %c0_i32_1 = arith.constant 0 : i32
    return %c0_i32, %c0_i32_0 : i32, i32
  }
  func.func @transform_9(%arg0: i32) -> (i32, i32) {
    %c0_i32 = arith.constant 0 : i32
    %c0_i32_0 = arith.constant 0 : i32
    %c0_i32_1 = arith.constant 0 : i32
    return %c0_i32, %c0_i32_0 : i32, i32
  }
  func.func @transform_10(%arg0: i32) -> (i32, i32) {
    %c0_i32 = arith.constant 0 : i32
    %c0_i32_0 = arith.constant 0 : i32
    %c0_i32_1 = arith.constant 0 : i32
    return %c0_i32, %c0_i32_0 : i32, i32
  }
  func.func @transform_11(%arg0: i32) -> (i32, i32) {
    %c0_i32 = arith.constant 0 : i32
    %c0_i32_0 = arith.constant 0 : i32
    %c0_i32_1 = arith.constant 0 : i32
    return %c0_i32, %c0_i32_0 : i32, i32
  }
  func.func @transform_12(%arg0: i32) -> (i32, i32) {
    %c0_i32 = arith.constant 0 : i32
    %c0_i32_0 = arith.constant 0 : i32
    %c0_i32_1 = arith.constant 0 : i32
    return %c0_i32, %c0_i32_0 : i32, i32
  }
  func.func @transform_13(%arg0: i32) -> (i32, i32) {
    %c0_i32 = arith.constant 0 : i32
    %c0_i32_0 = arith.constant 0 : i32
    return %arg0, %c0_i32 : i32, i32
  }
}

</mosaic_0001>

<llo_original>
// kernel: tpu_custom_call.1
$region0: #{tpu_custom_call.1}
  #allocation0 [shape = 'u32[]', space=smem, size = 0x4, offset = 0x4, fixed_abs, tag = 'smem constant byte address 0x4 - core index']
  #allocation1 [shape = 'u32[144,128]{1,0:T(1,128)}', space=vmem, size = 0x12000, scoped, tag = 'internal scratch']
  %s0 = inlined_call_operand.hbm [shape: bf16[16,16], index: 0, kind: input, shape index: {}]
  %s1 = inlined_call_operand.hbm [shape: bf16[16,64], index: 1, kind: input, shape index: {}]
  %s2 = inlined_call_operand.vmem [shape: f32[1,64], index: 2, kind: input, shape index: {}]
  %s3 = inlined_call_operand.hbm [shape: bf16[64,128], index: 3, kind: input, shape index: {}]
  %s4 = inlined_call_operand.vmem [shape: f32[1,128], index: 4, kind: input, shape index: {}]
  %s5 = inlined_call_operand.hbm [shape: bf16[128,256], index: 5, kind: input, shape index: {}]
  %s6 = inlined_call_operand.vmem [shape: f32[1,256], index: 6, kind: input, shape index: {}]
  %s7 = inlined_call_operand.hbm [shape: bf16[256,512], index: 7, kind: input, shape index: {}]
  %s8 = inlined_call_operand.vmem [shape: f32[1,512], index: 8, kind: input, shape index: {}]
  %s9 = inlined_call_operand.hbm [shape: bf16[512,512], index: 9, kind: input, shape index: {}]
  %s10 = inlined_call_operand.vmem [shape: f32[1,512], index: 10, kind: input, shape index: {}]
  %s11 = inlined_call_operand.hbm [shape: bf16[512,128], index: 11, kind: input, shape index: {}]
  %s12 = inlined_call_operand.vmem [shape: f32[1,128], index: 12, kind: input, shape index: {}]
  %s13 = inlined_call_operand.hbm [shape: bf16[16,128], index: 13, kind: output, shape index: {}]
  %s14 = sld [smem:[#allocation0]]
  $region90: #{tpu_custom_call.1} parent=0
    _
  %s16 = ssub.s32 1, %s14
  %s17 = scalar_select 0, %s16, %s14
  $region1: #{tpu_custom_call.1} parent=0
    #allocation2 [shape = 'u8[4096]{0}', space=vmem, size = 0x1000, scoped, tag = 'input window, operand 0, single buffered']
    #allocation3 [shape = 's32[1]{0}', space=sflag, size = 0x4, scoped, tag = 'scoped memory for tpu_custom_call.1']
    #allocation4 [shape = 's32[1]{0}', space=sflag, size = 0x4, scoped, tag = 'scoped memory for tpu_custom_call.1']
    #allocation5 [shape = 'u8[4096]{0}', space=vmem, size = 0x1000, scoped, tag = 'input window, operand 1, single buffered']
    #allocation6 [shape = 's32[1]{0}', space=sflag, size = 0x4, scoped, tag = 'scoped memory for tpu_custom_call.1']
    #allocation7 [shape = 'u8[16384]{0}', space=vmem, size = 0x4000, scoped, tag = 'input window, operand 3, single buffered']
    #allocation8 [shape = 'u8[65536]{0}', space=vmem, size = 0x10000, scoped, tag = 'input window, operand 5, single buffered']
    #allocation9 [shape = 's32[1]{0}', space=sflag, size = 0x4, scoped, tag = 'scoped memory for tpu_custom_call.1']
    #allocation10 [shape = 'u8[262144]{0}', space=vmem, size = 0x40000, scoped, tag = 'input window, operand 7, single buffered']
    #allocation11 [shape = 'u8[524288]{0}', space=vmem, size = 0x80000, scoped, tag = 'input window, operand 9, single buffered']
    #allocation12 [shape = 's32[1]{0}', space=sflag, size = 0x4, scoped, tag = 'scoped memory for tpu_custom_call.1']
    #allocation13 [shape = 'u8[131072]{0}', space=vmem, size = 0x20000, scoped, tag = 'input window, operand 11, single buffered']
    #allocation14 [shape = 'u8[4096]{0}', space=vmem, size = 0x1000, scoped, tag = 'output window, operand 0, single buffered']
    %18 = vsyncpa [#allocation3], 0
    %19 = vsyncpa [#allocation6], 0
    %20 = vsyncpa [#allocation9], 0
    %21 = vsyncpa [#allocation12], 0
    %22 = vsyncpa [#allocation4], 0
    // Predicated region
    $region2: #{tpu_custom_call.1} parent=1 // pred_check
      _
    $region3: #{tpu_custom_call.1} parent=1 // pred_check_branch
      %24 = sbr.rel (0) target = $region5
    $region4: #{tpu_custom_call.1} parent=1 // pred_region
      %s26 = ssub.s32 128, 128
      %27 = vsyncadd [#allocation3], %s26
      %s28 = sshll.u32 [#allocation2], 4
      %s29 = int_to_ptr.vmem [resolvable:$true] %s28
      %34 = dma.hbm_to_vmem [thread:$0]  %s0, 128, %s29, [#allocation3], 64, 64, 4
    $region5: #{tpu_custom_call.1} parent=1 // pred_fallthru
      _
    // Predicated region
    $region6: #{tpu_custom_call.1} parent=1 // pred_check
      _
    $region7: #{tpu_custom_call.1} parent=1 // pred_check_branch
      %36 = sbr.rel (0) target = $region9
    $region8: #{tpu_custom_call.1} parent=1 // pred_region
      %s38 = ssub.s32 128, 128
      %39 = vsyncadd [#allocation6], %s38
      %s40 = sshll.u32 [#allocation5], 4
      %s41 = int_to_ptr.vmem [resolvable:$true] %s40
      %46 = dma.hbm_to_vmem [thread:$0]  %s1, 128, %s41, [#allocation6], 64, 64, 4
    $region9: #{tpu_custom_call.1} parent=1 // pred_fallthru
      _
    // Predicated region
    $region10: #{tpu_custom_call.1} parent=1 // pred_check
      _
    $region11: #{tpu_custom_call.1} parent=1 // pred_check_branch
      %48 = sbr.rel (0) target = $region13
    $region12: #{tpu_custom_call.1} parent=1 // pred_region
      _
    $region13: #{tpu_custom_call.1} parent=1 // pred_fallthru
      _
    // Predicated region
    $region14: #{tpu_custom_call.1} parent=1 // pred_check
      _
    $region15: #{tpu_custom_call.1} parent=1 // pred_check_branch
      %50 = sbr.rel (0) target = $region17
    $region16: #{tpu_custom_call.1} parent=1 // pred_region
      %s52 = ssub.s32 512, 512
      %53 = vsyncadd [#allocation6], %s52
      %s54 = sshll.u32 [#allocation7], 4
      %s55 = int_to_ptr.vmem [resolvable:$true] %s54
      %60 = dma.hbm_to_vmem [thread:$0]  %s3, 512, %s55, [#allocation6], 64, 64, 4
    $region17: #{tpu_custom_call.1} parent=1 // pred_fallthru
      _
    // Predicated region
    $region18: #{tpu_custom_call.1} parent=1 // pred_check
      _
    $region19: #{tpu_custom_call.1} parent=1 // pred_check_branch
      %62 = sbr.rel (0) target = $region21
    $region20: #{tpu_custom_call.1} parent=1 // pred_region
      _
    $region21: #{tpu_custom_call.1} parent=1 // pred_fallthru
      _
    // Predicated region
    $region22: #{tpu_custom_call.1} parent=1 // pred_check
      _
    $region23: #{tpu_custom_call.1} parent=1 // pred_check_branch
      %64 = sbr.rel (0) target = $region25
    $region24: #{tpu_custom_call.1} parent=1 // pred_region
      %s66 = ssub.s32 2048, 2048
      %67 = vsyncadd [#allocation9], %s66
      %s68 = sshll.u32 [#allocation8], 4
      %s69 = int_to_ptr.vmem [resolvable:$true] %s68
      %74 = dma.hbm_to_vmem [thread:$0]  %s5, 2048, %s69, [#allocation9], 128, 128, 8
    $region25: #{tpu_custom_call.1} parent=1 // pred_fallthru
      _
    // Predicated region
    $region26: #{tpu_custom_call.1} parent=1 // pred_check
      _
    $region27: #{tpu_custom_call.1} parent=1 // pred_check_branch
      %76 = sbr.rel (0) target = $region29
    $region28: #{tpu_custom_call.1} parent=1 // pred_region
      _
    $region29: #{tpu_custom_call.1} parent=1 // pred_fallthru
      _
    // Predicated region
    $region30: #{tpu_custom_call.1} parent=1 // pred_check
      _
    $region31: #{tpu_custom_call.1} parent=1 // pred_check_branch
      %78 = sbr.rel (0) target = $region33
    $region32: #{tpu_custom_call.1} parent=1 // pred_region
      %s80 = ssub.s32 8192, 8192
      %81 = vsyncadd [#allocation9], %s80
      %s82 = sshll.u32 [#allocation10], 4
      %s83 = int_to_ptr.vmem [resolvable:$true] %s82
      %88 = dma.hbm_to_vmem [thread:$0]  %s7, 8192, %s83, [#allocation9], 256, 256, 16
    $region33: #{tpu_custom_call.1} parent=1 // pred_fallthru
      _
    // Predicated region
    $region34: #{tpu_custom_call.1} parent=1 // pred_check
      _
    $region35: #{tpu_custom_call.1} parent=1 // pred_check_branch
      %90 = sbr.rel (0) target = $region37
    $region36: #{tpu_custom_call.1} parent=1 // pred_region
      _
    $region37: #{tpu_custom_call.1} parent=1 // pred_fallthru
      _
    // Predicated region
    $region38: #{tpu_custom_call.1} parent=1 // pred_check
      _
    $region39: #{tpu_custom_call.1} parent=1 // pred_check_branch
      %92 = sbr.rel (0) target = $region41
    $region40: #{tpu_custom_call.1} parent=1 // pred_region
      %s94 = ssub.s32 16384, 16384
      %95 = vsyncadd [#allocation12], %s94
      %s96 = sshll.u32 [#allocation11], 4
      %s97 = int_to_ptr.vmem [resolvable:$true] %s96
      %102 = dma.hbm_to_vmem [thread:$0]  %s9, 16384, %s97, [#allocation12], 256, 256, 16
    $region41: #{tpu_custom_call.1} parent=1 // pred_fallthru
      _
    // Predicated region
    $region42: #{tpu_custom_call.1} parent=1 // pred_check
      _
    $region43: #{tpu_custom_call.1} parent=1 // pred_check_branch
      %104 = sbr.rel (0) target = $region45
    $region44: #{tpu_custom_call.1} parent=1 // pred_region
      _
    $region45: #{tpu_custom_call.1} parent=1 // pred_fallthru
      _
    // Predicated region
    $region46: #{tpu_custom_call.1} parent=1 // pred_check
      _
    $region47: #{tpu_custom_call.1} parent=1 // pred_check_branch
      %106 = sbr.rel (0) target = $region49
    $region48: #{tpu_custom_call.1} parent=1 // pred_region
      %s108 = ssub.s32 4096, 4096
      %109 = vsyncadd [#allocation12], %s108
      %s110 = sshll.u32 [#allocation13], 4
      %s111 = int_to_ptr.vmem [resolvable:$true] %s110
      %116 = dma.hbm_to_vmem [thread:$0]  %s11, 4096, %s111, [#allocation12], 64, 64, 4
    $region49: #{tpu_custom_call.1} parent=1 // pred_fallthru
      _
    // Predicated region
    $region50: #{tpu_custom_call.1} parent=1 // pred_check
      _
    $region51: #{tpu_custom_call.1} parent=1 // pred_check_branch
      %118 = sbr.rel (0) target = $region53
    $region52: #{tpu_custom_call.1} parent=1 // pred_region
      _
    $region53: #{tpu_custom_call.1} parent=1 // pred_fallthru
      _
    // Predicated region
    $region54: #{tpu_custom_call.1} parent=1 // pred_check
      _
    $region55: #{tpu_custom_call.1} parent=1 // pred_check_branch
      %120 = sbr.rel (0) target = $region57
    $region56: #{tpu_custom_call.1} parent=1 // pred_region
      %121 = dma.done [#allocation3], 128
    $region57: #{tpu_custom_call.1} parent=1 // pred_fallthru
      _
    // Predicated region
    $region58: #{tpu_custom_call.1} parent=1 // pred_check
      _
    $region59: #{tpu_custom_call.1} parent=1 // pred_check_branch
      %123 = sbr.rel (0) target = $region61
    $region60: #{tpu_custom_call.1} parent=1 // pred_region
      %124 = dma.done [#allocation6], 128
    $region61: #{tpu_custom_call.1} parent=1 // pred_fallthru
      _
    // Predicated region
    $region62: #{tpu_custom_call.1} parent=1 // pred_check
      _
    $region63: #{tpu_custom_call.1} parent=1 // pred_check_branch
      %126 = sbr.rel (0) target = $region65
    $region64: #{tpu_custom_call.1} parent=1 // pred_region
      %127 = dma.done [#allocation6], 512
    $region65: #{tpu_custom_call.1} parent=1 // pred_fallthru
      _
    // Predicated region
    $region66: #{tpu_custom_call.1} parent=1 // pred_check
      _
    $region67: #{tpu_custom_call.1} parent=1 // pred_check_branch
      %129 = sbr.rel (0) target = $region69
    $region68: #{tpu_custom_call.1} parent=1 // pred_region
      %130 = dma.done [#allocation9], 2048
    $region69: #{tpu_custom_call.1} parent=1 // pred_fallthru
      _
    // Predicated region
    $region70: #{tpu_custom_call.1} parent=1 // pred_check
      _
    $region71: #{tpu_custom_call.1} parent=1 // pred_check_branch
      %132 = sbr.rel (0) target = $region73
    $region72: #{tpu_custom_call.1} parent=1 // pred_region
      %133 = dma.done [#allocation9], 8192
    $region73: #{tpu_custom_call.1} parent=1 // pred_fallthru
      _
    // Predicated region
    $region74: #{tpu_custom_call.1} parent=1 // pred_check
      _
    $region75: #{tpu_custom_call.1} parent=1 // pred_check_branch
      %135 = sbr.rel (0) target = $region77
    $region76: #{tpu_custom_call.1} parent=1 // pred_region
      %136 = dma.done [#allocation12], 16384
    $region77: #{tpu_custom_call.1} parent=1 // pred_fallthru
      _
    // Predicated region
    $region78: #{tpu_custom_call.1} parent=1 // pred_check
      _
    $region79: #{tpu_custom_call.1} parent=1 // pred_check_branch
      %138 = sbr.rel (0) target = $region81
    $region80: #{tpu_custom_call.1} parent=1 // pred_region
      %139 = dma.done [#allocation12], 4096
    $region81: #{tpu_custom_call.1} parent=1 // pred_fallthru
      _
    %v141 = vld [vmem:[#allocation2] sm:$0xf]
    %v142 = vld [vmem:[#allocation2 + $0x4] sm:$0xf]
    %v143 = vld [vmem:[#allocation5] sm:$0xf]
    %v144 = vld [vmem:[#allocation5 + $0x4] sm:$0xf]
    %v145 = vld [vmem:[%s2] sm:$0x1]
    %v147 = vlaneseq
    %v148 = vshrl.u32 %v147, 7
    %v149 = vsub.s32 0, %v148
    %v150 = vrot.slane %v145, %v149
    %v154 = vunpack.c.l.b16 %v141
    %v155 = vunpack.c.l.b16 %v142
    %v156 = vpack.c.b16 %v155, %v154
    %v159 = vunpack.c.l.b16 %v143
    %v160 = vunpack.c.l.b16 %v144
    %v161 = vpack.c.b16 %v160, %v159
    %vm163 = vcmask 130048
    %v165 = vsel %vm163, %v156, 0
    %167 = vmatprep.subr.bf16.mxu0 0
    %168 = vmatpush1.bf16.msra.mxu0 %v161
    %169 = vmatprep.subr.bf16.mxu0 0
    %170 = vmatpush1.bf16.msra.mxu0 0
    %171 = vmatprep.subr.bf16.mxu0 0
    %172 = vmatpush1.bf16.msra.mxu0 0
    %173 = vmatprep.subr.bf16.mxu0 0
    %174 = vmatpush1.bf16.msra.mxu0 0
    %175 = vmatprep.subr.bf16.mxu0 0
    %176 = vmatpush1.bf16.msra.mxu0 0
    %177 = vmatprep.subr.bf16.mxu0 0
    %178 = vmatpush1.bf16.msra.mxu0 0
    %179 = vmatprep.subr.bf16.mxu0 0
    %180 = vmatpush1.bf16.msra.mxu0 0
    %181 = vmatprep.subr.bf16.mxu0 0
    %182 = vmatpush1.bf16.msra.mxu0 0
    %183 = vmatprep.subr.bf16.mxu0 0
    %184 = vmatpush1.bf16.msra.mxu0 0
    %185 = vmatprep.subr.bf16.mxu0 0
    %186 = vmatpush1.bf16.msra.mxu0 0
    %187 = vmatprep.subr.bf16.mxu0 0
    %188 = vmatpush1.bf16.msra.mxu0 0
    %189 = vmatprep.subr.bf16.mxu0 0
    %190 = vmatpush1.bf16.msra.mxu0 0
    %191 = vmatprep.subr.bf16.mxu0 0
    %192 = vmatpush1.bf16.msra.mxu0 0
    %193 = vmatprep.subr.bf16.mxu0 0
    %194 = vmatpush1.bf16.msra.mxu0 0
    %195 = vmatprep.subr.bf16.mxu0 0
    %196 = vmatpush1.bf16.msra.mxu0 0
    %197 = vmatprep.subr.bf16.mxu0 0
    %198 = vmatpush1.bf16.msra.mxu0 0
    %199 = vmatprep.mubr.bf16.mxu0 0
    %200 = vmatmul.mubr.bf16.gmra.mrb[0].mxu0 %v165
    %v201 = vpop.f32.mrb[0].mxu0
    %v202 = vadd.f32 %v150, %v201
    %v203 = vpop.f32.mrb[0].mxu0
    %v204 = vpop.f32.mrb[0].mxu0
    %v205 = vadd.f32 %v150, %v204
    %v206 = vpop.f32.mrb[0].mxu0
    %207 = vdwg.mxu0
    %v208 = vmax.f32 %v202, 0.0
    %v209 = vmax.f32 %v205, 0.0
    %v210 = vmin.f32 %v208, 6.0
    %v211 = vmin.f32 %v209, 6.0
    %v212 = vpack.c.bf16 %v211, %v210
    %v213 = vld [vmem:[#allocation7] sm:$0xf]
    %v214 = vld [vmem:[#allocation7 + $0x4] sm:$0xf]
    %v215 = vld [vmem:[#allocation7 + $0x8] sm:$0xf]
    %v216 = vld [vmem:[#allocation7 + $0xc] sm:$0xf]
    %v217 = vld [vmem:[#allocation7 + $0x10] sm:$0xf]
    %v218 = vld [vmem:[#allocation7 + $0x14] sm:$0xf]
    %v219 = vld [vmem:[#allocation7 + $0x18] sm:$0xf]
    %v220 = vld [vmem:[#allocation7 + $0x1c] sm:$0xf]
    %v221 = vld [vmem:[%s4] sm:$0x1]
    %v223 = vlaneseq
    %v224 = vshrl.u32 %v223, 7
    %v225 = vsub.s32 0, %v224
    %v226 = vrot.slane %v221, %v225
    %v236 = vunpack.c.l.b16 %v213
    %v237 = vunpack.c.l.b16 %v214
    %v238 = vunpack.c.l.b16 %v215
    %v239 = vunpack.c.l.b16 %v216
    %v240 = vunpack.c.l.b16 %v217
    %v241 = vunpack.c.l.b16 %v218
    %v242 = vunpack.c.l.b16 %v219
    %v243 = vunpack.c.l.b16 %v220
    %v244 = vpack.c.b16 %v237, %v236
    %v245 = vpack.c.b16 %v239, %v238
    %v246 = vpack.c.b16 %v241, %v240
    %v247 = vpack.c.b16 %v243, %v242
    %vm252 = vcmask 523264
    %v254 = vsel %vm252, %v212, 0
    %256 = vmatprep.subr.bf16.mxu0 0
    %257 = vmatpush1.bf16.msra.mxu0 %v244
    %258 = vmatprep.subr.bf16.mxu0 0
    %259 = vmatpush1.bf16.msra.mxu0 %v245
    %260 = vmatprep.subr.bf16.mxu0 0
    %261 = vmatpush1.bf16.msra.mxu0 %v246
    %262 = vmatprep.subr.bf16.mxu0 0
    %263 = vmatpush1.bf16.msra.mxu0 %v247
    %264 = vmatprep.subr.bf16.mxu0 0
    %265 = vmatpush1.bf16.msra.mxu0 0
    %266 = vmatprep.subr.bf16.mxu0 0
    %267 = vmatpush1.bf16.msra.mxu0 0
    %268 = vmatprep.subr.bf16.mxu0 0
    %269 = vmatpush1.bf16.msra.mxu0 0
    %270 = vmatprep.subr.bf16.mxu0 0
    %271 = vmatpush1.bf16.msra.mxu0 0
    %272 = vmatprep.subr.bf16.mxu0 0
    %273 = vmatpush1.bf16.msra.mxu0 0
    %274 = vmatprep.subr.bf16.mxu0 0
    %275 = vmatpush1.bf16.msra.mxu0 0
    %276 = vmatprep.subr.bf16.mxu0 0
    %277 = vmatpush1.bf16.msra.mxu0 0
    %278 = vmatprep.subr.bf16.mxu0 0
    %279 = vmatpush1.bf16.msra.mxu0 0
    %280 = vmatprep.subr.bf16.mxu0 0
    %281 = vmatpush1.bf16.msra.mxu0 0
    %282 = vmatprep.subr.bf16.mxu0 0
    %283 = vmatpush1.bf16.msra.mxu0 0
    %284 = vmatprep.subr.bf16.mxu0 0
    %285 = vmatpush1.bf16.msra.mxu0 0
    %286 = vmatprep.subr.bf16.mxu0 0
    %287 = vmatpush1.bf16.msra.mxu0 0
    %288 = vmatprep.mubr.bf16.mxu0 0
    %289 = vmatmul.mubr.bf16.gmra.mrb[0].mxu0 %v254
    %v290 = vpop.f32.mrb[0].mxu0
    %v291 = vadd.f32 %v226, %v290
    %v292 = vpop.f32.mrb[0].mxu0
    %v293 = vpop.f32.mrb[0].mxu0
    %v294 = vadd.f32 %v226, %v293
    %v295 = vpop.f32.mrb[0].mxu0
    %296 = vdwg.mxu0
    %v297 = vmax.f32 %v291, 0.0
    %v298 = vmax.f32 %v294, 0.0
    %v299 = vmin.f32 %v297, 6.0
    %v300 = vmin.f32 %v298, 6.0
    %v301 = vpack.c.bf16 %v300, %v299
    %v302 = vld [vmem:[#allocation8] sm:$0xff]
    %v303 = vld [vmem:[#allocation8 + $0x8] sm:$0xff]
    %v304 = vld [vmem:[#allocation8 + $0x10] sm:$0xff]
    %v305 = vld [vmem:[#allocation8 + $0x18] sm:$0xff]
    %v306 = vld [vmem:[#allocation8 + $0x20] sm:$0xff]
    %v307 = vld [vmem:[#allocation8 + $0x28] sm:$0xff]
    %v308 = vld [vmem:[#allocation8 + $0x30] sm:$0xff]
    %v309 = vld [vmem:[#allocation8 + $0x38] sm:$0xff]
    %v310 = vld [vmem:[#allocation8 + $0x40] sm:$0xff]
    %v311 = vld [vmem:[#allocation8 + $0x48] sm:$0xff]
    %v312 = vld [vmem:[#allocation8 + $0x50] sm:$0xff]
    %v313 = vld [vmem:[#allocation8 + $0x58] sm:$0xff]
    %v314 = vld [vmem:[#allocation8 + $0x60] sm:$0xff]
    %v315 = vld [vmem:[#allocation8 + $0x68] sm:$0xff]
    %v316 = vld [vmem:[#allocation8 + $0x70] sm:$0xff]
    %v317 = vld [vmem:[#allocation8 + $0x78] sm:$0xff]
    %v318 = vld [vmem:[%s6] sm:$0x3]
    %v320 = vlaneseq
    %v321 = vshrl.u32 %v320, 7
    %v322 = vsub.s32 0, %v321
    %v323 = vrot.slane %v318, %v322
    %v324 = vlaneseq
    %v325 = vshrl.u32 %v324, 7
    %v326 = vsub.s32 1, %v325
    %v327 = vrot.slane %v318, %v326
    %v346 = vunpack.c.l.b16 %v302
    %v347 = vunpack.c.h.b16 %v302
    %v348 = vunpack.c.l.b16 %v303
    %v349 = vunpack.c.h.b16 %v303
    %v350 = vunpack.c.l.b16 %v304
    %v351 = vunpack.c.h.b16 %v304
    %v352 = vunpack.c.l.b16 %v305
    %v353 = vunpack.c.h.b16 %v305
    %v354 = vunpack.c.l.b16 %v306
    %v355 = vunpack.c.h.b16 %v306
    %v356 = vunpack.c.l.b16 %v307
    %v357 = vunpack.c.h.b16 %v307
    %v358 = vunpack.c.l.b16 %v308
    %v359 = vunpack.c.h.b16 %v308
    %v360 = vunpack.c.l.b16 %v309
    %v361 = vunpack.c.h.b16 %v309
    %v362 = vunpack.c.l.b16 %v310
    %v363 = vunpack.c.h.b16 %v310
    %v364 = vunpack.c.l.b16 %v311
    %v365 = vunpack.c.h.b16 %v311
    %v366 = vunpack.c.l.b16 %v312
    %v367 = vunpack.c.h.b16 %v312
    %v368 = vunpack.c.l.b16 %v313
    %v369 = vunpack.c.h.b16 %v313
    %v370 = vunpack.c.l.b16 %v314
    %v371 = vunpack.c.h.b16 %v314
    %v372 = vunpack.c.l.b16 %v315
    %v373 = vunpack.c.h.b16 %v315
    %v374 = vunpack.c.l.b16 %v316
    %v375 = vunpack.c.h.b16 %v316
    %v376 = vunpack.c.l.b16 %v317
    %v377 = vunpack.c.h.b16 %v317
    %v378 = vpack.c.b16 %v348, %v346
    %v379 = vpack.c.b16 %v349, %v347
    %v380 = vpack.c.b16 %v352, %v350
    %v381 = vpack.c.b16 %v353, %v351
    %v382 = vpack.c.b16 %v356, %v354
    %v383 = vpack.c.b16 %v357, %v355
    %v384 = vpack.c.b16 %v360, %v358
    %v385 = vpack.c.b16 %v361, %v359
    %v386 = vpack.c.b16 %v364, %v362
    %v387 = vpack.c.b16 %v365, %v363
    %v388 = vpack.c.b16 %v368, %v366
    %v389 = vpack.c.b16 %v369, %v367
    %v390 = vpack.c.b16 %v372, %v370
    %v391 = vpack.c.b16 %v373, %v371
    %v392 = vpack.c.b16 %v376, %v374
    %v393 = vpack.c.b16 %v377, %v375
    %410 = vmatprep.subr.bf16.mxu0 %v379
    %411 = vmatpush1.bf16.msra.mxu0 %v378
    %412 = vmatprep.subr.bf16.mxu0 %v381
    %413 = vmatpush1.bf16.msra.mxu0 %v380
    %414 = vmatprep.subr.bf16.mxu0 %v383
    %415 = vmatpush1.bf16.msra.mxu0 %v382
    %416 = vmatprep.subr.bf16.mxu0 %v385
    %417 = vmatpush1.bf16.msra.mxu0 %v384
    %418 = vmatprep.subr.bf16.mxu0 %v387
    %419 = vmatpush1.bf16.msra.mxu0 %v386
    %420 = vmatprep.subr.bf16.mxu0 %v389
    %421 = vmatpush1.bf16.msra.mxu0 %v388
    %422 = vmatprep.subr.bf16.mxu0 %v391
    %423 = vmatpush1.bf16.msra.mxu0 %v390
    %424 = vmatprep.subr.bf16.mxu0 %v393
    %425 = vmatpush1.bf16.msra.mxu0 %v392
    %426 = vmatprep.subr.bf16.mxu0 0
    %427 = vmatpush1.bf16.msra.mxu0 0
    %428 = vmatprep.subr.bf16.mxu0 0
    %429 = vmatpush1.bf16.msra.mxu0 0
    %430 = vmatprep.subr.bf16.mxu0 0
    %431 = vmatpush1.bf16.msra.mxu0 0
    %432 = vmatprep.subr.bf16.mxu0 0
    %433 = vmatpush1.bf16.msra.mxu0 0
    %434 = vmatprep.subr.bf16.mxu0 0
    %435 = vmatpush1.bf16.msra.mxu0 0
    %436 = vmatprep.subr.bf16.mxu0 0
    %437 = vmatpush1.bf16.msra.mxu0 0
    %438 = vmatprep.subr.bf16.mxu0 0
    %439 = vmatpush1.bf16.msra.mxu0 0
    %440 = vmatprep.subr.bf16.mxu0 0
    %441 = vmatpush1.bf16.msra.mxu0 0
    %442 = vmatprep.mubr.bf16.mxu0 0
    %443 = vmatmul.mubr.bf16.gmra.mrb[0].mxu0 %v301
    %v444 = vpop.f32.mrb[0].mxu0
    %v445 = vadd.f32 %v323, %v444
    %v446 = vpop.f32.mrb[0].mxu0
    %v447 = vadd.f32 %v327, %v446
    %v448 = vpop.f32.mrb[0].mxu0
    %v449 = vadd.f32 %v323, %v448
    %v450 = vpop.f32.mrb[0].mxu0
    %v451 = vadd.f32 %v327, %v450
    %452 = vdwg.mxu0
    %v453 = vmax.f32 %v445, 0.0
    %v454 = vmax.f32 %v447, 0.0
    %v455 = vmax.f32 %v449, 0.0
    %v456 = vmax.f32 %v451, 0.0
    %v457 = vmin.f32 %v453, 6.0
    %v458 = vmin.f32 %v454, 6.0
    %v459 = vmin.f32 %v455, 6.0
    %v460 = vmin.f32 %v456, 6.0
    %v461 = vpack.c.bf16 %v459, %v457
    %v462 = vpack.c.bf16 %v460, %v458
    %v463 = vld [vmem:[#allocation10] sm:$0xff]
    %v464 = vld [vmem:[#allocation10 + $0x8] sm:$0xff]
    %v465 = vld [vmem:[#allocation10 + $0x10] sm:$0xff]
    %v466 = vld [vmem:[#allocation10 + $0x18] sm:$0xff]
    %v467 = vld [vmem:[#allocation10 + $0x20] sm:$0xff]
    %v468 = vld [vmem:[#allocation10 + $0x28] sm:$0xff]
    %v469 = vld [vmem:[#allocation10 + $0x30] sm:$0xff]
    %v470 = vld [vmem:[#allocation10 + $0x38] sm:$0xff]
    %v471 = vld [vmem:[#allocation10 + $0x40] sm:$0xff]
    %v472 = vld [vmem:[#allocation10 + $0x48] sm:$0xff]
    %v473 = vld [vmem:[#allocation10 + $0x50] sm:$0xff]
    %v474 = vld [vmem:[#allocation10 + $0x58] sm:$0xff]
    %v475 = vld [vmem:[#allocation10 + $0x60] sm:$0xff]
    %v476 = vld [vmem:[#allocation10 + $0x68] sm:$0xff]
    %v477 = vld [vmem:[#allocation10 + $0x70] sm:$0xff]
    %v478 = vld [vmem:[#allocation10 + $0x78] sm:$0xff]
    %v479 = vld [vmem:[#allocation10 + $0x80] sm:$0xff]
    %v480 = vld [vmem:[#allocation10 + $0x88] sm:$0xff]
    %v481 = vld [vmem:[#allocation10 + $0x90] sm:$0xff]
    %v482 = vld [vmem:[#allocation10 + $0x98] sm:$0xff]
    %v483 = vld [vmem:[#allocation10 + $0xa0] sm:$0xff]
    %v484 = vld [vmem:[#allocation10 + $0xa8] sm:$0xff]
    %v485 = vld [vmem:[#allocation10 + $0xb0] sm:$0xff]
    %v486 = vld [vmem:[#allocation10 + $0xb8] sm:$0xff]
    %v487 = vld [vmem:[#allocation10 + $0xc0] sm:$0xff]
    %v488 = vld [vmem:[#allocation10 + $0xc8] sm:$0xff]
    %v489 = vld [vmem:[#allocation10 + $0xd0] sm:$0xff]
    %v490 = vld [vmem:[#allocation10 + $0xd8] sm:$0xff]
    %v491 = vld [vmem:[#allocation10 + $0xe0] sm:$0xff]
    %v492 = vld [vmem:[#allocation10 + $0xe8] sm:$0xff]
    %v493 = vld [vmem:[#allocation10 + $0xf0] sm:$0xff]
    %v494 = vld [vmem:[#allocation10 + $0xf8] sm:$0xff]
    %v495 = vld [vmem:[#allocation10 + $0x100] sm:$0xff]
    %v496 = vld [vmem:[#allocation10 + $0x108] sm:$0xff]
    %v497 = vld [vmem:[#allocation10 + $0x110] sm:$0xff]
    %v498 = vld [vmem:[#allocation10 + $0x118] sm:$0xff]
    %v499 = vld [vmem:[#allocation10 + $0x120] sm:$0xff]
    %v500 = vld [vmem:[#allocation10 + $0x128] sm:$0xff]
    %v501 = vld [vmem:[#allocation10 + $0x130] sm:$0xff]
    %v502 = vld [vmem:[#allocation10 + $0x138] sm:$0xff]
    %v503 = vld [vmem:[#allocation10 + $0x140] sm:$0xff]
    %v504 = vld [vmem:[#allocation10 + $0x148] sm:$0xff]
    %v505 = vld [vmem:[#allocation10 + $0x150] sm:$0xff]
    %v506 = vld [vmem:[#allocation10 + $0x158] sm:$0xff]
    %v507 = vld [vmem:[#allocation10 + $0x160] sm:$0xff]
    %v508 = vld [vmem:[#allocation10 + $0x168] sm:$0xff]
    %v509 = vld [vmem:[#allocation10 + $0x170] sm:$0xff]
    %v510 = vld [vmem:[#allocation10 + $0x178] sm:$0xff]
    %v511 = vld [vmem:[#allocation10 + $0x180] sm:$0xff]
    %v512 = vld [vmem:[#allocation10 + $0x188] sm:$0xff]
    %v513 = vld [vmem:[#allocation10 + $0x190] sm:$0xff]
    %v514 = vld [vmem:[#allocation10 + $0x198] sm:$0xff]
    %v515 = vld [vmem:[#allocation10 + $0x1a0] sm:$0xff]
    %v516 = vld [vmem:[#allocation10 + $0x1a8] sm:$0xff]
    %v517 = vld [vmem:[#allocation10 + $0x1b0] sm:$0xff]
    %v518 = vld [vmem:[#allocation10 + $0x1b8] sm:$0xff]
    %v519 = vld [vmem:[#allocation10 + $0x1c0] sm:$0xff]
    %v520 = vld [vmem:[#allocation10 + $0x1c8] sm:$0xff]
    %v521 = vld [vmem:[#allocation10 + $0x1d0] sm:$0xff]
    %v522 = vld [vmem:[#allocation10 + $0x1d8] sm:$0xff]
    %v523 = vld [vmem:[#allocation10 + $0x1e0] sm:$0xff]
    %v524 = vld [vmem:[#allocation10 + $0x1e8] sm:$0xff]
    %v525 = vld [vmem:[#allocation10 + $0x1f0] sm:$0xff]
    %v526 = vld [vmem:[#allocation10 + $0x1f8] sm:$0xff]
    %v527 = vld [vmem:[%s8] sm:$0xf]
    %v529 = vlaneseq
    %v530 = vshrl.u32 %v529, 7
    %v531 = vsub.s32 0, %v530
    %v532 = vrot.slane %v527, %v531
    %v533 = vlaneseq
    %v534 = vshrl.u32 %v533, 7
    %v535 = vsub.s32 1, %v534
    %v536 = vrot.slane %v527, %v535
    %v537 = vlaneseq
    %v538 = vshrl.u32 %v537, 7
    %v539 = vsub.s32 2, %v538
    %v540 = vrot.slane %v527, %v539
    %v541 = vlaneseq
    %v542 = vshrl.u32 %v541, 7
    %v543 = vsub.s32 3, %v542
    %v544 = vrot.slane %v527, %v543
    %v613 = vunpack.c.l.b16 %v463
    %v614 = vunpack.c.h.b16 %v463
    %v615 = vunpack.c.l.b16 %v464
    %v616 = vunpack.c.h.b16 %v464
    %v617 = vunpack.c.l.b16 %v465
    %v618 = vunpack.c.h.b16 %v465
    %v619 = vunpack.c.l.b16 %v466
    %v620 = vunpack.c.h.b16 %v466
    %v621 = vunpack.c.l.b16 %v467
    %v622 = vunpack.c.h.b16 %v467
    %v623 = vunpack.c.l.b16 %v468
    %v624 = vunpack.c.h.b16 %v468
    %v625 = vunpack.c.l.b16 %v469
    %v626 = vunpack.c.h.b16 %v469
    %v627 = vunpack.c.l.b16 %v470
    %v628 = vunpack.c.h.b16 %v470
    %v629 = vunpack.c.l.b16 %v471
    %v630 = vunpack.c.h.b16 %v471
    %v631 = vunpack.c.l.b16 %v472
    %v632 = vunpack.c.h.b16 %v472
    %v633 = vunpack.c.l.b16 %v473
    %v634 = vunpack.c.h.b16 %v473
    %v635 = vunpack.c.l.b16 %v474
    %v636 = vunpack.c.h.b16 %v474
    %v637 = vunpack.c.l.b16 %v475
    %v638 = vunpack.c.h.b16 %v475
    %v639 = vunpack.c.l.b16 %v476
    %v640 = vunpack.c.h.b16 %v476
    %v641 = vunpack.c.l.b16 %v477
    %v642 = vunpack.c.h.b16 %v477
    %v643 = vunpack.c.l.b16 %v478
    %v644 = vunpack.c.h.b16 %v478
    %v645 = vunpack.c.l.b16 %v479
    %v646 = vunpack.c.h.b16 %v479
    %v647 = vunpack.c.l.b16 %v480
    %v648 = vunpack.c.h.b16 %v480
    %v649 = vunpack.c.l.b16 %v481
    %v650 = vunpack.c.h.b16 %v481
    %v651 = vunpack.c.l.b16 %v482
    %v652 = vunpack.c.h.b16 %v482
    %v653 = vunpack.c.l.b16 %v483
    %v654 = vunpack.c.h.b16 %v483
    %v655 = vunpack.c.l.b16 %v484
    %v656 = vunpack.c.h.b16 %v484
    %v657 = vunpack.c.l.b16 %v485
    %v658 = vunpack.c.h.b16 %v485
    %v659 = vunpack.c.l.b16 %v486
    %v660 = vunpack.c.h.b16 %v486
    %v661 = vunpack.c.l.b16 %v487
    %v662 = vunpack.c.h.b16 %v487
    %v663 = vunpack.c.l.b16 %v488
    %v664 = vunpack.c.h.b16 %v488
    %v665 = vunpack.c.l.b16 %v489
    %v666 = vunpack.c.h.b16 %v489
    %v667 = vunpack.c.l.b16 %v490
    %v668 = vunpack.c.h.b16 %v490
    %v669 = vunpack.c.l.b16 %v491
    %v670 = vunpack.c.h.b16 %v491
    %v671 = vunpack.c.l.b16 %v492
    %v672 = vunpack.c.h.b16 %v492
    %v673 = vunpack.c.l.b16 %v493
    %v674 = vunpack.c.h.b16 %v493
    %v675 = vunpack.c.l.b16 %v494
    %v676 = vunpack.c.h.b16 %v494
    %v677 = vunpack.c.l.b16 %v495
    %v678 = vunpack.c.h.b16 %v495
    %v679 = vunpack.c.l.b16 %v496
    %v680 = vunpack.c.h.b16 %v496
    %v681 = vunpack.c.l.b16 %v497
    %v682 = vunpack.c.h.b16 %v497
    %v683 = vunpack.c.l.b16 %v498
    %v684 = vunpack.c.h.b16 %v498
    %v685 = vunpack.c.l.b16 %v499
    %v686 = vunpack.c.h.b16 %v499
    %v687 = vunpack.c.l.b16 %v500
    %v688 = vunpack.c.h.b16 %v500
    %v689 = vunpack.c.l.b16 %v501
    %v690 = vunpack.c.h.b16 %v501
    %v691 = vunpack.c.l.b16 %v502
    %v692 = vunpack.c.h.b16 %v502
    %v693 = vunpack.c.l.b16 %v503
    %v694 = vunpack.c.h.b16 %v503
    %v695 = vunpack.c.l.b16 %v504
    %v696 = vunpack.c.h.b16 %v504
    %v697 = vunpack.c.l.b16 %v505
    %v698 = vunpack.c.h.b16 %v505
    %v699 = vunpack.c.l.b16 %v506
    %v700 = vunpack.c.h.b16 %v506
    %v701 = vunpack.c.l.b16 %v507
    %v702 = vunpack.c.h.b16 %v507
    %v703 = vunpack.c.l.b16 %v508
    %v704 = vunpack.c.h.b16 %v508
    %v705 = vunpack.c.l.b16 %v509
    %v706 = vunpack.c.h.b16 %v509
    %v707 = vunpack.c.l.b16 %v510
    %v708 = vunpack.c.h.b16 %v510
    %v709 = vunpack.c.l.b16 %v511
    %v710 = vunpack.c.h.b16 %v511
    %v711 = vunpack.c.l.b16 %v512
    %v712 = vunpack.c.h.b16 %v512
    %v713 = vunpack.c.l.b16 %v513
    %v714 = vunpack.c.h.b16 %v513
    %v715 = vunpack.c.l.b16 %v514
    %v716 = vunpack.c.h.b16 %v514
    %v717 = vunpack.c.l.b16 %v515
    %v718 = vunpack.c.h.b16 %v515
    %v719 = vunpack.c.l.b16 %v516
    %v720 = vunpack.c.h.b16 %v516
    %v721 = vunpack.c.l.b16 %v517
    %v722 = vunpack.c.h.b16 %v517
    %v723 = vunpack.c.l.b16 %v518
    %v724 = vunpack.c.h.b16 %v518
    %v725 = vunpack.c.l.b16 %v519
    %v726 = vunpack.c.h.b16 %v519
    %v727 = vunpack.c.l.b16 %v520
    %v728 = vunpack.c.h.b16 %v520
    %v729 = vunpack.c.l.b16 %v521
    %v730 = vunpack.c.h.b16 %v521
    %v731 = vunpack.c.l.b16 %v522
    %v732 = vunpack.c.h.b16 %v522
    %v733 = vunpack.c.l.b16 %v523
    %v734 = vunpack.c.h.b16 %v523
    %v735 = vunpack.c.l.b16 %v524
    %v736 = vunpack.c.h.b16 %v524
    %v737 = vunpack.c.l.b16 %v525
    %v738 = vunpack.c.h.b16 %v525
    %v739 = vunpack.c.l.b16 %v526
    %v740 = vunpack.c.h.b16 %v526
    %v741 = vpack.c.b16 %v617, %v613
    %v742 = vpack.c.b16 %v618, %v614
    %v743 = vpack.c.b16 %v619, %v615
    %v744 = vpack.c.b16 %v620, %v616
    %v745 = vpack.c.b16 %v625, %v621
    %v746 = vpack.c.b16 %v626, %v622
    %v747 = vpack.c.b16 %v627, %v623
    %v748 = vpack.c.b16 %v628, %v624
    %v749 = vpack.c.b16 %v633, %v629
    %v750 = vpack.c.b16 %v634, %v630
    %v751 = vpack.c.b16 %v635, %v631
    %v752 = vpack.c.b16 %v636, %v632
    %v753 = vpack.c.b16 %v641, %v637
    %v754 = vpack.c.b16 %v642, %v638
    %v755 = vpack.c.b16 %v643, %v639
    %v756 = vpack.c.b16 %v644, %v640
    %v757 = vpack.c.b16 %v649, %v645
    %v758 = vpack.c.b16 %v650, %v646
    %v759 = vpack.c.b16 %v651, %v647
    %v760 = vpack.c.b16 %v652, %v648
    %v761 = vpack.c.b16 %v657, %v653
    %v762 = vpack.c.b16 %v658, %v654
    %v763 = vpack.c.b16 %v659, %v655
    %v764 = vpack.c.b16 %v660, %v656
    %v765 = vpack.c.b16 %v665, %v661
    %v766 = vpack.c.b16 %v666, %v662
    %v767 = vpack.c.b16 %v667, %v663
    %v768 = vpack.c.b16 %v668, %v664
    %v769 = vpack.c.b16 %v673, %v669
    %v770 = vpack.c.b16 %v674, %v670
    %v771 = vpack.c.b16 %v675, %v671
    %v772 = vpack.c.b16 %v676, %v672
    %v773 = vpack.c.b16 %v681, %v677
    %v774 = vpack.c.b16 %v682, %v678
    %v775 = vpack.c.b16 %v683, %v679
    %v776 = vpack.c.b16 %v684, %v680
    %v777 = vpack.c.b16 %v689, %v685
    %v778 = vpack.c.b16 %v690, %v686
    %v779 = vpack.c.b16 %v691, %v687
    %v780 = vpack.c.b16 %v692, %v688
    %v781 = vpack.c.b16 %v697, %v693
    %v782 = vpack.c.b16 %v698, %v694
    %v783 = vpack.c.b16 %v699, %v695
    %v784 = vpack.c.b16 %v700, %v696
    %v785 = vpack.c.b16 %v705, %v701
    %v786 = vpack.c.b16 %v706, %v702
    %v787 = vpack.c.b16 %v707, %v703
    %v788 = vpack.c.b16 %v708, %v704
    %v789 = vpack.c.b16 %v713, %v709
    %v790 = vpack.c.b16 %v714, %v710
    %v791 = vpack.c.b16 %v715, %v711
    %v792 = vpack.c.b16 %v716, %v712
    %v793 = vpack.c.b16 %v721, %v717
    %v794 = vpack.c.b16 %v722, %v718
    %v795 = vpack.c.b16 %v723, %v719
    %v796 = vpack.c.b16 %v724, %v720
    %v797 = vpack.c.b16 %v729, %v725
    %v798 = vpack.c.b16 %v730, %v726
    %v799 = vpack.c.b16 %v731, %v727
    %v800 = vpack.c.b16 %v732, %v728
    %v801 = vpack.c.b16 %v737, %v733
    %v802 = vpack.c.b16 %v738, %v734
    %v803 = vpack.c.b16 %v739, %v735
    %v804 = vpack.c.b16 %v740, %v736
    %869 = vmatprep.subr.bf16.mxu0 %v742
    %870 = vmatpush1.bf16.msra.mxu0 %v741
    %871 = vmatprep.subr.bf16.mxu0 %v746
    %872 = vmatpush1.bf16.msra.mxu0 %v745
    %873 = vmatprep.subr.bf16.mxu0 %v750
    %874 = vmatpush1.bf16.msra.mxu0 %v749
    %875 = vmatprep.subr.bf16.mxu0 %v754
    %876 = vmatpush1.bf16.msra.mxu0 %v753
    %877 = vmatprep.subr.bf16.mxu0 %v758
    %878 = vmatpush1.bf16.msra.mxu0 %v757
    %879 = vmatprep.subr.bf16.mxu0 %v762
    %880 = vmatpush1.bf16.msra.mxu0 %v761
    %881 = vmatprep.subr.bf16.mxu0 %v766
    %882 = vmatpush1.bf16.msra.mxu0 %v765
    %883 = vmatprep.subr.bf16.mxu0 %v770
    %884 = vmatpush1.bf16.msra.mxu0 %v769
    %885 = vmatprep.subr.bf16.mxu0 %v774
    %886 = vmatpush1.bf16.msra.mxu0 %v773
    %887 = vmatprep.subr.bf16.mxu0 %v778
    %888 = vmatpush1.bf16.msra.mxu0 %v777
    %889 = vmatprep.subr.bf16.mxu0 %v782
    %890 = vmatpush1.bf16.msra.mxu0 %v781
    %891 = vmatprep.subr.bf16.mxu0 %v786
    %892 = vmatpush1.bf16.msra.mxu0 %v785
    %893 = vmatprep.subr.bf16.mxu0 %v790
    %894 = vmatpush1.bf16.msra.mxu0 %v789
    %895 = vmatprep.subr.bf16.mxu0 %v794
    %896 = vmatpush1.bf16.msra.mxu0 %v793
    %897 = vmatprep.subr.bf16.mxu0 %v798
    %898 = vmatpush1.bf16.msra.mxu0 %v797
    %899 = vmatprep.subr.bf16.mxu0 %v802
    %900 = vmatpush1.bf16.msra.mxu0 %v801
    %901 = vmatprep.mubr.bf16.mxu0 %v462
    %902 = vmatmul.mubr.bf16.gmra.mrb[0].mxu0 %v461
    %v903 = vpop.f32.mrb[0].mxu0
    %v904 = vadd.f32 %v532, %v903
    %v905 = vpop.f32.mrb[0].mxu0
    %v906 = vadd.f32 %v536, %v905
    %v907 = vpop.f32.mrb[0].mxu0
    %v908 = vadd.f32 %v532, %v907
    %v909 = vpop.f32.mrb[0].mxu0
    %v910 = vadd.f32 %v536, %v909
    %911 = vdwg.mxu0
    %912 = vmatprep.subr.bf16.mxu0 %v744
    %913 = vmatpush1.bf16.msra.mxu0 %v743
    %914 = vmatprep.subr.bf16.mxu0 %v748
    %915 = vmatpush1.bf16.msra.mxu0 %v747
    %916 = vmatprep.subr.bf16.mxu0 %v752
    %917 = vmatpush1.bf16.msra.mxu0 %v751
    %918 = vmatprep.subr.bf16.mxu0 %v756
    %919 = vmatpush1.bf16.msra.mxu0 %v755
    %920 = vmatprep.subr.bf16.mxu0 %v760
    %921 = vmatpush1.bf16.msra.mxu0 %v759
    %922 = vmatprep.subr.bf16.mxu0 %v764
    %923 = vmatpush1.bf16.msra.mxu0 %v763
    %924 = vmatprep.subr.bf16.mxu0 %v768
    %925 = vmatpush1.bf16.msra.mxu0 %v767
    %926 = vmatprep.subr.bf16.mxu0 %v772
    %927 = vmatpush1.bf16.msra.mxu0 %v771
    %928 = vmatprep.subr.bf16.mxu0 %v776
    %929 = vmatpush1.bf16.msra.mxu0 %v775
    %930 = vmatprep.subr.bf16.mxu0 %v780
    %931 = vmatpush1.bf16.msra.mxu0 %v779
    %932 = vmatprep.subr.bf16.mxu0 %v784
    %933 = vmatpush1.bf16.msra.mxu0 %v783
    %934 = vmatprep.subr.bf16.mxu0 %v788
    %935 = vmatpush1.bf16.msra.mxu0 %v787
    %936 = vmatprep.subr.bf16.mxu0 %v792
    %937 = vmatpush1.bf16.msra.mxu0 %v791
    %938 = vmatprep.subr.bf16.mxu0 %v796
    %939 = vmatpush1.bf16.msra.mxu0 %v795
    %940 = vmatprep.subr.bf16.mxu0 %v800
    %941 = vmatpush1.bf16.msra.mxu0 %v799
    %942 = vmatprep.subr.bf16.mxu0 %v804
    %943 = vmatpush1.bf16.msra.mxu0 %v803
    %944 = vmatprep.mubr.bf16.mxu0 %v462
    %945 = vmatmul.mubr.bf16.gmra.mrb[0].mxu0 %v461
    %v946 = vpop.f32.mrb[0].mxu0
    %v947 = vadd.f32 %v540, %v946
    %v948 = vpop.f32.mrb[0].mxu0
    %v949 = vadd.f32 %v544, %v948
    %v950 = vpop.f32.mrb[0].mxu0
    %v951 = vadd.f32 %v540, %v950
    %v952 = vpop.f32.mrb[0].mxu0
    %v953 = vadd.f32 %v544, %v952
    %954 = vdwg.mxu0
    %v955 = vmax.f32 %v904, 0.0
    %v956 = vmax.f32 %v906, 0.0
    %v957 = vmax.f32 %v947, 0.0
    %v958 = vmax.f32 %v949, 0.0
    %v959 = vmax.f32 %v908, 0.0
    %v960 = vmax.f32 %v910, 0.0
    %v961 = vmax.f32 %v951, 0.0
    %v962 = vmax.f32 %v953, 0.0
    %v963 = vmin.f32 %v955, 6.0
    %v964 = vmin.f32 %v956, 6.0
    %v965 = vmin.f32 %v957, 6.0
    %v966 = vmin.f32 %v958, 6.0
    %v967 = vmin.f32 %v959, 6.0
    %v968 = vmin.f32 %v960, 6.0
    %v969 = vmin.f32 %v961, 6.0
    %v970 = vmin.f32 %v962, 6.0
    %v971 = vpack.c.bf16 %v967, %v963
    %v972 = vpack.c.bf16 %v968, %v964
    %v973 = vpack.c.bf16 %v969, %v965
    %v974 = vpack.c.bf16 %v970, %v966
    %v975 = vld [vmem:[#allocation11] sm:$0xff]
    %v976 = vld [vmem:[#allocation11 + $0x8] sm:$0xff]
    %v977 = vld [vmem:[#allocation11 + $0x10] sm:$0xff]
    %v978 = vld [vmem:[#allocation11 + $0x18] sm:$0xff]
    %v979 = vld [vmem:[#allocation11 + $0x20] sm:$0xff]
    %v980 = vld [vmem:[#allocation11 + $0x28] sm:$0xff]
    %v981 = vld [vmem:[#allocation11 + $0x30] sm:$0xff]
    %v982 = vld [vmem:[#allocation11 + $0x38] sm:$0xff]
    %v983 = vld [vmem:[#allocation11 + $0x40] sm:$0xff]
    %v984 = vld [vmem:[#allocation11 + $0x48] sm:$0xff]
    %v985 = vld [vmem:[#allocation11 + $0x50] sm:$0xff]
    %v986 = vld [vmem:[#allocation11 + $0x58] sm:$0xff]
    %v987 = vld [vmem:[#allocation11 + $0x60] sm:$0xff]
    %v988 = vld [vmem:[#allocation11 + $0x68] sm:$0xff]
    %v989 = vld [vmem:[#allocation11 + $0x70] sm:$0xff]
    %v990 = vld [vmem:[#allocation11 + $0x78] sm:$0xff]
    %v991 = vld [vmem:[#allocation11 + $0x80] sm:$0xff]
    %v992 = vld [vmem:[#allocation11 + $0x88] sm:$0xff]
    %v993 = vld [vmem:[#allocation11 + $0x90] sm:$0xff]
    %v994 = vld [vmem:[#allocation11 + $0x98] sm:$0xff]
    %v995 = vld [vmem:[#allocation11 + $0xa0] sm:$0xff]
    %v996 = vld [vmem:[#allocation11 + $0xa8] sm:$0xff]
    %v997 = vld [vmem:[#allocation11 + $0xb0] sm:$0xff]
    %v998 = vld [vmem:[#allocation11 + $0xb8] sm:$0xff]
    %v999 = vld [vmem:[#allocation11 + $0xc0] sm:$0xff]
    %v1000 = vld [vmem:[#allocation11 + $0xc8] sm:$0xff]
    %v1001 = vld [vmem:[#allocation11 + $0xd0] sm:$0xff]
    %v1002 = vld [vmem:[#allocation11 + $0xd8] sm:$0xff]
    %v1003 = vld [vmem:[#allocation11 + $0xe0] sm:$0xff]
    %v1004 = vld [vmem:[#allocation11 + $0xe8] sm:$0xff]
    %v1005 = vld [vmem:[#allocation11 + $0xf0] sm:$0xff]
    %v1006 = vld [vmem:[#allocation11 + $0xf8] sm:$0xff]
    %v1007 = vld [vmem:[#allocation11 + $0x100] sm:$0xff]
    %v1008 = vld [vmem:[#allocation11 + $0x108] sm:$0xff]
    %v1009 = vld [vmem:[#allocation11 + $0x110] sm:$0xff]
    %v1010 = vld [vmem:[#allocation11 + $0x118] sm:$0xff]
    %v1011 = vld [vmem:[#allocation11 + $0x120] sm:$0xff]
    %v1012 = vld [vmem:[#allocation11 + $0x128] sm:$0xff]
    %v1013 = vld [vmem:[#allocation11 + $0x130] sm:$0xff]
    %v1014 = vld [vmem:[#allocation11 + $0x138] sm:$0xff]
    %v1015 = vld [vmem:[#allocation11 + $0x140] sm:$0xff]
    %v1016 = vld [vmem:[#allocation11 + $0x148] sm:$0xff]
    %v1017 = vld [vmem:[#allocation11 + $0x150] sm:$0xff]
    %v1018 = vld [vmem:[#allocation11 + $0x158] sm:$0xff]
    %v1019 = vld [vmem:[#allocation11 + $0x160] sm:$0xff]
    %v1020 = vld [vmem:[#allocation11 + $0x168] sm:$0xff]
    %v1021 = vld [vmem:[#allocation11 + $0x170] sm:$0xff]
    %v1022 = vld [vmem:[#allocation11 + $0x178] sm:$0xff]
    %v1023 = vld [vmem:[#allocation11 + $0x180] sm:$0xff]
    %v1024 = vld [vmem:[#allocation11 + $0x188] sm:$0xff]
    %v1025 = vld [vmem:[#allocation11 + $0x190] sm:$0xff]
    %v1026 = vld [vmem:[#allocation11 + $0x198] sm:$0xff]
    %v1027 = vld [vmem:[#allocation11 + $0x1a0] sm:$0xff]
    %v1028 = vld [vmem:[#allocation11 + $0x1a8] sm:$0xff]
    %v1029 = vld [vmem:[#allocation11 + $0x1b0] sm:$0xff]
    %v1030 = vld [vmem:[#allocation11 + $0x1b8] sm:$0xff]
    %v1031 = vld [vmem:[#allocation11 + $0x1c0] sm:$0xff]
    %v1032 = vld [vmem:[#allocation11 + $0x1c8] sm:$0xff]
    %v1033 = vld [vmem:[#allocation11 + $0x1d0] sm:$0xff]
    %v1034 = vld [vmem:[#allocation11 + $0x1d8] sm:$0xff]
    %v1035 = vld [vmem:[#allocation11 + $0x1e0] sm:$0xff]
    %v1036 = vld [vmem:[#allocation11 + $0x1e8] sm:$0xff]
    %v1037 = vld [vmem:[#allocation11 + $0x1f0] sm:$0xff]
    %v1038 = vld [vmem:[#allocation11 + $0x1f8] sm:$0xff]
    %v1039 = vld [vmem:[#allocation11 + $0x200] sm:$0xff]
    %v1040 = vld [vmem:[#allocation11 + $0x208] sm:$0xff]
    %v1041 = vld [vmem:[#allocation11 + $0x210] sm:$0xff]
    %v1042 = vld [vmem:[#allocation11 + $0x218] sm:$0xff]
    %v1043 = vld [vmem:[#allocation11 + $0x220] sm:$0xff]
    %v1044 = vld [vmem:[#allocation11 + $0x228] sm:$0xff]
    %v1045 = vld [vmem:[#allocation11 + $0x230] sm:$0xff]
    %v1046 = vld [vmem:[#allocation11 + $0x238] sm:$0xff]
    %v1047 = vld [vmem:[#allocation11 + $0x240] sm:$0xff]
    %v1048 = vld [vmem:[#allocation11 + $0x248] sm:$0xff]
    %v1049 = vld [vmem:[#allocation11 + $0x250] sm:$0xff]
    %v1050 = vld [vmem:[#allocation11 + $0x258] sm:$0xff]
    %v1051 = vld [vmem:[#allocation11 + $0x260] sm:$0xff]
    %v1052 = vld [vmem:[#allocation11 + $0x268] sm:$0xff]
    %v1053 = vld [vmem:[#allocation11 + $0x270] sm:$0xff]
    %v1054 = vld [vmem:[#allocation11 + $0x278] sm:$0xff]
    %v1055 = vld [vmem:[#allocation11 + $0x280] sm:$0xff]
    %v1056 = vld [vmem:[#allocation11 + $0x288] sm:$0xff]
    %v1057 = vld [vmem:[#allocation11 + $0x290] sm:$0xff]
    %v1058 = vld [vmem:[#allocation11 + $0x298] sm:$0xff]
    %v1059 = vld [vmem:[#allocation11 + $0x2a0] sm:$0xff]
    %v1060 = vld [vmem:[#allocation11 + $0x2a8] sm:$0xff]
    %v1061 = vld [vmem:[#allocation11 + $0x2b0] sm:$0xff]
    %v1062 = vld [vmem:[#allocation11 + $0x2b8] sm:$0xff]
    %v1063 = vld [vmem:[#allocation11 + $0x2c0] sm:$0xff]
    %v1064 = vld [vmem:[#allocation11 + $0x2c8] sm:$0xff]
    %v1065 = vld [vmem:[#allocation11 + $0x2d0] sm:$0xff]
    %v1066 = vld [vmem:[#allocation11 + $0x2d8] sm:$0xff]
    %v1067 = vld [vmem:[#allocation11 + $0x2e0] sm:$0xff]
    %v1068 = vld [vmem:[#allocation11 + $0x2e8] sm:$0xff]
    %v1069 = vld [vmem:[#allocation11 + $0x2f0] sm:$0xff]
    %v1070 = vld [vmem:[#allocation11 + $0x2f8] sm:$0xff]
    %v1071 = vld [vmem:[#allocation11 + $0x300] sm:$0xff]
    %v1072 = vld [vmem:[#allocation11 + $0x308] sm:$0xff]
    %v1073 = vld [vmem:[#allocation11 + $0x310] sm:$0xff]
    %v1074 = vld [vmem:[#allocation11 + $0x318] sm:$0xff]
    %v1075 = vld [vmem:[#allocation11 + $0x320] sm:$0xff]
    %v1076 = vld [vmem:[#allocation11 + $0x328] sm:$0xff]
    %v1077 = vld [vmem:[#allocation11 + $0x330] sm:$0xff]
    %v1078 = vld [vmem:[#allocation11 + $0x338] sm:$0xff]
    %v1079 = vld [vmem:[#allocation11 + $0x340] sm:$0xff]
    %v1080 = vld [vmem:[#allocation11 + $0x348] sm:$0xff]
    %v1081 = vld [vmem:[#allocation11 + $0x350] sm:$0xff]
    %v1082 = vld [vmem:[#allocation11 + $0x358] sm:$0xff]
    %v1083 = vld [vmem:[#allocation11 + $0x360] sm:$0xff]
    %v1084 = vld [vmem:[#allocation11 + $0x368] sm:$0xff]
    %v1085 = vld [vmem:[#allocation11 + $0x370] sm:$0xff]
    %v1086 = vld [vmem:[#allocation11 + $0x378] sm:$0xff]
    %v1087 = vld [vmem:[#allocation11 + $0x380] sm:$0xff]
    %v1088 = vld [vmem:[#allocation11 + $0x388] sm:$0xff]
    %v1089 = vld [vmem:[#allocation11 + $0x390] sm:$0xff]
    %v1090 = vld [vmem:[#allocation11 + $0x398] sm:$0xff]
    %v1091 = vld [vmem:[#allocation11 + $0x3a0] sm:$0xff]
    %v1092 = vld [vmem:[#allocation11 + $0x3a8] sm:$0xff]
    %v1093 = vld [vmem:[#allocation11 + $0x3b0] sm:$0xff]
    %v1094 = vld [vmem:[#allocation11 + $0x3b8] sm:$0xff]
    %v1095 = vld [vmem:[#allocation11 + $0x3c0] sm:$0xff]
    %v1096 = vld [vmem:[#allocation11 + $0x3c8] sm:$0xff]
    %v1097 = vld [vmem:[#allocation11 + $0x3d0] sm:$0xff]
    %v1098 = vld [vmem:[#allocation11 + $0x3d8] sm:$0xff]
    %v1099 = vld [vmem:[#allocation11 + $0x3e0] sm:$0xff]
    %v1100 = vld [vmem:[#allocation11 + $0x3e8] sm:$0xff]
    %v1101 = vld [vmem:[#allocation11 + $0x3f0] sm:$0xff]
    %v1102 = vld [vmem:[#allocation11 + $0x3f8] sm:$0xff]
    %v1103 = vld [vmem:[%s10] sm:$0xf]
    %v1105 = vlaneseq
    %v1106 = vshrl.u32 %v1105, 7
    %v1107 = vsub.s32 0, %v1106
    %v1108 = vrot.slane %v1103, %v1107
    %v1109 = vlaneseq
    %v1110 = vshrl.u32 %v1109, 7
    %v1111 = vsub.s32 1, %v1110
    %v1112 = vrot.slane %v1103, %v1111
    %v1113 = vlaneseq
    %v1114 = vshrl.u32 %v1113, 7
    %v1115 = vsub.s32 2, %v1114
    %v1116 = vrot.slane %v1103, %v1115
    %v1117 = vlaneseq
    %v1118 = vshrl.u32 %v1117, 7
    %v1119 = vsub.s32 3, %v1118
    %v1120 = vrot.slane %v1103, %v1119
    %v1253 = vunpack.c.l.b16 %v975
    %v1254 = vunpack.c.h.b16 %v975
    %v1255 = vunpack.c.l.b16 %v976
    %v1256 = vunpack.c.h.b16 %v976
    %v1257 = vunpack.c.l.b16 %v977
    %v1258 = vunpack.c.h.b16 %v977
    %v1259 = vunpack.c.l.b16 %v978
    %v1260 = vunpack.c.h.b16 %v978
    %v1261 = vunpack.c.l.b16 %v979
    %v1262 = vunpack.c.h.b16 %v979
    %v1263 = vunpack.c.l.b16 %v980
    %v1264 = vunpack.c.h.b16 %v980
    %v1265 = vunpack.c.l.b16 %v981
    %v1266 = vunpack.c.h.b16 %v981
    %v1267 = vunpack.c.l.b16 %v982
    %v1268 = vunpack.c.h.b16 %v982
    %v1269 = vunpack.c.l.b16 %v983
    %v1270 = vunpack.c.h.b16 %v983
    %v1271 = vunpack.c.l.b16 %v984
    %v1272 = vunpack.c.h.b16 %v984
    %v1273 = vunpack.c.l.b16 %v985
    %v1274 = vunpack.c.h.b16 %v985
    %v1275 = vunpack.c.l.b16 %v986
    %v1276 = vunpack.c.h.b16 %v986
    %v1277 = vunpack.c.l.b16 %v987
    %v1278 = vunpack.c.h.b16 %v987
    %v1279 = vunpack.c.l.b16 %v988
    %v1280 = vunpack.c.h.b16 %v988
    %v1281 = vunpack.c.l.b16 %v989
    %v1282 = vunpack.c.h.b16 %v989
    %v1283 = vunpack.c.l.b16 %v990
    %v1284 = vunpack.c.h.b16 %v990
    %v1285 = vunpack.c.l.b16 %v991
    %v1286 = vunpack.c.h.b16 %v991
    %v1287 = vunpack.c.l.b16 %v992
    %v1288 = vunpack.c.h.b16 %v992
    %v1289 = vunpack.c.l.b16 %v993
    %v1290 = vunpack.c.h.b16 %v993
    %v1291 = vunpack.c.l.b16 %v994
    %v1292 = vunpack.c.h.b16 %v994
    %v1293 = vunpack.c.l.b16 %v995
    %v1294 = vunpack.c.h.b16 %v995
    %v1295 = vunpack.c.l.b16 %v996
    %v1296 = vunpack.c.h.b16 %v996
    %v1297 = vunpack.c.l.b16 %v997
    %v1298 = vunpack.c.h.b16 %v997
    %v1299 = vunpack.c.l.b16 %v998
    %v1300 = vunpack.c.h.b16 %v998
    %v1301 = vunpack.c.l.b16 %v999
    %v1302 = vunpack.c.h.b16 %v999
    %v1303 = vunpack.c.l.b16 %v1000
    %v1304 = vunpack.c.h.b16 %v1000
    %v1305 = vunpack.c.l.b16 %v1001
    %v1306 = vunpack.c.h.b16 %v1001
    %v1307 = vunpack.c.l.b16 %v1002
    %v1308 = vunpack.c.h.b16 %v1002
    %v1309 = vunpack.c.l.b16 %v1003
    %v1310 = vunpack.c.h.b16 %v1003
    %v1311 = vunpack.c.l.b16 %v1004
    %v1312 = vunpack.c.h.b16 %v1004
    %v1313 = vunpack.c.l.b16 %v1005
    %v1314 = vunpack.c.h.b16 %v1005
    %v1315 = vunpack.c.l.b16 %v1006
    %v1316 = vunpack.c.h.b16 %v1006
    %v1317 = vunpack.c.l.b16 %v1007
    %v1318 = vunpack.c.h.b16 %v1007
    %v1319 = vunpack.c.l.b16 %v1008
    %v1320 = vunpack.c.h.b16 %v1008
    %v1321 = vunpack.c.l.b16 %v1009
    %v1322 = vunpack.c.h.b16 %v1009
    %v1323 = vunpack.c.l.b16 %v1010
    %v1324 = vunpack.c.h.b16 %v1010
    %v1325 = vunpack.c.l.b16 %v1011
    %v1326 = vunpack.c.h.b16 %v1011
    %v1327 = vunpack.c.l.b16 %v1012
    %v1328 = vunpack.c.h.b16 %v1012
    %v1329 = vunpack.c.l.b16 %v1013
    %v1330 = vunpack.c.h.b16 %v1013
    %v1331 = vunpack.c.l.b16 %v1014
    %v1332 = vunpack.c.h.b16 %v1014
    %v1333 = vunpack.c.l.b16 %v1015
    %v1334 = vunpack.c.h.b16 %v1015
    %v1335 = vunpack.c.l.b16 %v1016
    %v1336 = vunpack.c.h.b16 %v1016
    %v1337 = vunpack.c.l.b16 %v1017
    %v1338 = vunpack.c.h.b16 %v1017
    %v1339 = vunpack.c.l.b16 %v1018
    %v1340 = vunpack.c.h.b16 %v1018
    %v1341 = vunpack.c.l.b16 %v1019
    %v1342 = vunpack.c.h.b16 %v1019
    %v1343 = vunpack.c.l.b16 %v1020
    %v1344 = vunpack.c.h.b16 %v1020
    %v1345 = vunpack.c.l.b16 %v1021
    %v1346 = vunpack.c.h.b16 %v1021
    %v1347 = vunpack.c.l.b16 %v1022
    %v1348 = vunpack.c.h.b16 %v1022
    %v1349 = vunpack.c.l.b16 %v1023
    %v1350 = vunpack.c.h.b16 %v1023
    %v1351 = vunpack.c.l.b16 %v1024
    %v1352 = vunpack.c.h.b16 %v1024
    %v1353 = vunpack.c.l.b16 %v1025
    %v1354 = vunpack.c.h.b16 %v1025
    %v1355 = vunpack.c.l.b16 %v1026
    %v1356 = vunpack.c.h.b16 %v1026
    %v1357 = vunpack.c.l.b16 %v1027
    %v1358 = vunpack.c.h.b16 %v1027
    %v1359 = vunpack.c.l.b16 %v1028
    %v1360 = vunpack.c.h.b16 %v1028
    %v1361 = vunpack.c.l.b16 %v1029
    %v1362 = vunpack.c.h.b16 %v1029
    %v1363 = vunpack.c.l.b16 %v1030
    %v1364 = vunpack.c.h.b16 %v1030
    %v1365 = vunpack.c.l.b16 %v1031
    %v1366 = vunpack.c.h.b16 %v1031
    %v1367 = vunpack.c.l.b16 %v1032
    %v1368 = vunpack.c.h.b16 %v1032
    %v1369 = vunpack.c.l.b16 %v1033
    %v1370 = vunpack.c.h.b16 %v1033
    %v1371 = vunpack.c.l.b16 %v1034
    %v1372 = vunpack.c.h.b16 %v1034
    %v1373 = vunpack.c.l.b16 %v1035
    %v1374 = vunpack.c.h.b16 %v1035
    %v1375 = vunpack.c.l.b16 %v1036
    %v1376 = vunpack.c.h.b16 %v1036
    %v1377 = vunpack.c.l.b16 %v1037
    %v1378 = vunpack.c.h.b16 %v1037
    %v1379 = vunpack.c.l.b16 %v1038
    %v1380 = vunpack.c.h.b16 %v1038
    %v1381 = vunpack.c.l.b16 %v1039
    %v1382 = vunpack.c.h.b16 %v1039
    %v1383 = vunpack.c.l.b16 %v1040
    %v1384 = vunpack.c.h.b16 %v1040
    %v1385 = vunpack.c.l.b16 %v1041
    %v1386 = vunpack.c.h.b16 %v1041
    %v1387 = vunpack.c.l.b16 %v1042
    %v1388 = vunpack.c.h.b16 %v1042
    %v1389 = vunpack.c.l.b16 %v1043
    %v1390 = vunpack.c.h.b16 %v1043
    %v1391 = vunpack.c.l.b16 %v1044
    %v1392 = vunpack.c.h.b16 %v1044
    %v1393 = vunpack.c.l.b16 %v1045
    %v1394 = vunpack.c.h.b16 %v1045
    %v1395 = vunpack.c.l.b16 %v1046
    %v1396 = vunpack.c.h.b16 %v1046
    %v1397 = vunpack.c.l.b16 %v1047
    %v1398 = vunpack.c.h.b16 %v1047
    %v1399 = vunpack.c.l.b16 %v1048
    %v1400 = vunpack.c.h.b16 %v1048
    %v1401 = vunpack.c.l.b16 %v1049
    %v1402 = vunpack.c.h.b16 %v1049
    %v1403 = vunpack.c.l.b16 %v1050
    %v1404 = vunpack.c.h.b16 %v1050
    %v1405 = vunpack.c.l.b16 %v1051
    %v1406 = vunpack.c.h.b16 %v1051
    %v1407 = vunpack.c.l.b16 %v1052
    %v1408 = vunpack.c.h.b16 %v1052
    %v1409 = vunpack.c.l.b16 %v1053
    %v1410 = vunpack.c.h.b16 %v1053
    %v1411 = vunpack.c.l.b16 %v1054
    %v1412 = vunpack.c.h.b16 %v1054
    %v1413 = vunpack.c.l.b16 %v1055
    %v1414 = vunpack.c.h.b16 %v1055
    %v1415 = vunpack.c.l.b16 %v1056
    %v1416 = vunpack.c.h.b16 %v1056
    %v1417 = vunpack.c.l.b16 %v1057
    %v1418 = vunpack.c.h.b16 %v1057
    %v1419 = vunpack.c.l.b16 %v1058
    %v1420 = vunpack.c.h.b16 %v1058
    %v1421 = vunpack.c.l.b16 %v1059
    %v1422 = vunpack.c.h.b16 %v1059
    %v1423 = vunpack.c.l.b16 %v1060
    %v1424 = vunpack.c.h.b16 %v1060
    %v1425 = vunpack.c.l.b16 %v1061
    %v1426 = vunpack.c.h.b16 %v1061
    %v1427 = vunpack.c.l.b16 %v1062
    %v1428 = vunpack.c.h.b16 %v1062
    %v1429 = vunpack.c.l.b16 %v1063
    %v1430 = vunpack.c.h.b16 %v1063
    %v1431 = vunpack.c.l.b16 %v1064
    %v1432 = vunpack.c.h.b16 %v1064
    %v1433 = vunpack.c.l.b16 %v1065
    %v1434 = vunpack.c.h.b16 %v1065
    %v1435 = vunpack.c.l.b16 %v1066
    %v1436 = vunpack.c.h.b16 %v1066
    %v1437 = vunpack.c.l.b16 %v1067
    %v1438 = vunpack.c.h.b16 %v1067
    %v1439 = vunpack.c.l.b16 %v1068
    %v1440 = vunpack.c.h.b16 %v1068
    %v1441 = vunpack.c.l.b16 %v1069
    %v1442 = vunpack.c.h.b16 %v1069
    %v1443 = vunpack.c.l.b16 %v1070
    %v1444 = vunpack.c.h.b16 %v1070
    %v1445 = vunpack.c.l.b16 %v1071
    %v1446 = vunpack.c.h.b16 %v1071
    %v1447 = vunpack.c.l.b16 %v1072
    %v1448 = vunpack.c.h.b16 %v1072
    %v1449 = vunpack.c.l.b16 %v1073
    %v1450 = vunpack.c.h.b16 %v1073
    %v1451 = vunpack.c.l.b16 %v1074
    %v1452 = vunpack.c.h.b16 %v1074
    %v1453 = vunpack.c.l.b16 %v1075
    %v1454 = vunpack.c.h.b16 %v1075
    %v1455 = vunpack.c.l.b16 %v1076
    %v1456 = vunpack.c.h.b16 %v1076
    %v1457 = vunpack.c.l.b16 %v1077
    %v1458 = vunpack.c.h.b16 %v1077
    %v1459 = vunpack.c.l.b16 %v1078
    %v1460 = vunpack.c.h.b16 %v1078
    %v1461 = vunpack.c.l.b16 %v1079
    %v1462 = vunpack.c.h.b16 %v1079
    %v1463 = vunpack.c.l.b16 %v1080
    %v1464 = vunpack.c.h.b16 %v1080
    %v1465 = vunpack.c.l.b16 %v1081
    %v1466 = vunpack.c.h.b16 %v1081
    %v1467 = vunpack.c.l.b16 %v1082
    %v1468 = vunpack.c.h.b16 %v1082
    %v1469 = vunpack.c.l.b16 %v1083
    %v1470 = vunpack.c.h.b16 %v1083
    %v1471 = vunpack.c.l.b16 %v1084
    %v1472 = vunpack.c.h.b16 %v1084
    %v1473 = vunpack.c.l.b16 %v1085
    %v1474 = vunpack.c.h.b16 %v1085
    %v1475 = vunpack.c.l.b16 %v1086
    %v1476 = vunpack.c.h.b16 %v1086
    %v1477 = vunpack.c.l.b16 %v1087
    %v1478 = vunpack.c.h.b16 %v1087
    %v1479 = vunpack.c.l.b16 %v1088
    %v1480 = vunpack.c.h.b16 %v1088
    %v1481 = vunpack.c.l.b16 %v1089
    %v1482 = vunpack.c.h.b16 %v1089
    %v1483 = vunpack.c.l.b16 %v1090
    %v1484 = vunpack.c.h.b16 %v1090
    %v1485 = vunpack.c.l.b16 %v1091
    %v1486 = vunpack.c.h.b16 %v1091
    %v1487 = vunpack.c.l.b16 %v1092
    %v1488 = vunpack.c.h.b16 %v1092
    %v1489 = vunpack.c.l.b16 %v1093
    %v1490 = vunpack.c.h.b16 %v1093
    %v1491 = vunpack.c.l.b16 %v1094
    %v1492 = vunpack.c.h.b16 %v1094
    %v1493 = vunpack.c.l.b16 %v1095
    %v1494 = vunpack.c.h.b16 %v1095
    %v1495 = vunpack.c.l.b16 %v1096
    %v1496 = vunpack.c.h.b16 %v1096
    %v1497 = vunpack.c.l.b16 %v1097
    %v1498 = vunpack.c.h.b16 %v1097
    %v1499 = vunpack.c.l.b16 %v1098
    %v1500 = vunpack.c.h.b16 %v1098
    %v1501 = vunpack.c.l.b16 %v1099
    %v1502 = vunpack.c.h.b16 %v1099
    %v1503 = vunpack.c.l.b16 %v1100
    %v1504 = vunpack.c.h.b16 %v1100
    %v1505 = vunpack.c.l.b16 %v1101
    %v1506 = vunpack.c.h.b16 %v1101
    %v1507 = vunpack.c.l.b16 %v1102
    %v1508 = vunpack.c.h.b16 %v1102
    %v1509 = vpack.c.b16 %v1257, %v1253
    %v1510 = vpack.c.b16 %v1258, %v1254
    %v1511 = vpack.c.b16 %v1259, %v1255
    %v1512 = vpack.c.b16 %v1260, %v1256
    %v1513 = vpack.c.b16 %v1265, %v1261
    %v1514 = vpack.c.b16 %v1266, %v1262
    %v1515 = vpack.c.b16 %v1267, %v1263
    %v1516 = vpack.c.b16 %v1268, %v1264
    %v1517 = vpack.c.b16 %v1273, %v1269
    %v1518 = vpack.c.b16 %v1274, %v1270
    %v1519 = vpack.c.b16 %v1275, %v1271
    %v1520 = vpack.c.b16 %v1276, %v1272
    %v1521 = vpack.c.b16 %v1281, %v1277
    %v1522 = vpack.c.b16 %v1282, %v1278
    %v1523 = vpack.c.b16 %v1283, %v1279
    %v1524 = vpack.c.b16 %v1284, %v1280
    %v1525 = vpack.c.b16 %v1289, %v1285
    %v1526 = vpack.c.b16 %v1290, %v1286
    %v1527 = vpack.c.b16 %v1291, %v1287
    %v1528 = vpack.c.b16 %v1292, %v1288
    %v1529 = vpack.c.b16 %v1297, %v1293
    %v1530 = vpack.c.b16 %v1298, %v1294
    %v1531 = vpack.c.b16 %v1299, %v1295
    %v1532 = vpack.c.b16 %v1300, %v1296
    %v1533 = vpack.c.b16 %v1305, %v1301
    %v1534 = vpack.c.b16 %v1306, %v1302
    %v1535 = vpack.c.b16 %v1307, %v1303
    %v1536 = vpack.c.b16 %v1308, %v1304
    %v1537 = vpack.c.b16 %v1313, %v1309
    %v1538 = vpack.c.b16 %v1314, %v1310
    %v1539 = vpack.c.b16 %v1315, %v1311
    %v1540 = vpack.c.b16 %v1316, %v1312
    %v1541 = vpack.c.b16 %v1321, %v1317
    %v1542 = vpack.c.b16 %v1322, %v1318
    %v1543 = vpack.c.b16 %v1323, %v1319
    %v1544 = vpack.c.b16 %v1324, %v1320
    %v1545 = vpack.c.b16 %v1329, %v1325
    %v1546 = vpack.c.b16 %v1330, %v1326
    %v1547 = vpack.c.b16 %v1331, %v1327
    %v1548 = vpack.c.b16 %v1332, %v1328
    %v1549 = vpack.c.b16 %v1337, %v1333
    %v1550 = vpack.c.b16 %v1338, %v1334
    %v1551 = vpack.c.b16 %v1339, %v1335
    %v1552 = vpack.c.b16 %v1340, %v1336
    %v1553 = vpack.c.b16 %v1345, %v1341
    %v1554 = vpack.c.b16 %v1346, %v1342
    %v1555 = vpack.c.b16 %v1347, %v1343
    %v1556 = vpack.c.b16 %v1348, %v1344
    %v1557 = vpack.c.b16 %v1353, %v1349
    %v1558 = vpack.c.b16 %v1354, %v1350
    %v1559 = vpack.c.b16 %v1355, %v1351
    %v1560 = vpack.c.b16 %v1356, %v1352
    %v1561 = vpack.c.b16 %v1361, %v1357
    %v1562 = vpack.c.b16 %v1362, %v1358
    %v1563 = vpack.c.b16 %v1363, %v1359
    %v1564 = vpack.c.b16 %v1364, %v1360
    %v1565 = vpack.c.b16 %v1369, %v1365
    %v1566 = vpack.c.b16 %v1370, %v1366
    %v1567 = vpack.c.b16 %v1371, %v1367
    %v1568 = vpack.c.b16 %v1372, %v1368
    %v1569 = vpack.c.b16 %v1377, %v1373
    %v1570 = vpack.c.b16 %v1378, %v1374
    %v1571 = vpack.c.b16 %v1379, %v1375
    %v1572 = vpack.c.b16 %v1380, %v1376
    %v1573 = vpack.c.b16 %v1385, %v1381
    %v1574 = vpack.c.b16 %v1386, %v1382
    %v1575 = vpack.c.b16 %v1387, %v1383
    %v1576 = vpack.c.b16 %v1388, %v1384
    %v1577 = vpack.c.b16 %v1393, %v1389
    %v1578 = vpack.c.b16 %v1394, %v1390
    %v1579 = vpack.c.b16 %v1395, %v1391
    %v1580 = vpack.c.b16 %v1396, %v1392
    %v1581 = vpack.c.b16 %v1401, %v1397
    %v1582 = vpack.c.b16 %v1402, %v1398
    %v1583 = vpack.c.b16 %v1403, %v1399
    %v1584 = vpack.c.b16 %v1404, %v1400
    %v1585 = vpack.c.b16 %v1409, %v1405
    %v1586 = vpack.c.b16 %v1410, %v1406
    %v1587 = vpack.c.b16 %v1411, %v1407
    %v1588 = vpack.c.b16 %v1412, %v1408
    %v1589 = vpack.c.b16 %v1417, %v1413
    %v1590 = vpack.c.b16 %v1418, %v1414
    %v1591 = vpack.c.b16 %v1419, %v1415
    %v1592 = vpack.c.b16 %v1420, %v1416
    %v1593 = vpack.c.b16 %v1425, %v1421
    %v1594 = vpack.c.b16 %v1426, %v1422
    %v1595 = vpack.c.b16 %v1427, %v1423
    %v1596 = vpack.c.b16 %v1428, %v1424
    %v1597 = vpack.c.b16 %v1433, %v1429
    %v1598 = vpack.c.b16 %v1434, %v1430
    %v1599 = vpack.c.b16 %v1435, %v1431
    %v1600 = vpack.c.b16 %v1436, %v1432
    %v1601 = vpack.c.b16 %v1441, %v1437
    %v1602 = vpack.c.b16 %v1442, %v1438
    %v1603 = vpack.c.b16 %v1443, %v1439
    %v1604 = vpack.c.b16 %v1444, %v1440
    %v1605 = vpack.c.b16 %v1449, %v1445
    %v1606 = vpack.c.b16 %v1450, %v1446
    %v1607 = vpack.c.b16 %v1451, %v1447
    %v1608 = vpack.c.b16 %v1452, %v1448
    %v1609 = vpack.c.b16 %v1457, %v1453
    %v1610 = vpack.c.b16 %v1458, %v1454
    %v1611 = vpack.c.b16 %v1459, %v1455
    %v1612 = vpack.c.b16 %v1460, %v1456
    %v1613 = vpack.c.b16 %v1465, %v1461
    %v1614 = vpack.c.b16 %v1466, %v1462
    %v1615 = vpack.c.b16 %v1467, %v1463
    %v1616 = vpack.c.b16 %v1468, %v1464
    %v1617 = vpack.c.b16 %v1473, %v1469
    %v1618 = vpack.c.b16 %v1474, %v1470
    %v1619 = vpack.c.b16 %v1475, %v1471
    %v1620 = vpack.c.b16 %v1476, %v1472
    %v1621 = vpack.c.b16 %v1481, %v1477
    %v1622 = vpack.c.b16 %v1482, %v1478
    %v1623 = vpack.c.b16 %v1483, %v1479
    %v1624 = vpack.c.b16 %v1484, %v1480
    %v1625 = vpack.c.b16 %v1489, %v1485
    %v1626 = vpack.c.b16 %v1490, %v1486
    %v1627 = vpack.c.b16 %v1491, %v1487
    %v1628 = vpack.c.b16 %v1492, %v1488
    %v1629 = vpack.c.b16 %v1497, %v1493
    %v1630 = vpack.c.b16 %v1498, %v1494
    %v1631 = vpack.c.b16 %v1499, %v1495
    %v1632 = vpack.c.b16 %v1500, %v1496
    %v1633 = vpack.c.b16 %v1505, %v1501
    %v1634 = vpack.c.b16 %v1506, %v1502
    %v1635 = vpack.c.b16 %v1507, %v1503
    %v1636 = vpack.c.b16 %v1508, %v1504
    %1765 = vmatprep.subr.bf16.mxu0 %v1510
    %1766 = vmatpush1.bf16.msra.mxu0 %v1509
    %1767 = vmatprep.subr.bf16.mxu0 %v1514
    %1768 = vmatpush1.bf16.msra.mxu0 %v1513
    %1769 = vmatprep.subr.bf16.mxu0 %v1518
    %1770 = vmatpush1.bf16.msra.mxu0 %v1517
    %1771 = vmatprep.subr.bf16.mxu0 %v1522
    %1772 = vmatpush1.bf16.msra.mxu0 %v1521
    %1773 = vmatprep.subr.bf16.mxu0 %v1526
    %1774 = vmatpush1.bf16.msra.mxu0 %v1525
    %1775 = vmatprep.subr.bf16.mxu0 %v1530
    %1776 = vmatpush1.bf16.msra.mxu0 %v1529
    %1777 = vmatprep.subr.bf16.mxu0 %v1534
    %1778 = vmatpush1.bf16.msra.mxu0 %v1533
    %1779 = vmatprep.subr.bf16.mxu0 %v1538
    %1780 = vmatpush1.bf16.msra.mxu0 %v1537
    %1781 = vmatprep.subr.bf16.mxu0 %v1542
    %1782 = vmatpush1.bf16.msra.mxu0 %v1541
    %1783 = vmatprep.subr.bf16.mxu0 %v1546
    %1784 = vmatpush1.bf16.msra.mxu0 %v1545
    %1785 = vmatprep.subr.bf16.mxu0 %v1550
    %1786 = vmatpush1.bf16.msra.mxu0 %v1549
    %1787 = vmatprep.subr.bf16.mxu0 %v1554
    %1788 = vmatpush1.bf16.msra.mxu0 %v1553
    %1789 = vmatprep.subr.bf16.mxu0 %v1558
    %1790 = vmatpush1.bf16.msra.mxu0 %v1557
    %1791 = vmatprep.subr.bf16.mxu0 %v1562
    %1792 = vmatpush1.bf16.msra.mxu0 %v1561
    %1793 = vmatprep.subr.bf16.mxu0 %v1566
    %1794 = vmatpush1.bf16.msra.mxu0 %v1565
    %1795 = vmatprep.subr.bf16.mxu0 %v1570
    %1796 = vmatpush1.bf16.msra.mxu0 %v1569
    %1797 = vmatprep.mubr.bf16.mxu0 %v972
    %1798 = vmatmul.mubr.bf16.gmra.mrb[0].mxu0 %v971
    %v1799 = vpop.f32.mrb[0].mxu0
    %v1800 = vadd.f32 %v1108, %v1799
    %v1801 = vpop.f32.mrb[0].mxu0
    %v1802 = vadd.f32 %v1112, %v1801
    %v1803 = vpop.f32.mrb[0].mxu0
    %v1804 = vadd.f32 %v1108, %v1803
    %v1805 = vpop.f32.mrb[0].mxu0
    %v1806 = vadd.f32 %v1112, %v1805
    %1807 = vdwg.mxu0
    %1808 = vmatprep.subr.bf16.mxu0 %v1574
    %1809 = vmatpush1.bf16.msra.mxu0 %v1573
    %1810 = vmatprep.subr.bf16.mxu0 %v1578
    %1811 = vmatpush1.bf16.msra.mxu0 %v1577
    %1812 = vmatprep.subr.bf16.mxu0 %v1582
    %1813 = vmatpush1.bf16.msra.mxu0 %v1581
    %1814 = vmatprep.subr.bf16.mxu0 %v1586
    %1815 = vmatpush1.bf16.msra.mxu0 %v1585
    %1816 = vmatprep.subr.bf16.mxu0 %v1590
    %1817 = vmatpush1.bf16.msra.mxu0 %v1589
    %1818 = vmatprep.subr.bf16.mxu0 %v1594
    %1819 = vmatpush1.bf16.msra.mxu0 %v1593
    %1820 = vmatprep.subr.bf16.mxu0 %v1598
    %1821 = vmatpush1.bf16.msra.mxu0 %v1597
    %1822 = vmatprep.subr.bf16.mxu0 %v1602
    %1823 = vmatpush1.bf16.msra.mxu0 %v1601
    %1824 = vmatprep.subr.bf16.mxu0 %v1606
    %1825 = vmatpush1.bf16.msra.mxu0 %v1605
    %1826 = vmatprep.subr.bf16.mxu0 %v1610
    %1827 = vmatpush1.bf16.msra.mxu0 %v1609
    %1828 = vmatprep.subr.bf16.mxu0 %v1614
    %1829 = vmatpush1.bf16.msra.mxu0 %v1613
    %1830 = vmatprep.subr.bf16.mxu0 %v1618
    %1831 = vmatpush1.bf16.msra.mxu0 %v1617
    %1832 = vmatprep.subr.bf16.mxu0 %v1622
    %1833 = vmatpush1.bf16.msra.mxu0 %v1621
    %1834 = vmatprep.subr.bf16.mxu0 %v1626
    %1835 = vmatpush1.bf16.msra.mxu0 %v1625
    %1836 = vmatprep.subr.bf16.mxu0 %v1630
    %1837 = vmatpush1.bf16.msra.mxu0 %v1629
    %1838 = vmatprep.subr.bf16.mxu0 %v1634
    %1839 = vmatpush1.bf16.msra.mxu0 %v1633
    %1840 = vmatprep.mubr.bf16.mxu0 %v974
    %1841 = vmatmul.mubr.bf16.gmra.mrb[0].mxu0 %v973
    %v1842 = vpop.f32.mrb[0].mxu0
    %v1843 = vadd.f32 %v1800, %v1842
    %v1844 = vpop.f32.mrb[0].mxu0
    %v1845 = vadd.f32 %v1802, %v1844
    %v1846 = vpop.f32.mrb[0].mxu0
    %v1847 = vadd.f32 %v1804, %v1846
    %v1848 = vpop.f32.mrb[0].mxu0
    %v1849 = vadd.f32 %v1806, %v1848
    %1850 = vdwg.mxu0
    %1851 = vmatprep.subr.bf16.mxu0 %v1512
    %1852 = vmatpush1.bf16.msra.mxu0 %v1511
    %1853 = vmatprep.subr.bf16.mxu0 %v1516
    %1854 = vmatpush1.bf16.msra.mxu0 %v1515
    %1855 = vmatprep.subr.bf16.mxu0 %v1520
    %1856 = vmatpush1.bf16.msra.mxu0 %v1519
    %1857 = vmatprep.subr.bf16.mxu0 %v1524
    %1858 = vmatpush1.bf16.msra.mxu0 %v1523
    %1859 = vmatprep.subr.bf16.mxu0 %v1528
    %1860 = vmatpush1.bf16.msra.mxu0 %v1527
    %1861 = vmatprep.subr.bf16.mxu0 %v1532
    %1862 = vmatpush1.bf16.msra.mxu0 %v1531
    %1863 = vmatprep.subr.bf16.mxu0 %v1536
    %1864 = vmatpush1.bf16.msra.mxu0 %v1535
    %1865 = vmatprep.subr.bf16.mxu0 %v1540
    %1866 = vmatpush1.bf16.msra.mxu0 %v1539
    %1867 = vmatprep.subr.bf16.mxu0 %v1544
    %1868 = vmatpush1.bf16.msra.mxu0 %v1543
    %1869 = vmatprep.subr.bf16.mxu0 %v1548
    %1870 = vmatpush1.bf16.msra.mxu0 %v1547
    %1871 = vmatprep.subr.bf16.mxu0 %v1552
    %1872 = vmatpush1.bf16.msra.mxu0 %v1551
    %1873 = vmatprep.subr.bf16.mxu0 %v1556
    %1874 = vmatpush1.bf16.msra.mxu0 %v1555
    %1875 = vmatprep.subr.bf16.mxu0 %v1560
    %1876 = vmatpush1.bf16.msra.mxu0 %v1559
    %1877 = vmatprep.subr.bf16.mxu0 %v1564
    %1878 = vmatpush1.bf16.msra.mxu0 %v1563
    %1879 = vmatprep.subr.bf16.mxu0 %v1568
    %1880 = vmatpush1.bf16.msra.mxu0 %v1567
    %1881 = vmatprep.subr.bf16.mxu0 %v1572
    %1882 = vmatpush1.bf16.msra.mxu0 %v1571
    %1883 = vmatprep.mubr.bf16.mxu0 %v972
    %1884 = vmatmul.mubr.bf16.gmra.mrb[0].mxu0 %v971
    %v1885 = vpop.f32.mrb[0].mxu0
    %v1886 = vadd.f32 %v1116, %v1885
    %v1887 = vpop.f32.mrb[0].mxu0
    %v1888 = vadd.f32 %v1120, %v1887
    %v1889 = vpop.f32.mrb[0].mxu0
    %v1890 = vadd.f32 %v1116, %v1889
    %v1891 = vpop.f32.mrb[0].mxu0
    %v1892 = vadd.f32 %v1120, %v1891
    %1893 = vdwg.mxu0
    %1894 = vmatprep.subr.bf16.mxu0 %v1576
    %1895 = vmatpush1.bf16.msra.mxu0 %v1575
    %1896 = vmatprep.subr.bf16.mxu0 %v1580
    %1897 = vmatpush1.bf16.msra.mxu0 %v1579
    %1898 = vmatprep.subr.bf16.mxu0 %v1584
    %1899 = vmatpush1.bf16.msra.mxu0 %v1583
    %1900 = vmatprep.subr.bf16.mxu0 %v1588
    %1901 = vmatpush1.bf16.msra.mxu0 %v1587
    %1902 = vmatprep.subr.bf16.mxu0 %v1592
    %1903 = vmatpush1.bf16.msra.mxu0 %v1591
    %1904 = vmatprep.subr.bf16.mxu0 %v1596
    %1905 = vmatpush1.bf16.msra.mxu0 %v1595
    %1906 = vmatprep.subr.bf16.mxu0 %v1600
    %1907 = vmatpush1.bf16.msra.mxu0 %v1599
    %1908 = vmatprep.subr.bf16.mxu0 %v1604
    %1909 = vmatpush1.bf16.msra.mxu0 %v1603
    %1910 = vmatprep.subr.bf16.mxu0 %v1608
    %1911 = vmatpush1.bf16.msra.mxu0 %v1607
    %1912 = vmatprep.subr.bf16.mxu0 %v1612
    %1913 = vmatpush1.bf16.msra.mxu0 %v1611
    %1914 = vmatprep.subr.bf16.mxu0 %v1616
    %1915 = vmatpush1.bf16.msra.mxu0 %v1615
    %1916 = vmatprep.subr.bf16.mxu0 %v1620
    %1917 = vmatpush1.bf16.msra.mxu0 %v1619
    %1918 = vmatprep.subr.bf16.mxu0 %v1624
    %1919 = vmatpush1.bf16.msra.mxu0 %v1623
    %1920 = vmatprep.subr.bf16.mxu0 %v1628
    %1921 = vmatpush1.bf16.msra.mxu0 %v1627
    %1922 = vmatprep.subr.bf16.mxu0 %v1632
    %1923 = vmatpush1.bf16.msra.mxu0 %v1631
    %1924 = vmatprep.subr.bf16.mxu0 %v1636
    %1925 = vmatpush1.bf16.msra.mxu0 %v1635
    %1926 = vmatprep.mubr.bf16.mxu0 %v974
    %1927 = vmatmul.mubr.bf16.gmra.mrb[0].mxu0 %v973
    %v1928 = vpop.f32.mrb[0].mxu0
    %v1929 = vadd.f32 %v1886, %v1928
    %v1930 = vpop.f32.mrb[0].mxu0
    %v1931 = vadd.f32 %v1888, %v1930
    %v1932 = vpop.f32.mrb[0].mxu0
    %v1933 = vadd.f32 %v1890, %v1932
    %v1934 = vpop.f32.mrb[0].mxu0
    %v1935 = vadd.f32 %v1892, %v1934
    %1936 = vdwg.mxu0
    %v1937 = vmax.f32 %v1843, 0.0
    %v1938 = vmax.f32 %v1845, 0.0
    %v1939 = vmax.f32 %v1929, 0.0
    %v1940 = vmax.f32 %v1931, 0.0
    %v1941 = vmax.f32 %v1847, 0.0
    %v1942 = vmax.f32 %v1849, 0.0
    %v1943 = vmax.f32 %v1933, 0.0
    %v1944 = vmax.f32 %v1935, 0.0
    %v1945 = vmin.f32 %v1937, 6.0
    %v1946 = vmin.f32 %v1938, 6.0
    %v1947 = vmin.f32 %v1939, 6.0
    %v1948 = vmin.f32 %v1940, 6.0
    %v1949 = vmin.f32 %v1941, 6.0
    %v1950 = vmin.f32 %v1942, 6.0
    %v1951 = vmin.f32 %v1943, 6.0
    %v1952 = vmin.f32 %v1944, 6.0
    %v1953 = vpack.c.bf16 %v1949, %v1945
    %v1954 = vpack.c.bf16 %v1950, %v1946
    %v1955 = vpack.c.bf16 %v1951, %v1947
    %v1956 = vpack.c.bf16 %v1952, %v1948
    %v1957 = vld [vmem:[#allocation13] sm:$0xf]
    %v1958 = vld [vmem:[#allocation13 + $0x4] sm:$0xf]
    %v1959 = vld [vmem:[#allocation13 + $0x8] sm:$0xf]
    %v1960 = vld [vmem:[#allocation13 + $0xc] sm:$0xf]
    %v1961 = vld [vmem:[#allocation13 + $0x10] sm:$0xf]
    %v1962 = vld [vmem:[#allocation13 + $0x14] sm:$0xf]
    %v1963 = vld [vmem:[#allocation13 + $0x18] sm:$0xf]
    %v1964 = vld [vmem:[#allocation13 + $0x1c] sm:$0xf]
    %v1965 = vld [vmem:[#allocation13 + $0x20] sm:$0xf]
    %v1966 = vld [vmem:[#allocation13 + $0x24] sm:$0xf]
    %v1967 = vld [vmem:[#allocation13 + $0x28] sm:$0xf]
    %v1968 = vld [vmem:[#allocation13 + $0x2c] sm:$0xf]
    %v1969 = vld [vmem:[#allocation13 + $0x30] sm:$0xf]
    %v1970 = vld [vmem:[#allocation13 + $0x34] sm:$0xf]
    %v1971 = vld [vmem:[#allocation13 + $0x38] sm:$0xf]
    %v1972 = vld [vmem:[#allocation13 + $0x3c] sm:$0xf]
    %v1973 = vld [vmem:[#allocation13 + $0x40] sm:$0xf]
    %v1974 = vld [vmem:[#allocation13 + $0x44] sm:$0xf]
    %v1975 = vld [vmem:[#allocation13 + $0x48] sm:$0xf]
    %v1976 = vld [vmem:[#allocation13 + $0x4c] sm:$0xf]
    %v1977 = vld [vmem:[#allocation13 + $0x50] sm:$0xf]
    %v1978 = vld [vmem:[#allocation13 + $0x54] sm:$0xf]
    %v1979 = vld [vmem:[#allocation13 + $0x58] sm:$0xf]
    %v1980 = vld [vmem:[#allocation13 + $0x5c] sm:$0xf]
    %v1981 = vld [vmem:[#allocation13 + $0x60] sm:$0xf]
    %v1982 = vld [vmem:[#allocation13 + $0x64] sm:$0xf]
    %v1983 = vld [vmem:[#allocation13 + $0x68] sm:$0xf]
    %v1984 = vld [vmem:[#allocation13 + $0x6c] sm:$0xf]
    %v1985 = vld [vmem:[#allocation13 + $0x70] sm:$0xf]
    %v1986 = vld [vmem:[#allocation13 + $0x74] sm:$0xf]
    %v1987 = vld [vmem:[#allocation13 + $0x78] sm:$0xf]
    %v1988 = vld [vmem:[#allocation13 + $0x7c] sm:$0xf]
    %v1989 = vld [vmem:[#allocation13 + $0x80] sm:$0xf]
    %v1990 = vld [vmem:[#allocation13 + $0x84] sm:$0xf]
    %v1991 = vld [vmem:[#allocation13 + $0x88] sm:$0xf]
    %v1992 = vld [vmem:[#allocation13 + $0x8c] sm:$0xf]
    %v1993 = vld [vmem:[#allocation13 + $0x90] sm:$0xf]
    %v1994 = vld [vmem:[#allocation13 + $0x94] sm:$0xf]
    %v1995 = vld [vmem:[#allocation13 + $0x98] sm:$0xf]
    %v1996 = vld [vmem:[#allocation13 + $0x9c] sm:$0xf]
    %v1997 = vld [vmem:[#allocation13 + $0xa0] sm:$0xf]
    %v1998 = vld [vmem:[#allocation13 + $0xa4] sm:$0xf]
    %v1999 = vld [vmem:[#allocation13 + $0xa8] sm:$0xf]
    %v2000 = vld [vmem:[#allocation13 + $0xac] sm:$0xf]
    %v2001 = vld [vmem:[#allocation13 + $0xb0] sm:$0xf]
    %v2002 = vld [vmem:[#allocation13 + $0xb4] sm:$0xf]
    %v2003 = vld [vmem:[#allocation13 + $0xb8] sm:$0xf]
    %v2004 = vld [vmem:[#allocation13 + $0xbc] sm:$0xf]
    %v2005 = vld [vmem:[#allocation13 + $0xc0] sm:$0xf]
    %v2006 = vld [vmem:[#allocation13 + $0xc4] sm:$0xf]
    %v2007 = vld [vmem:[#allocation13 + $0xc8] sm:$0xf]
    %v2008 = vld [vmem:[#allocation13 + $0xcc] sm:$0xf]
    %v2009 = vld [vmem:[#allocation13 + $0xd0] sm:$0xf]
    %v2010 = vld [vmem:[#allocation13 + $0xd4] sm:$0xf]
    %v2011 = vld [vmem:[#allocation13 + $0xd8] sm:$0xf]
    %v2012 = vld [vmem:[#allocation13 + $0xdc] sm:$0xf]
    %v2013 = vld [vmem:[#allocation13 + $0xe0] sm:$0xf]
    %v2014 = vld [vmem:[#allocation13 + $0xe4] sm:$0xf]
    %v2015 = vld [vmem:[#allocation13 + $0xe8] sm:$0xf]
    %v2016 = vld [vmem:[#allocation13 + $0xec] sm:$0xf]
    %v2017 = vld [vmem:[#allocation13 + $0xf0] sm:$0xf]
    %v2018 = vld [vmem:[#allocation13 + $0xf4] sm:$0xf]
    %v2019 = vld [vmem:[#allocation13 + $0xf8] sm:$0xf]
    %v2020 = vld [vmem:[#allocation13 + $0xfc] sm:$0xf]
    %v2021 = vld [vmem:[%s12] sm:$0x1]
    %v2023 = vlaneseq
    %v2024 = vshrl.u32 %v2023, 7
    %v2025 = vsub.s32 0, %v2024
    %v2026 = vrot.slane %v2021, %v2025
    %v2092 = vunpack.c.l.b16 %v1957
    %v2093 = vunpack.c.l.b16 %v1958
    %v2094 = vunpack.c.l.b16 %v1959
    %v2095 = vunpack.c.l.b16 %v1960
    %v2096 = vunpack.c.l.b16 %v1961
    %v2097 = vunpack.c.l.b16 %v1962
    %v2098 = vunpack.c.l.b16 %v1963
    %v2099 = vunpack.c.l.b16 %v1964
    %v2100 = vunpack.c.l.b16 %v1965
    %v2101 = vunpack.c.l.b16 %v1966
    %v2102 = vunpack.c.l.b16 %v1967
    %v2103 = vunpack.c.l.b16 %v1968
    %v2104 = vunpack.c.l.b16 %v1969
    %v2105 = vunpack.c.l.b16 %v1970
    %v2106 = vunpack.c.l.b16 %v1971
    %v2107 = vunpack.c.l.b16 %v1972
    %v2108 = vunpack.c.l.b16 %v1973
    %v2109 = vunpack.c.l.b16 %v1974
    %v2110 = vunpack.c.l.b16 %v1975
    %v2111 = vunpack.c.l.b16 %v1976
    %v2112 = vunpack.c.l.b16 %v1977
    %v2113 = vunpack.c.l.b16 %v1978
    %v2114 = vunpack.c.l.b16 %v1979
    %v2115 = vunpack.c.l.b16 %v1980
    %v2116 = vunpack.c.l.b16 %v1981
    %v2117 = vunpack.c.l.b16 %v1982
    %v2118 = vunpack.c.l.b16 %v1983
    %v2119 = vunpack.c.l.b16 %v1984
    %v2120 = vunpack.c.l.b16 %v1985
    %v2121 = vunpack.c.l.b16 %v1986
    %v2122 = vunpack.c.l.b16 %v1987
    %v2123 = vunpack.c.l.b16 %v1988
    %v2124 = vunpack.c.l.b16 %v1989
    %v2125 = vunpack.c.l.b16 %v1990
    %v2126 = vunpack.c.l.b16 %v1991
    %v2127 = vunpack.c.l.b16 %v1992
    %v2128 = vunpack.c.l.b16 %v1993
    %v2129 = vunpack.c.l.b16 %v1994
    %v2130 = vunpack.c.l.b16 %v1995
    %v2131 = vunpack.c.l.b16 %v1996
    %v2132 = vunpack.c.l.b16 %v1997
    %v2133 = vunpack.c.l.b16 %v1998
    %v2134 = vunpack.c.l.b16 %v1999
    %v2135 = vunpack.c.l.b16 %v2000
    %v2136 = vunpack.c.l.b16 %v2001
    %v2137 = vunpack.c.l.b16 %v2002
    %v2138 = vunpack.c.l.b16 %v2003
    %v2139 = vunpack.c.l.b16 %v2004
    %v2140 = vunpack.c.l.b16 %v2005
    %v2141 = vunpack.c.l.b16 %v2006
    %v2142 = vunpack.c.l.b16 %v2007
    %v2143 = vunpack.c.l.b16 %v2008
    %v2144 = vunpack.c.l.b16 %v2009
    %v2145 = vunpack.c.l.b16 %v2010
    %v2146 = vunpack.c.l.b16 %v2011
    %v2147 = vunpack.c.l.b16 %v2012
    %v2148 = vunpack.c.l.b16 %v2013
    %v2149 = vunpack.c.l.b16 %v2014
    %v2150 = vunpack.c.l.b16 %v2015
    %v2151 = vunpack.c.l.b16 %v2016
    %v2152 = vunpack.c.l.b16 %v2017
    %v2153 = vunpack.c.l.b16 %v2018
    %v2154 = vunpack.c.l.b16 %v2019
    %v2155 = vunpack.c.l.b16 %v2020
    %v2156 = vpack.c.b16 %v2093, %v2092
    %v2157 = vpack.c.b16 %v2095, %v2094
    %v2158 = vpack.c.b16 %v2097, %v2096
    %v2159 = vpack.c.b16 %v2099, %v2098
    %v2160 = vpack.c.b16 %v2101, %v2100
    %v2161 = vpack.c.b16 %v2103, %v2102
    %v2162 = vpack.c.b16 %v2105, %v2104
    %v2163 = vpack.c.b16 %v2107, %v2106
    %v2164 = vpack.c.b16 %v2109, %v2108
    %v2165 = vpack.c.b16 %v2111, %v2110
    %v2166 = vpack.c.b16 %v2113, %v2112
    %v2167 = vpack.c.b16 %v2115, %v2114
    %v2168 = vpack.c.b16 %v2117, %v2116
    %v2169 = vpack.c.b16 %v2119, %v2118
    %v2170 = vpack.c.b16 %v2121, %v2120
    %v2171 = vpack.c.b16 %v2123, %v2122
    %v2172 = vpack.c.b16 %v2125, %v2124
    %v2173 = vpack.c.b16 %v2127, %v2126
    %v2174 = vpack.c.b16 %v2129, %v2128
    %v2175 = vpack.c.b16 %v2131, %v2130
    %v2176 = vpack.c.b16 %v2133, %v2132
    %v2177 = vpack.c.b16 %v2135, %v2134
    %v2178 = vpack.c.b16 %v2137, %v2136
    %v2179 = vpack.c.b16 %v2139, %v2138
    %v2180 = vpack.c.b16 %v2141, %v2140
    %v2181 = vpack.c.b16 %v2143, %v2142
    %v2182 = vpack.c.b16 %v2145, %v2144
    %v2183 = vpack.c.b16 %v2147, %v2146
    %v2184 = vpack.c.b16 %v2149, %v2148
    %v2185 = vpack.c.b16 %v2151, %v2150
    %v2186 = vpack.c.b16 %v2153, %v2152
    %v2187 = vpack.c.b16 %v2155, %v2154
    %2220 = vmatprep.subr.bf16.mxu0 0
    %2221 = vmatpush1.bf16.msra.mxu0 %v2156
    %2222 = vmatprep.subr.bf16.mxu0 0
    %2223 = vmatpush1.bf16.msra.mxu0 %v2157
    %2224 = vmatprep.subr.bf16.mxu0 0
    %2225 = vmatpush1.bf16.msra.mxu0 %v2158
    %2226 = vmatprep.subr.bf16.mxu0 0
    %2227 = vmatpush1.bf16.msra.mxu0 %v2159
    %2228 = vmatprep.subr.bf16.mxu0 0
    %2229 = vmatpush1.bf16.msra.mxu0 %v2160
    %2230 = vmatprep.subr.bf16.mxu0 0
    %2231 = vmatpush1.bf16.msra.mxu0 %v2161
    %2232 = vmatprep.subr.bf16.mxu0 0
    %2233 = vmatpush1.bf16.msra.mxu0 %v2162
    %2234 = vmatprep.subr.bf16.mxu0 0
    %2235 = vmatpush1.bf16.msra.mxu0 %v2163
    %2236 = vmatprep.subr.bf16.mxu0 0
    %2237 = vmatpush1.bf16.msra.mxu0 %v2164
    %2238 = vmatprep.subr.bf16.mxu0 0
    %2239 = vmatpush1.bf16.msra.mxu0 %v2165
    %2240 = vmatprep.subr.bf16.mxu0 0
    %2241 = vmatpush1.bf16.msra.mxu0 %v2166
    %2242 = vmatprep.subr.bf16.mxu0 0
    %2243 = vmatpush1.bf16.msra.mxu0 %v2167
    %2244 = vmatprep.subr.bf16.mxu0 0
    %2245 = vmatpush1.bf16.msra.mxu0 %v2168
    %2246 = vmatprep.subr.bf16.mxu0 0
    %2247 = vmatpush1.bf16.msra.mxu0 %v2169
    %2248 = vmatprep.subr.bf16.mxu0 0
    %2249 = vmatpush1.bf16.msra.mxu0 %v2170
    %2250 = vmatprep.subr.bf16.mxu0 0
    %2251 = vmatpush1.bf16.msra.mxu0 %v2171
    %2252 = vmatprep.mubr.bf16.mxu0 %v1954
    %2253 = vmatmul.mubr.bf16.gmra.mrb[0].mxu0 %v1953
    %v2254 = vpop.f32.mrb[0].mxu0
    %v2255 = vadd.f32 %v2026, %v2254
    %v2256 = vpop.f32.mrb[0].mxu0
    %v2257 = vpop.f32.mrb[0].mxu0
    %v2258 = vadd.f32 %v2026, %v2257
    %v2259 = vpop.f32.mrb[0].mxu0
    %2260 = vdwg.mxu0
    %2261 = vmatprep.subr.bf16.mxu0 0
    %2262 = vmatpush1.bf16.msra.mxu0 %v2172
    %2263 = vmatprep.subr.bf16.mxu0 0
    %2264 = vmatpush1.bf16.msra.mxu0 %v2173
    %2265 = vmatprep.subr.bf16.mxu0 0
    %2266 = vmatpush1.bf16.msra.mxu0 %v2174
    %2267 = vmatprep.subr.bf16.mxu0 0
    %2268 = vmatpush1.bf16.msra.mxu0 %v2175
    %2269 = vmatprep.subr.bf16.mxu0 0
    %2270 = vmatpush1.bf16.msra.mxu0 %v2176
    %2271 = vmatprep.subr.bf16.mxu0 0
    %2272 = vmatpush1.bf16.msra.mxu0 %v2177
    %2273 = vmatprep.subr.bf16.mxu0 0
    %2274 = vmatpush1.bf16.msra.mxu0 %v2178
    %2275 = vmatprep.subr.bf16.mxu0 0
    %2276 = vmatpush1.bf16.msra.mxu0 %v2179
    %2277 = vmatprep.subr.bf16.mxu0 0
    %2278 = vmatpush1.bf16.msra.mxu0 %v2180
    %2279 = vmatprep.subr.bf16.mxu0 0
    %2280 = vmatpush1.bf16.msra.mxu0 %v2181
    %2281 = vmatprep.subr.bf16.mxu0 0
    %2282 = vmatpush1.bf16.msra.mxu0 %v2182
    %2283 = vmatprep.subr.bf16.mxu0 0
    %2284 = vmatpush1.bf16.msra.mxu0 %v2183
    %2285 = vmatprep.subr.bf16.mxu0 0
    %2286 = vmatpush1.bf16.msra.mxu0 %v2184
    %2287 = vmatprep.subr.bf16.mxu0 0
    %2288 = vmatpush1.bf16.msra.mxu0 %v2185
    %2289 = vmatprep.subr.bf16.mxu0 0
    %2290 = vmatpush1.bf16.msra.mxu0 %v2186
    %2291 = vmatprep.subr.bf16.mxu0 0
    %2292 = vmatpush1.bf16.msra.mxu0 %v2187
    %2293 = vmatprep.mubr.bf16.mxu0 %v1956
    %2294 = vmatmul.mubr.bf16.gmra.mrb[0].mxu0 %v1955
    %v2295 = vpop.f32.mrb[0].mxu0
    %v2296 = vadd.f32 %v2255, %v2295
    %v2297 = vpop.f32.mrb[0].mxu0
    %v2298 = vpop.f32.mrb[0].mxu0
    %v2299 = vadd.f32 %v2258, %v2298
    %v2300 = vpop.f32.mrb[0].mxu0
    %2301 = vdwg.mxu0
    %v2302 = vpack.c.bf16 %v2299, %v2296
    %v2304 = vunpack.c.l.b16 %v2302
    %v2305 = vunpack.c.h.b16 %v2302
    %v2306 = vpack.c.b16 %v2304, %v2304
    %v2307 = vpack.c.b16 %v2305, %v2305
    %2310 = vst [vmem:[#allocation14] sm:$0xf] %v2306
    %2311 = vst [vmem:[#allocation14 + $0x4] sm:$0xf] %v2307
    // Predicated region
    $region82: #{tpu_custom_call.1} parent=1 // pred_check
      _
    $region83: #{tpu_custom_call.1} parent=1 // pred_check_branch
      %2313 = sbr.rel (0) target = $region85
    $region84: #{tpu_custom_call.1} parent=1 // pred_region
      %s2315 = ssub.s32 128, 128
      %2316 = vsyncadd [#allocation4], %s2315
      %s2317 = sshll.u32 [#allocation14], 4
      %s2318 = int_to_ptr.vmem [resolvable:$true] %s2317
      %2323 = dma.vmem_to_hbm [thread:$0]  %s2318, 128, %s13, [#allocation4], 64, 64, 4
    $region85: #{tpu_custom_call.1} parent=1 // pred_fallthru
      _
    // Predicated region
    $region86: #{tpu_custom_call.1} parent=1 // pred_check
      _
    $region87: #{tpu_custom_call.1} parent=1 // pred_check_branch
      %2325 = sbr.rel (0) target = $region89
    $region88: #{tpu_custom_call.1} parent=1 // pred_region
      %2326 = dma.done [#allocation4], 128
    $region89: #{tpu_custom_call.1} parent=1 // pred_fallthru
      _
    %2327 = vsyncpa [#allocation3], 1
    %2328 = vsyncpa [#allocation6], 1
    %2329 = vsyncpa [#allocation9], 1
    %2330 = vsyncpa [#allocation12], 1
    %2331 = vsyncpa [#allocation4], 1

// kernel: tpu_custom_call.1
$region0: #{tpu_custom_call.1}
  #allocation0 [shape = 'u32[]', space=smem, size = 0x4, offset = 0x4, fixed_abs, tag = 'smem constant byte address 0x4 - core index']
  #allocation1 [shape = 'u32[144,128]{1,0:T(1,128)}', space=vmem, size = 0x12000, scoped, tag = 'internal scratch']
  %s0 = inlined_call_operand.hbm [shape: bf16[16,16], index: 0, kind: input, shape index: {}]
  %s1 = inlined_call_operand.hbm [shape: bf16[16,64], index: 1, kind: input, shape index: {}]
  %s2 = inlined_call_operand.vmem [shape: f32[1,64], index: 2, kind: input, shape index: {}]
  %s3 = inlined_call_operand.hbm [shape: bf16[64,128], index: 3, kind: input, shape index: {}]
  %s4 = inlined_call_operand.vmem [shape: f32[1,128], index: 4, kind: input, shape index: {}]
  %s5 = inlined_call_operand.hbm [shape: bf16[128,256], index: 5, kind: input, shape index: {}]
  %s6 = inlined_call_operand.vmem [shape: f32[1,256], index: 6, kind: input, shape index: {}]
  %s7 = inlined_call_operand.hbm [shape: bf16[256,512], index: 7, kind: input, shape index: {}]
  %s8 = inlined_call_operand.vmem [shape: f32[1,512], index: 8, kind: input, shape index: {}]
  %s9 = inlined_call_operand.hbm [shape: bf16[512,512], index: 9, kind: input, shape index: {}]
  %s10 = inlined_call_operand.vmem [shape: f32[1,512], index: 10, kind: input, shape index: {}]
  %s11 = inlined_call_operand.hbm [shape: bf16[512,128], index: 11, kind: input, shape index: {}]
  %s12 = inlined_call_operand.vmem [shape: f32[1,128], index: 12, kind: input, shape index: {}]
  %s13 = inlined_call_operand.hbm [shape: bf16[16,128], index: 13, kind: output, shape index: {}]
  %s14 = sld [smem:[#allocation0]]
  $region90: #{tpu_custom_call.1} parent=0
    _
  %s16 = ssub.s32 1, %s14
  %s17 = scalar_select 0, %s16, %s14
  $region1: #{tpu_custom_call.1} parent=0
    #allocation2 [shape = 'u8[4096]{0}', space=vmem, size = 0x1000, scoped, tag = 'input window, operand 0, single buffered']
    #allocation3 [shape = 's32[1]{0}', space=sflag, size = 0x4, scoped, tag = 'scoped memory for tpu_custom_call.1']
    #allocation4 [shape = 's32[1]{0}', space=sflag, size = 0x4, scoped, tag = 'scoped memory for tpu_custom_call.1']
    #allocation5 [shape = 'u8[4096]{0}', space=vmem, size = 0x1000, scoped, tag = 'input window, operand 1, single buffered']
    #allocation6 [shape = 's32[1]{0}', space=sflag, size = 0x4, scoped, tag = 'scoped memory for tpu_custom_call.1']
    #allocation7 [shape = 'u8[16384]{0}', space=vmem, size = 0x4000, scoped, tag = 'input window, operand 3, single buffered']
    #allocation8 [shape = 'u8[65536]{0}', space=vmem, size = 0x10000, scoped, tag = 'input window, operand 5, single buffered']
    #allocation9 [shape = 's32[1]{0}', space=sflag, size = 0x4, scoped, tag = 'scoped memory for tpu_custom_call.1']
    #allocation10 [shape = 'u8[262144]{0}', space=vmem, size = 0x40000, scoped, tag = 'input window, operand 7, single buffered']
    #allocation11 [shape = 'u8[524288]{0}', space=vmem, size = 0x80000, scoped, tag = 'input window, operand 9, single buffered']
    #allocation12 [shape = 's32[1]{0}', space=sflag, size = 0x4, scoped, tag = 'scoped memory for tpu_custom_call.1']
    #allocation13 [shape = 'u8[131072]{0}', space=vmem, size = 0x20000, scoped, tag = 'input window, operand 11, single buffered']
    #allocation14 [shape = 'u8[4096]{0}', space=vmem, size = 0x1000, scoped, tag = 'output window, operand 0, single buffered']
    %18 = vsyncpa [#allocation3], 0
    %19 = vsyncpa [#allocation6], 0
    %20 = vsyncpa [#allocation9], 0
    %21 = vsyncpa [#allocation12], 0
    %22 = vsyncpa [#allocation4], 0
    // Predicated region
    $region2: #{tpu_custom_call.1} parent=1 // pred_check
      _
    $region3: #{tpu_custom_call.1} parent=1 // pred_check_branch
      %24 = sbr.rel (0) target = $region5
    $region4: #{tpu_custom_call.1} parent=1 // pred_region
      %s26 = ssub.s32 128, 128
      %27 = vsyncadd [#allocation3], %s26
      %s28 = sshll.u32 [#allocation2], 4
      %s29 = int_to_ptr.vmem [resolvable:$true] %s28
      %34 = dma.hbm_to_vmem [thread:$0]  %s0, 128, %s29, [#allocation3], 64, 64, 4
    $region5: #{tpu_custom_call.1} parent=1 // pred_fallthru
      _
    // Predicated region
    $region6: #{tpu_custom_call.1} parent=1 // pred_check
      _
    $region7: #{tpu_custom_call.1} parent=1 // pred_check_branch
      %36 = sbr.rel (0) target = $region9
    $region8: #{tpu_custom_call.1} parent=1 // pred_region
      %s38 = ssub.s32 128, 128
      %39 = vsyncadd [#allocation6], %s38
      %s40 = sshll.u32 [#allocation5], 4
      %s41 = int_to_ptr.vmem [resolvable:$true] %s40
      %46 = dma.hbm_to_vmem [thread:$0]  %s1, 128, %s41, [#allocation6], 64, 64, 4
    $region9: #{tpu_custom_call.1} parent=1 // pred_fallthru
      _
    // Predicated region
    $region10: #{tpu_custom_call.1} parent=1 // pred_check
      _
    $region11: #{tpu_custom_call.1} parent=1 // pred_check_branch
      %48 = sbr.rel (0) target = $region13
    $region12: #{tpu_custom_call.1} parent=1 // pred_region
      _
    $region13: #{tpu_custom_call.1} parent=1 // pred_fallthru
      _
    // Predicated region
    $region14: #{tpu_custom_call.1} parent=1 // pred_check
      _
    $region15: #{tpu_custom_call.1} parent=1 // pred_check_branch
      %50 = sbr.rel (0) target = $region17
    $region16: #{tpu_custom_call.1} parent=1 // pred_region
      %s52 = ssub.s32 512, 512
      %53 = vsyncadd [#allocation6], %s52
      %s54 = sshll.u32 [#allocation7], 4
      %s55 = int_to_ptr.vmem [resolvable:$true] %s54
      %60 = dma.hbm_to_vmem [thread:$0]  %s3, 512, %s55, [#allocation6], 64, 64, 4
    $region17: #{tpu_custom_call.1} parent=1 // pred_fallthru
      _
    // Predicated region
    $region18: #{tpu_custom_call.1} parent=1 // pred_check
      _
    $region19: #{tpu_custom_call.1} parent=1 // pred_check_branch
      %62 = sbr.rel (0) target = $region21
    $region20: #{tpu_custom_call.1} parent=1 // pred_region
      _
    $region21: #{tpu_custom_call.1} parent=1 // pred_fallthru
      _
    // Predicated region
    $region22: #{tpu_custom_call.1} parent=1 // pred_check
      _
    $region23: #{tpu_custom_call.1} parent=1 // pred_check_branch
      %64 = sbr.rel (0) target = $region25
    $region24: #{tpu_custom_call.1} parent=1 // pred_region
      %s66 = ssub.s32 2048, 2048
      %67 = vsyncadd [#allocation9], %s66
      %s68 = sshll.u32 [#allocation8], 4
      %s69 = int_to_ptr.vmem [resolvable:$true] %s68
      %74 = dma.hbm_to_vmem [thread:$0]  %s5, 2048, %s69, [#allocation9], 128, 128, 8
    $region25: #{tpu_custom_call.1} parent=1 // pred_fallthru
      _
    // Predicated region
    $region26: #{tpu_custom_call.1} parent=1 // pred_check
      _
    $region27: #{tpu_custom_call.1} parent=1 // pred_check_branch
      %76 = sbr.rel (0) target = $region29
    $region28: #{tpu_custom_call.1} parent=1 // pred_region
      _
    $region29: #{tpu_custom_call.1} parent=1 // pred_fallthru
      _
    // Predicated region
    $region30: #{tpu_custom_call.1} parent=1 // pred_check
      _
    $region31: #{tpu_custom_call.1} parent=1 // pred_check_branch
      %78 = sbr.rel (0) target = $region33
    $region32: #{tpu_custom_call.1} parent=1 // pred_region
      %s80 = ssub.s32 8192, 8192
      %81 = vsyncadd [#allocation9], %s80
      %s82 = sshll.u32 [#allocation10], 4
      %s83 = int_to_ptr.vmem [resolvable:$true] %s82
      %88 = dma.hbm_to_vmem [thread:$0]  %s7, 8192, %s83, [#allocation9], 256, 256, 16
    $region33: #{tpu_custom_call.1} parent=1 // pred_fallthru
      _
    // Predicated region
    $region34: #{tpu_custom_call.1} parent=1 // pred_check
      _
    $region35: #{tpu_custom_call.1} parent=1 // pred_check_branch
      %90 = sbr.rel (0) target = $region37
    $region36: #{tpu_custom_call.1} parent=1 // pred_region
      _
    $region37: #{tpu_custom_call.1} parent=1 // pred_fallthru
      _
    // Predicated region
    $region38: #{tpu_custom_call.1} parent=1 // pred_check
      _
    $region39: #{tpu_custom_call.1} parent=1 // pred_check_branch
      %92 = sbr.rel (0) target = $region41
    $region40: #{tpu_custom_call.1} parent=1 // pred_region
      %s94 = ssub.s32 16384, 16384
      %95 = vsyncadd [#allocation12], %s94
      %s96 = sshll.u32 [#allocation11], 4
      %s97 = int_to_ptr.vmem [resolvable:$true] %s96
      %102 = dma.hbm_to_vmem [thread:$0]  %s9, 16384, %s97, [#allocation12], 256, 256, 16
    $region41: #{tpu_custom_call.1} parent=1 // pred_fallthru
      _
    // Predicated region
    $region42: #{tpu_custom_call.1} parent=1 // pred_check
      _
    $region43: #{tpu_custom_call.1} parent=1 // pred_check_branch
      %104 = sbr.rel (0) target = $region45
    $region44: #{tpu_custom_call.1} parent=1 // pred_region
      _
    $region45: #{tpu_custom_call.1} parent=1 // pred_fallthru
      _
    // Predicated region
    $region46: #{tpu_custom_call.1} parent=1 // pred_check
      _
    $region47: #{tpu_custom_call.1} parent=1 // pred_check_branch
      %106 = sbr.rel (0) target = $region49
    $region48: #{tpu_custom_call.1} parent=1 // pred_region
      %s108 = ssub.s32 4096, 4096
      %109 = vsyncadd [#allocation12], %s108
      %s110 = sshll.u32 [#allocation13], 4
      %s111 = int_to_ptr.vmem [resolvable:$true] %s110
      %116 = dma.hbm_to_vmem [thread:$0]  %s11, 4096, %s111, [#allocation12], 64, 64, 4
    $region49: #{tpu_custom_call.1} parent=1 // pred_fallthru
      _
    // Predicated region
    $region50: #{tpu_custom_call.1} parent=1 // pred_check
      _
    $region51: #{tpu_custom_call.1} parent=1 // pred_check_branch
      %118 = sbr.rel (0) target = $region53
    $region52: #{tpu_custom_call.1} parent=1 // pred_region
      _
    $region53: #{tpu_custom_call.1} parent=1 // pred_fallthru
      _
    // Predicated region
    $region54: #{tpu_custom_call.1} parent=1 // pred_check
      _
    $region55: #{tpu_custom_call.1} parent=1 // pred_check_branch
      %120 = sbr.rel (0) target = $region57
    $region56: #{tpu_custom_call.1} parent=1 // pred_region
      %121 = dma.done [#allocation3], 128
    $region57: #{tpu_custom_call.1} parent=1 // pred_fallthru
      _
    // Predicated region
    $region58: #{tpu_custom_call.1} parent=1 // pred_check
      _
    $region59: #{tpu_custom_call.1} parent=1 // pred_check_branch
      %123 = sbr.rel (0) target = $region61
    $region60: #{tpu_custom_call.1} parent=1 // pred_region
      %124 = dma.done [#allocation6], 128
    $region61: #{tpu_custom_call.1} parent=1 // pred_fallthru
      _
    // Predicated region
    $region62: #{tpu_custom_call.1} parent=1 // pred_check
      _
    $region63: #{tpu_custom_call.1} parent=1 // pred_check_branch
      %126 = sbr.rel (0) target = $region65
    $region64: #{tpu_custom_call.1} parent=1 // pred_region
      %127 = dma.done [#allocation6], 512
    $region65: #{tpu_custom_call.1} parent=1 // pred_fallthru
      _
    // Predicated region
    $region66: #{tpu_custom_call.1} parent=1 // pred_check
      _
    $region67: #{tpu_custom_call.1} parent=1 // pred_check_branch
      %129 = sbr.rel (0) target = $region69
    $region68: #{tpu_custom_call.1} parent=1 // pred_region
      %130 = dma.done [#allocation9], 2048
    $region69: #{tpu_custom_call.1} parent=1 // pred_fallthru
      _
    // Predicated region
    $region70: #{tpu_custom_call.1} parent=1 // pred_check
      _
    $region71: #{tpu_custom_call.1} parent=1 // pred_check_branch
      %132 = sbr.rel (0) target = $region73
    $region72: #{tpu_custom_call.1} parent=1 // pred_region
      %133 = dma.done [#allocation9], 8192
    $region73: #{tpu_custom_call.1} parent=1 // pred_fallthru
      _
    // Predicated region
    $region74: #{tpu_custom_call.1} parent=1 // pred_check
      _
    $region75: #{tpu_custom_call.1} parent=1 // pred_check_branch
      %135 = sbr.rel (0) target = $region77
    $region76: #{tpu_custom_call.1} parent=1 // pred_region
      %136 = dma.done [#allocation12], 16384
    $region77: #{tpu_custom_call.1} parent=1 // pred_fallthru
      _
    // Predicated region
    $region78: #{tpu_custom_call.1} parent=1 // pred_check
      _
    $region79: #{tpu_custom_call.1} parent=1 // pred_check_branch
      %138 = sbr.rel (0) target = $region81
    $region80: #{tpu_custom_call.1} parent=1 // pred_region
      %139 = dma.done [#allocation12], 4096
    $region81: #{tpu_custom_call.1} parent=1 // pred_fallthru
      _
    %v141 = vld [vmem:[#allocation2] sm:$0xf]
    %v142 = vld [vmem:[#allocation2 + $0x4] sm:$0xf]
    %v143 = vld [vmem:[#allocation5] sm:$0xf]
    %v144 = vld [vmem:[#allocation5 + $0x4] sm:$0xf]
    %v145 = vld [vmem:[%s2] sm:$0x1]
    %v147 = vlaneseq
    %v148 = vshrl.u32 %v147, 7
    %v149 = vsub.s32 0, %v148
    %v150 = vrot.slane %v145, %v149
    %v154 = vunpack.c.l.b16 %v141
    %v155 = vunpack.c.l.b16 %v142
    %v156 = vpack.c.b16 %v155, %v154
    %v159 = vunpack.c.l.b16 %v143
    %v160 = vunpack.c.l.b16 %v144
    %v161 = vpack.c.b16 %v160, %v159
    %vm163 = vcmask 130048
    %v165 = vsel %vm163, %v156, 0
    %167 = vmatprep.subr.bf16.mxu0 0
    %168 = vmatpush1.bf16.msra.mxu0 %v161
    %169 = vmatprep.subr.bf16.mxu0 0
    %170 = vmatpush1.bf16.msra.mxu0 0
    %171 = vmatprep.subr.bf16.mxu0 0
    %172 = vmatpush1.bf16.msra.mxu0 0
    %173 = vmatprep.subr.bf16.mxu0 0
    %174 = vmatpush1.bf16.msra.mxu0 0
    %175 = vmatprep.subr.bf16.mxu0 0
    %176 = vmatpush1.bf16.msra.mxu0 0
    %177 = vmatprep.subr.bf16.mxu0 0
    %178 = vmatpush1.bf16.msra.mxu0 0
    %179 = vmatprep.subr.bf16.mxu0 0
    %180 = vmatpush1.bf16.msra.mxu0 0
    %181 = vmatprep.subr.bf16.mxu0 0
    %182 = vmatpush1.bf16.msra.mxu0 0
    %183 = vmatprep.subr.bf16.mxu0 0
    %184 = vmatpush1.bf16.msra.mxu0 0
    %185 = vmatprep.subr.bf16.mxu0 0
    %186 = vmatpush1.bf16.msra.mxu0 0
    %187 = vmatprep.subr.bf16.mxu0 0
    %188 = vmatpush1.bf16.msra.mxu0 0
    %189 = vmatprep.subr.bf16.mxu0 0
    %190 = vmatpush1.bf16.msra.mxu0 0
    %191 = vmatprep.subr.bf16.mxu0 0
    %192 = vmatpush1.bf16.msra.mxu0 0
    %193 = vmatprep.subr.bf16.mxu0 0
    %194 = vmatpush1.bf16.msra.mxu0 0
    %195 = vmatprep.subr.bf16.mxu0 0
    %196 = vmatpush1.bf16.msra.mxu0 0
    %197 = vmatprep.subr.bf16.mxu0 0
    %198 = vmatpush1.bf16.msra.mxu0 0
    %199 = vmatprep.mubr.bf16.mxu0 0
    %200 = vmatmul.mubr.bf16.gmra.mrb[0].mxu0 %v165
    %v201 = vpop.f32.mrb[0].mxu0
    %v202 = vadd.f32 %v150, %v201
    %v203 = vpop.f32.mrb[0].mxu0
    %v204 = vpop.f32.mrb[0].mxu0
    %v205 = vadd.f32 %v150, %v204
    %v206 = vpop.f32.mrb[0].mxu0
    %207 = vdwg.mxu0
    %v208 = vmax.f32 %v202, 0.0
    %v209 = vmax.f32 %v205, 0.0
    %v210 = vmin.f32 %v208, 6.0
    %v211 = vmin.f32 %v209, 6.0
    %v212 = vpack.c.bf16 %v211, %v210
    %v213 = vld [vmem:[#allocation7] sm:$0xf]
    %v214 = vld [vmem:[#allocation7 + $0x4] sm:$0xf]
    %v215 = vld [vmem:[#allocation7 + $0x8] sm:$0xf]
    %v216 = vld [vmem:[#allocation7 + $0xc] sm:$0xf]
    %v217 = vld [vmem:[#allocation7 + $0x10] sm:$0xf]
    %v218 = vld [vmem:[#allocation7 + $0x14] sm:$0xf]
    %v219 = vld [vmem:[#allocation7 + $0x18] sm:$0xf]
    %v220 = vld [vmem:[#allocation7 + $0x1c] sm:$0xf]
    %v221 = vld [vmem:[%s4] sm:$0x1]
    %v223 = vlaneseq
    %v224 = vshrl.u32 %v223, 7
    %v225 = vsub.s32 0, %v224
    %v226 = vrot.slane %v221, %v225
    %v236 = vunpack.c.l.b16 %v213
    %v237 = vunpack.c.l.b16 %v214
    %v238 = vunpack.c.l.b16 %v215
    %v239 = vunpack.c.l.b16 %v216
    %v240 = vunpack.c.l.b16 %v217
    %v241 = vunpack.c.l.b16 %v218
    %v242 = vunpack.c.l.b16 %v219
    %v243 = vunpack.c.l.b16 %v220
    %v244 = vpack.c.b16 %v237, %v236
    %v245 = vpack.c.b16 %v239, %v238
    %v246 = vpack.c.b16 %v241, %v240
    %v247 = vpack.c.b16 %v243, %v242
    %vm252 = vcmask 523264
    %v254 = vsel %vm252, %v212, 0
    %256 = vmatprep.subr.bf16.mxu0 0
    %257 = vmatpush1.bf16.msra.mxu0 %v244
    %258 = vmatprep.subr.bf16.mxu0 0
    %259 = vmatpush1.bf16.msra.mxu0 %v245
    %260 = vmatprep.subr.bf16.mxu0 0
    %261 = vmatpush1.bf16.msra.mxu0 %v246
    %262 = vmatprep.subr.bf16.mxu0 0
    %263 = vmatpush1.bf16.msra.mxu0 %v247
    %264 = vmatprep.subr.bf16.mxu0 0
    %265 = vmatpush1.bf16.msra.mxu0 0
    %266 = vmatprep.subr.bf16.mxu0 0
    %267 = vmatpush1.bf16.msra.mxu0 0
    %268 = vmatprep.subr.bf16.mxu0 0
    %269 = vmatpush1.bf16.msra.mxu0 0
    %270 = vmatprep.subr.bf16.mxu0 0
    %271 = vmatpush1.bf16.msra.mxu0 0
    %272 = vmatprep.subr.bf16.mxu0 0
    %273 = vmatpush1.bf16.msra.mxu0 0
    %274 = vmatprep.subr.bf16.mxu0 0
    %275 = vmatpush1.bf16.msra.mxu0 0
    %276 = vmatprep.subr.bf16.mxu0 0
    %277 = vmatpush1.bf16.msra.mxu0 0
    %278 = vmatprep.subr.bf16.mxu0 0
    %279 = vmatpush1.bf16.msra.mxu0 0
    %280 = vmatprep.subr.bf16.mxu0 0
    %281 = vmatpush1.bf16.msra.mxu0 0
    %282 = vmatprep.subr.bf16.mxu0 0
    %283 = vmatpush1.bf16.msra.mxu0 0
    %284 = vmatprep.subr.bf16.mxu0 0
    %285 = vmatpush1.bf16.msra.mxu0 0
    %286 = vmatprep.subr.bf16.mxu0 0
    %287 = vmatpush1.bf16.msra.mxu0 0
    %288 = vmatprep.mubr.bf16.mxu0 0
    %289 = vmatmul.mubr.bf16.gmra.mrb[0].mxu0 %v254
    %v290 = vpop.f32.mrb[0].mxu0
    %v291 = vadd.f32 %v226, %v290
    %v292 = vpop.f32.mrb[0].mxu0
    %v293 = vpop.f32.mrb[0].mxu0
    %v294 = vadd.f32 %v226, %v293
    %v295 = vpop.f32.mrb[0].mxu0
    %296 = vdwg.mxu0
    %v297 = vmax.f32 %v291, 0.0
    %v298 = vmax.f32 %v294, 0.0
    %v299 = vmin.f32 %v297, 6.0
    %v300 = vmin.f32 %v298, 6.0
    %v301 = vpack.c.bf16 %v300, %v299
    %v302 = vld [vmem:[#allocation8] sm:$0xff]
    %v303 = vld [vmem:[#allocation8 + $0x8] sm:$0xff]
    %v304 = vld [vmem:[#allocation8 + $0x10] sm:$0xff]
    %v305 = vld [vmem:[#allocation8 + $0x18] sm:$0xff]
    %v306 = vld [vmem:[#allocation8 + $0x20] sm:$0xff]
    %v307 = vld [vmem:[#allocation8 + $0x28] sm:$0xff]
    %v308 = vld [vmem:[#allocation8 + $0x30] sm:$0xff]
    %v309 = vld [vmem:[#allocation8 + $0x38] sm:$0xff]
    %v310 = vld [vmem:[#allocation8 + $0x40] sm:$0xff]
    %v311 = vld [vmem:[#allocation8 + $0x48] sm:$0xff]
    %v312 = vld [vmem:[#allocation8 + $0x50] sm:$0xff]
    %v313 = vld [vmem:[#allocation8 + $0x58] sm:$0xff]
    %v314 = vld [vmem:[#allocation8 + $0x60] sm:$0xff]
    %v315 = vld [vmem:[#allocation8 + $0x68] sm:$0xff]
    %v316 = vld [vmem:[#allocation8 + $0x70] sm:$0xff]
    %v317 = vld [vmem:[#allocation8 + $0x78] sm:$0xff]
    %v318 = vld [vmem:[%s6] sm:$0x3]
    %v320 = vlaneseq
    %v321 = vshrl.u32 %v320, 7
    %v322 = vsub.s32 0, %v321
    %v323 = vrot.slane %v318, %v322
    %v324 = vlaneseq
    %v325 = vshrl.u32 %v324, 7
    %v326 = vsub.s32 1, %v325
    %v327 = vrot.slane %v318, %v326
    %v346 = vunpack.c.l.b16 %v302
    %v347 = vunpack.c.h.b16 %v302
    %v348 = vunpack.c.l.b16 %v303
    %v349 = vunpack.c.h.b16 %v303
    %v350 = vunpack.c.l.b16 %v304
    %v351 = vunpack.c.h.b16 %v304
    %v352 = vunpack.c.l.b16 %v305
    %v353 = vunpack.c.h.b16 %v305
    %v354 = vunpack.c.l.b16 %v306
    %v355 = vunpack.c.h.b16 %v306
    %v356 = vunpack.c.l.b16 %v307
    %v357 = vunpack.c.h.b16 %v307
    %v358 = vunpack.c.l.b16 %v308
    %v359 = vunpack.c.h.b16 %v308
    %v360 = vunpack.c.l.b16 %v309
    %v361 = vunpack.c.h.b16 %v309
    %v362 = vunpack.c.l.b16 %v310
    %v363 = vunpack.c.h.b16 %v310
    %v364 = vunpack.c.l.b16 %v311
    %v365 = vunpack.c.h.b16 %v311
    %v366 = vunpack.c.l.b16 %v312
    %v367 = vunpack.c.h.b16 %v312
    %v368 = vunpack.c.l.b16 %v313
    %v369 = vunpack.c.h.b16 %v313
    %v370 = vunpack.c.l.b16 %v314
    %v371 = vunpack.c.h.b16 %v314
    %v372 = vunpack.c.l.b16 %v315
    %v373 = vunpack.c.h.b16 %v315
    %v374 = vunpack.c.l.b16 %v316
    %v375 = vunpack.c.h.b16 %v316
    %v376 = vunpack.c.l.b16 %v317
    %v377 = vunpack.c.h.b16 %v317
    %v378 = vpack.c.b16 %v348, %v346
    %v379 = vpack.c.b16 %v349, %v347
    %v380 = vpack.c.b16 %v352, %v350
    %v381 = vpack.c.b16 %v353, %v351
    %v382 = vpack.c.b16 %v356, %v354
    %v383 = vpack.c.b16 %v357, %v355
    %v384 = vpack.c.b16 %v360, %v358
    %v385 = vpack.c.b16 %v361, %v359
    %v386 = vpack.c.b16 %v364, %v362
    %v387 = vpack.c.b16 %v365, %v363
    %v388 = vpack.c.b16 %v368, %v366
    %v389 = vpack.c.b16 %v369, %v367
    %v390 = vpack.c.b16 %v372, %v370
    %v391 = vpack.c.b16 %v373, %v371
    %v392 = vpack.c.b16 %v376, %v374
    %v393 = vpack.c.b16 %v377, %v375
    %410 = vmatprep.subr.bf16.mxu0 %v379
    %411 = vmatpush1.bf16.msra.mxu0 %v378
    %412 = vmatprep.subr.bf16.mxu0 %v381
    %413 = vmatpush1.bf16.msra.mxu0 %v380
    %414 = vmatprep.subr.bf16.mxu0 %v383
    %415 = vmatpush1.bf16.msra.mxu0 %v382
    %416 = vmatprep.subr.bf16.mxu0 %v385
    %417 = vmatpush1.bf16.msra.mxu0 %v384
    %418 = vmatprep.subr.bf16.mxu0 %v387
    %419 = vmatpush1.bf16.msra.mxu0 %v386
    %420 = vmatprep.subr.bf16.mxu0 %v389
    %421 = vmatpush1.bf16.msra.mxu0 %v388
    %422 = vmatprep.subr.bf16.mxu0 %v391
    %423 = vmatpush1.bf16.msra.mxu0 %v390
    %424 = vmatprep.subr.bf16.mxu0 %v393
    %425 = vmatpush1.bf16.msra.mxu0 %v392
    %426 = vmatprep.subr.bf16.mxu0 0
    %427 = vmatpush1.bf16.msra.mxu0 0
    %428 = vmatprep.subr.bf16.mxu0 0
    %429 = vmatpush1.bf16.msra.mxu0 0
    %430 = vmatprep.subr.bf16.mxu0 0
    %431 = vmatpush1.bf16.msra.mxu0 0
    %432 = vmatprep.subr.bf16.mxu0 0
    %433 = vmatpush1.bf16.msra.mxu0 0
    %434 = vmatprep.subr.bf16.mxu0 0
    %435 = vmatpush1.bf16.msra.mxu0 0
    %436 = vmatprep.subr.bf16.mxu0 0
    %437 = vmatpush1.bf16.msra.mxu0 0
    %438 = vmatprep.subr.bf16.mxu0 0
    %439 = vmatpush1.bf16.msra.mxu0 0
    %440 = vmatprep.subr.bf16.mxu0 0
    %441 = vmatpush1.bf16.msra.mxu0 0
    %442 = vmatprep.mubr.bf16.mxu0 0
    %443 = vmatmul.mubr.bf16.gmra.mrb[0].mxu0 %v301
    %v444 = vpop.f32.mrb[0].mxu0
    %v445 = vadd.f32 %v323, %v444
    %v446 = vpop.f32.mrb[0].mxu0
    %v447 = vadd.f32 %v327, %v446
    %v448 = vpop.f32.mrb[0].mxu0
    %v449 = vadd.f32 %v323, %v448
    %v450 = vpop.f32.mrb[0].mxu0
    %v451 = vadd.f32 %v327, %v450
    %452 = vdwg.mxu0
    %v453 = vmax.f32 %v445, 0.0
    %v454 = vmax.f32 %v447, 0.0
    %v455 = vmax.f32 %v449, 0.0
    %v456 = vmax.f32 %v451, 0.0
    %v457 = vmin.f32 %v453, 6.0
    %v458 = vmin.f32 %v454, 6.0
    %v459 = vmin.f32 %v455, 6.0
    %v460 = vmin.f32 %v456, 6.0
    %v461 = vpack.c.bf16 %v459, %v457
    %v462 = vpack.c.bf16 %v460, %v458
    %v463 = vld [vmem:[#allocation10] sm:$0xff]
    %v464 = vld [vmem:[#allocation10 + $0x8] sm:$0xff]
    %v465 = vld [vmem:[#allocation10 + $0x10] sm:$0xff]
    %v466 = vld [vmem:[#allocation10 + $0x18] sm:$0xff]
    %v467 = vld [vmem:[#allocation10 + $0x20] sm:$0xff]
    %v468 = vld [vmem:[#allocation10 + $0x28] sm:$0xff]
    %v469 = vld [vmem:[#allocation10 + $0x30] sm:$0xff]
    %v470 = vld [vmem:[#allocation10 + $0x38] sm:$0xff]
    %v471 = vld [vmem:[#allocation10 + $0x40] sm:$0xff]
    %v472 = vld [vmem:[#allocation10 + $0x48] sm:$0xff]
    %v473 = vld [vmem:[#allocation10 + $0x50] sm:$0xff]
    %v474 = vld [vmem:[#allocation10 + $0x58] sm:$0xff]
    %v475 = vld [vmem:[#allocation10 + $0x60] sm:$0xff]
    %v476 = vld [vmem:[#allocation10 + $0x68] sm:$0xff]
    %v477 = vld [vmem:[#allocation10 + $0x70] sm:$0xff]
    %v478 = vld [vmem:[#allocation10 + $0x78] sm:$0xff]
    %v479 = vld [vmem:[#allocation10 + $0x80] sm:$0xff]
    %v480 = vld [vmem:[#allocation10 + $0x88] sm:$0xff]
    %v481 = vld [vmem:[#allocation10 + $0x90] sm:$0xff]
    %v482 = vld [vmem:[#allocation10 + $0x98] sm:$0xff]
    %v483 = vld [vmem:[#allocation10 + $0xa0] sm:$0xff]
    %v484 = vld [vmem:[#allocation10 + $0xa8] sm:$0xff]
    %v485 = vld [vmem:[#allocation10 + $0xb0] sm:$0xff]
    %v486 = vld [vmem:[#allocation10 + $0xb8] sm:$0xff]
    %v487 = vld [vmem:[#allocation10 + $0xc0] sm:$0xff]
    %v488 = vld [vmem:[#allocation10 + $0xc8] sm:$0xff]
    %v489 = vld [vmem:[#allocation10 + $0xd0] sm:$0xff]
    %v490 = vld [vmem:[#allocation10 + $0xd8] sm:$0xff]
    %v491 = vld [vmem:[#allocation10 + $0xe0] sm:$0xff]
    %v492 = vld [vmem:[#allocation10 + $0xe8] sm:$0xff]
    %v493 = vld [vmem:[#allocation10 + $0xf0] sm:$0xff]
    %v494 = vld [vmem:[#allocation10 + $0xf8] sm:$0xff]
    %v495 = vld [vmem:[#allocation10 + $0x100] sm:$0xff]
    %v496 = vld [vmem:[#allocation10 + $0x108] sm:$0xff]
    %v497 = vld [vmem:[#allocation10 + $0x110] sm:$0xff]
    %v498 = vld [vmem:[#allocation10 + $0x118] sm:$0xff]
    %v499 = vld [vmem:[#allocation10 + $0x120] sm:$0xff]
    %v500 = vld [vmem:[#allocation10 + $0x128] sm:$0xff]
    %v501 = vld [vmem:[#allocation10 + $0x130] sm:$0xff]
    %v502 = vld [vmem:[#allocation10 + $0x138] sm:$0xff]
    %v503 = vld [vmem:[#allocation10 + $0x140] sm:$0xff]
    %v504 = vld [vmem:[#allocation10 + $0x148] sm:$0xff]
    %v505 = vld [vmem:[#allocation10 + $0x150] sm:$0xff]
    %v506 = vld [vmem:[#allocation10 + $0x158] sm:$0xff]
    %v507 = vld [vmem:[#allocation10 + $0x160] sm:$0xff]
    %v508 = vld [vmem:[#allocation10 + $0x168] sm:$0xff]
    %v509 = vld [vmem:[#allocation10 + $0x170] sm:$0xff]
    %v510 = vld [vmem:[#allocation10 + $0x178] sm:$0xff]
    %v511 = vld [vmem:[#allocation10 + $0x180] sm:$0xff]
    %v512 = vld [vmem:[#allocation10 + $0x188] sm:$0xff]
    %v513 = vld [vmem:[#allocation10 + $0x190] sm:$0xff]
    %v514 = vld [vmem:[#allocation10 + $0x198] sm:$0xff]
    %v515 = vld [vmem:[#allocation10 + $0x1a0] sm:$0xff]
    %v516 = vld [vmem:[#allocation10 + $0x1a8] sm:$0xff]
    %v517 = vld [vmem:[#allocation10 + $0x1b0] sm:$0xff]
    %v518 = vld [vmem:[#allocation10 + $0x1b8] sm:$0xff]
    %v519 = vld [vmem:[#allocation10 + $0x1c0] sm:$0xff]
    %v520 = vld [vmem:[#allocation10 + $0x1c8] sm:$0xff]
    %v521 = vld [vmem:[#allocation10 + $0x1d0] sm:$0xff]
    %v522 = vld [vmem:[#allocation10 + $0x1d8] sm:$0xff]
    %v523 = vld [vmem:[#allocation10 + $0x1e0] sm:$0xff]
    %v524 = vld [vmem:[#allocation10 + $0x1e8] sm:$0xff]
    %v525 = vld [vmem:[#allocation10 + $0x1f0] sm:$0xff]
    %v526 = vld [vmem:[#allocation10 + $0x1f8] sm:$0xff]
    %v527 = vld [vmem:[%s8] sm:$0xf]
    %v529 = vlaneseq
    %v530 = vshrl.u32 %v529, 7
    %v531 = vsub.s32 0, %v530
    %v532 = vrot.slane %v527, %v531
    %v533 = vlaneseq
    %v534 = vshrl.u32 %v533, 7
    %v535 = vsub.s32 1, %v534
    %v536 = vrot.slane %v527, %v535
    %v537 = vlaneseq
    %v538 = vshrl.u32 %v537, 7
    %v539 = vsub.s32 2, %v538
    %v540 = vrot.slane %v527, %v539
    %v541 = vlaneseq
    %v542 = vshrl.u32 %v541, 7
    %v543 = vsub.s32 3, %v542
    %v544 = vrot.slane %v527, %v543
    %v613 = vunpack.c.l.b16 %v463
    %v614 = vunpack.c.h.b16 %v463
    %v615 = vunpack.c.l.b16 %v464
    %v616 = vunpack.c.h.b16 %v464
    %v617 = vunpack.c.l.b16 %v465
    %v618 = vunpack.c.h.b16 %v465
    %v619 = vunpack.c.l.b16 %v466
    %v620 = vunpack.c.h.b16 %v466
    %v621 = vunpack.c.l.b16 %v467
    %v622 = vunpack.c.h.b16 %v467
    %v623 = vunpack.c.l.b16 %v468
    %v624 = vunpack.c.h.b16 %v468
    %v625 = vunpack.c.l.b16 %v469
    %v626 = vunpack.c.h.b16 %v469
    %v627 = vunpack.c.l.b16 %v470
    %v628 = vunpack.c.h.b16 %v470
    %v629 = vunpack.c.l.b16 %v471
    %v630 = vunpack.c.h.b16 %v471
    %v631 = vunpack.c.l.b16 %v472
    %v632 = vunpack.c.h.b16 %v472
    %v633 = vunpack.c.l.b16 %v473
    %v634 = vunpack.c.h.b16 %v473
    %v635 = vunpack.c.l.b16 %v474
    %v636 = vunpack.c.h.b16 %v474
    %v637 = vunpack.c.l.b16 %v475
    %v638 = vunpack.c.h.b16 %v475
    %v639 = vunpack.c.l.b16 %v476
    %v640 = vunpack.c.h.b16 %v476
    %v641 = vunpack.c.l.b16 %v477
    %v642 = vunpack.c.h.b16 %v477
    %v643 = vunpack.c.l.b16 %v478
    %v644 = vunpack.c.h.b16 %v478
    %v645 = vunpack.c.l.b16 %v479
    %v646 = vunpack.c.h.b16 %v479
    %v647 = vunpack.c.l.b16 %v480
    %v648 = vunpack.c.h.b16 %v480
    %v649 = vunpack.c.l.b16 %v481
    %v650 = vunpack.c.h.b16 %v481
    %v651 = vunpack.c.l.b16 %v482
    %v652 = vunpack.c.h.b16 %v482
    %v653 = vunpack.c.l.b16 %v483
    %v654 = vunpack.c.h.b16 %v483
    %v655 = vunpack.c.l.b16 %v484
    %v656 = vunpack.c.h.b16 %v484
    %v657 = vunpack.c.l.b16 %v485
    %v658 = vunpack.c.h.b16 %v485
    %v659 = vunpack.c.l.b16 %v486
    %v660 = vunpack.c.h.b16 %v486
    %v661 = vunpack.c.l.b16 %v487
    %v662 = vunpack.c.h.b16 %v487
    %v663 = vunpack.c.l.b16 %v488
    %v664 = vunpack.c.h.b16 %v488
    %v665 = vunpack.c.l.b16 %v489
    %v666 = vunpack.c.h.b16 %v489
    %v667 = vunpack.c.l.b16 %v490
    %v668 = vunpack.c.h.b16 %v490
    %v669 = vunpack.c.l.b16 %v491
    %v670 = vunpack.c.h.b16 %v491
    %v671 = vunpack.c.l.b16 %v492
    %v672 = vunpack.c.h.b16 %v492
    %v673 = vunpack.c.l.b16 %v493
    %v674 = vunpack.c.h.b16 %v493
    %v675 = vunpack.c.l.b16 %v494
    %v676 = vunpack.c.h.b16 %v494
    %v677 = vunpack.c.l.b16 %v495
    %v678 = vunpack.c.h.b16 %v495
    %v679 = vunpack.c.l.b16 %v496
    %v680 = vunpack.c.h.b16 %v496
    %v681 = vunpack.c.l.b16 %v497
    %v682 = vunpack.c.h.b16 %v497
    %v683 = vunpack.c.l.b16 %v498
    %v684 = vunpack.c.h.b16 %v498
    %v685 = vunpack.c.l.b16 %v499
    %v686 = vunpack.c.h.b16 %v499
    %v687 = vunpack.c.l.b16 %v500
    %v688 = vunpack.c.h.b16 %v500
    %v689 = vunpack.c.l.b16 %v501
    %v690 = vunpack.c.h.b16 %v501
    %v691 = vunpack.c.l.b16 %v502
    %v692 = vunpack.c.h.b16 %v502
    %v693 = vunpack.c.l.b16 %v503
    %v694 = vunpack.c.h.b16 %v503
    %v695 = vunpack.c.l.b16 %v504
    %v696 = vunpack.c.h.b16 %v504
    %v697 = vunpack.c.l.b16 %v505
    %v698 = vunpack.c.h.b16 %v505
    %v699 = vunpack.c.l.b16 %v506
    %v700 = vunpack.c.h.b16 %v506
    %v701 = vunpack.c.l.b16 %v507
    %v702 = vunpack.c.h.b16 %v507
    %v703 = vunpack.c.l.b16 %v508
    %v704 = vunpack.c.h.b16 %v508
    %v705 = vunpack.c.l.b16 %v509
    %v706 = vunpack.c.h.b16 %v509
    %v707 = vunpack.c.l.b16 %v510
    %v708 = vunpack.c.h.b16 %v510
    %v709 = vunpack.c.l.b16 %v511
    %v710 = vunpack.c.h.b16 %v511
    %v711 = vunpack.c.l.b16 %v512
    %v712 = vunpack.c.h.b16 %v512
    %v713 = vunpack.c.l.b16 %v513
    %v714 = vunpack.c.h.b16 %v513
    %v715 = vunpack.c.l.b16 %v514
    %v716 = vunpack.c.h.b16 %v514
    %v717 = vunpack.c.l.b16 %v515
    %v718 = vunpack.c.h.b16 %v515
    %v719 = vunpack.c.l.b16 %v516
    %v720 = vunpack.c.h.b16 %v516
    %v721 = vunpack.c.l.b16 %v517
    %v722 = vunpack.c.h.b16 %v517
    %v723 = vunpack.c.l.b16 %v518
    %v724 = vunpack.c.h.b16 %v518
    %v725 = vunpack.c.l.b16 %v519
    %v726 = vunpack.c.h.b16 %v519
    %v727 = vunpack.c.l.b16 %v520
    %v728 = vunpack.c.h.b16 %v520
    %v729 = vunpack.c.l.b16 %v521
    %v730 = vunpack.c.h.b16 %v521
    %v731 = vunpack.c.l.b16 %v522
    %v732 = vunpack.c.h.b16 %v522
    %v733 = vunpack.c.l.b16 %v523
    %v734 = vunpack.c.h.b16 %v523
    %v735 = vunpack.c.l.b16 %v524
    %v736 = vunpack.c.h.b16 %v524
    %v737 = vunpack.c.l.b16 %v525
    %v738 = vunpack.c.h.b16 %v525
    %v739 = vunpack.c.l.b16 %v526
    %v740 = vunpack.c.h.b16 %v526
    %v741 = vpack.c.b16 %v617, %v613
    %v742 = vpack.c.b16 %v618, %v614
    %v743 = vpack.c.b16 %v619, %v615
    %v744 = vpack.c.b16 %v620, %v616
    %v745 = vpack.c.b16 %v625, %v621
    %v746 = vpack.c.b16 %v626, %v622
    %v747 = vpack.c.b16 %v627, %v623
    %v748 = vpack.c.b16 %v628, %v624
    %v749 = vpack.c.b16 %v633, %v629
    %v750 = vpack.c.b16 %v634, %v630
    %v751 = vpack.c.b16 %v635, %v631
    %v752 = vpack.c.b16 %v636, %v632
    %v753 = vpack.c.b16 %v641, %v637
    %v754 = vpack.c.b16 %v642, %v638
    %v755 = vpack.c.b16 %v643, %v639
    %v756 = vpack.c.b16 %v644, %v640
    %v757 = vpack.c.b16 %v649, %v645
    %v758 = vpack.c.b16 %v650, %v646
    %v759 = vpack.c.b16 %v651, %v647
    %v760 = vpack.c.b16 %v652, %v648
    %v761 = vpack.c.b16 %v657, %v653
    %v762 = vpack.c.b16 %v658, %v654
    %v763 = vpack.c.b16 %v659, %v655
    %v764 = vpack.c.b16 %v660, %v656
    %v765 = vpack.c.b16 %v665, %v661
    %v766 = vpack.c.b16 %v666, %v662
    %v767 = vpack.c.b16 %v667, %v663
    %v768 = vpack.c.b16 %v668, %v664
    %v769 = vpack.c.b16 %v673, %v669
    %v770 = vpack.c.b16 %v674, %v670
    %v771 = vpack.c.b16 %v675, %v671
    %v772 = vpack.c.b16 %v676, %v672
    %v773 = vpack.c.b16 %v681, %v677
    %v774 = vpack.c.b16 %v682, %v678
    %v775 = vpack.c.b16 %v683, %v679
    %v776 = vpack.c.b16 %v684, %v680
    %v777 = vpack.c.b16 %v689, %v685
    %v778 = vpack.c.b16 %v690, %v686
    %v779 = vpack.c.b16 %v691, %v687
    %v780 = vpack.c.b16 %v692, %v688
    %v781 = vpack.c.b16 %v697, %v693
    %v782 = vpack.c.b16 %v698, %v694
    %v783 = vpack.c.b16 %v699, %v695
    %v784 = vpack.c.b16 %v700, %v696
    %v785 = vpack.c.b16 %v705, %v701
    %v786 = vpack.c.b16 %v706, %v702
    %v787 = vpack.c.b16 %v707, %v703
    %v788 = vpack.c.b16 %v708, %v704
    %v789 = vpack.c.b16 %v713, %v709
    %v790 = vpack.c.b16 %v714, %v710
    %v791 = vpack.c.b16 %v715, %v711
    %v792 = vpack.c.b16 %v716, %v712
    %v793 = vpack.c.b16 %v721, %v717
    %v794 = vpack.c.b16 %v722, %v718
    %v795 = vpack.c.b16 %v723, %v719
    %v796 = vpack.c.b16 %v724, %v720
    %v797 = vpack.c.b16 %v729, %v725
    %v798 = vpack.c.b16 %v730, %v726
    %v799 = vpack.c.b16 %v731, %v727
    %v800 = vpack.c.b16 %v732, %v728
    %v801 = vpack.c.b16 %v737, %v733
    %v802 = vpack.c.b16 %v738, %v734
    %v803 = vpack.c.b16 %v739, %v735
    %v804 = vpack.c.b16 %v740, %v736
    %869 = vmatprep.subr.bf16.mxu0 %v742
    %870 = vmatpush1.bf16.msra.mxu0 %v741
    %871 = vmatprep.subr.bf16.mxu0 %v746
    %872 = vmatpush1.bf16.msra.mxu0 %v745
    %873 = vmatprep.subr.bf16.mxu0 %v750
    %874 = vmatpush1.bf16.msra.mxu0 %v749
    %875 = vmatprep.subr.bf16.mxu0 %v754
    %876 = vmatpush1.bf16.msra.mxu0 %v753
    %877 = vmatprep.subr.bf16.mxu0 %v758
    %878 = vmatpush1.bf16.msra.mxu0 %v757
    %879 = vmatprep.subr.bf16.mxu0 %v762
    %880 = vmatpush1.bf16.msra.mxu0 %v761
    %881 = vmatprep.subr.bf16.mxu0 %v766
    %882 = vmatpush1.bf16.msra.mxu0 %v765
    %883 = vmatprep.subr.bf16.mxu0 %v770
    %884 = vmatpush1.bf16.msra.mxu0 %v769
    %885 = vmatprep.subr.bf16.mxu0 %v774
    %886 = vmatpush1.bf16.msra.mxu0 %v773
    %887 = vmatprep.subr.bf16.mxu0 %v778
    %888 = vmatpush1.bf16.msra.mxu0 %v777
    %889 = vmatprep.subr.bf16.mxu0 %v782
    %890 = vmatpush1.bf16.msra.mxu0 %v781
    %891 = vmatprep.subr.bf16.mxu0 %v786
    %892 = vmatpush1.bf16.msra.mxu0 %v785
    %893 = vmatprep.subr.bf16.mxu0 %v790
    %894 = vmatpush1.bf16.msra.mxu0 %v789
    %895 = vmatprep.subr.bf16.mxu0 %v794
    %896 = vmatpush1.bf16.msra.mxu0 %v793
    %897 = vmatprep.subr.bf16.mxu0 %v798
    %898 = vmatpush1.bf16.msra.mxu0 %v797
    %899 = vmatprep.subr.bf16.mxu0 %v802
    %900 = vmatpush1.bf16.msra.mxu0 %v801
    %901 = vmatprep.mubr.bf16.mxu0 %v462
    %902 = vmatmul.mubr.bf16.gmra.mrb[0].mxu0 %v461
    %v903 = vpop.f32.mrb[0].mxu0
    %v904 = vadd.f32 %v532, %v903
    %v905 = vpop.f32.mrb[0].mxu0
    %v906 = vadd.f32 %v536, %v905
    %v907 = vpop.f32.mrb[0].mxu0
    %v908 = vadd.f32 %v532, %v907
    %v909 = vpop.f32.mrb[0].mxu0
    %v910 = vadd.f32 %v536, %v909
    %911 = vdwg.mxu0
    %912 = vmatprep.subr.bf16.mxu0 %v744
    %913 = vmatpush1.bf16.msra.mxu0 %v743
    %914 = vmatprep.subr.bf16.mxu0 %v748
    %915 = vmatpush1.bf16.msra.mxu0 %v747
    %916 = vmatprep.subr.bf16.mxu0 %v752
    %917 = vmatpush1.bf16.msra.mxu0 %v751
    %918 = vmatprep.subr.bf16.mxu0 %v756
    %919 = vmatpush1.bf16.msra.mxu0 %v755
    %920 = vmatprep.subr.bf16.mxu0 %v760
    %921 = vmatpush1.bf16.msra.mxu0 %v759
    %922 = vmatprep.subr.bf16.mxu0 %v764
    %923 = vmatpush1.bf16.msra.mxu0 %v763
    %924 = vmatprep.subr.bf16.mxu0 %v768
    %925 = vmatpush1.bf16.msra.mxu0 %v767
    %926 = vmatprep.subr.bf16.mxu0 %v772
    %927 = vmatpush1.bf16.msra.mxu0 %v771
    %928 = vmatprep.subr.bf16.mxu0 %v776
    %929 = vmatpush1.bf16.msra.mxu0 %v775
    %930 = vmatprep.subr.bf16.mxu0 %v780
    %931 = vmatpush1.bf16.msra.mxu0 %v779
    %932 = vmatprep.subr.bf16.mxu0 %v784
    %933 = vmatpush1.bf16.msra.mxu0 %v783
    %934 = vmatprep.subr.bf16.mxu0 %v788
    %935 = vmatpush1.bf16.msra.mxu0 %v787
    %936 = vmatprep.subr.bf16.mxu0 %v792
    %937 = vmatpush1.bf16.msra.mxu0 %v791
    %938 = vmatprep.subr.bf16.mxu0 %v796
    %939 = vmatpush1.bf16.msra.mxu0 %v795
    %940 = vmatprep.subr.bf16.mxu0 %v800
    %941 = vmatpush1.bf16.msra.mxu0 %v799
    %942 = vmatprep.subr.bf16.mxu0 %v804
    %943 = vmatpush1.bf16.msra.mxu0 %v803
    %944 = vmatprep.mubr.bf16.mxu0 %v462
    %945 = vmatmul.mubr.bf16.gmra.mrb[0].mxu0 %v461
    %v946 = vpop.f32.mrb[0].mxu0
    %v947 = vadd.f32 %v540, %v946
    %v948 = vpop.f32.mrb[0].mxu0
    %v949 = vadd.f32 %v544, %v948
    %v950 = vpop.f32.mrb[0].mxu0
    %v951 = vadd.f32 %v540, %v950
    %v952 = vpop.f32.mrb[0].mxu0
    %v953 = vadd.f32 %v544, %v952
    %954 = vdwg.mxu0
    %v955 = vmax.f32 %v904, 0.0
    %v956 = vmax.f32 %v906, 0.0
    %v957 = vmax.f32 %v947, 0.0
    %v958 = vmax.f32 %v949, 0.0
    %v959 = vmax.f32 %v908, 0.0
    %v960 = vmax.f32 %v910, 0.0
    %v961 = vmax.f32 %v951, 0.0
    %v962 = vmax.f32 %v953, 0.0
    %v963 = vmin.f32 %v955, 6.0
    %v964 = vmin.f32 %v956, 6.0
    %v965 = vmin.f32 %v957, 6.0
    %v966 = vmin.f32 %v958, 6.0
    %v967 = vmin.f32 %v959, 6.0
    %v968 = vmin.f32 %v960, 6.0
    %v969 = vmin.f32 %v961, 6.0
    %v970 = vmin.f32 %v962, 6.0
    %v971 = vpack.c.bf16 %v967, %v963
    %v972 = vpack.c.bf16 %v968, %v964
    %v973 = vpack.c.bf16 %v969, %v965
    %v974 = vpack.c.bf16 %v970, %v966
    %v975 = vld [vmem:[#allocation11] sm:$0xff]
    %v976 = vld [vmem:[#allocation11 + $0x8] sm:$0xff]
    %v977 = vld [vmem:[#allocation11 + $0x10] sm:$0xff]
    %v978 = vld [vmem:[#allocation11 + $0x18] sm:$0xff]
    %v979 = vld [vmem:[#allocation11 + $0x20] sm:$0xff]
    %v980 = vld [vmem:[#allocation11 + $0x28] sm:$0xff]
    %v981 = vld [vmem:[#allocation11 + $0x30] sm:$0xff]
    %v982 = vld [vmem:[#allocation11 + $0x38] sm:$0xff]
    %v983 = vld [vmem:[#allocation11 + $0x40] sm:$0xff]
    %v984 = vld [vmem:[#allocation11 + $0x48] sm:$0xff]
    %v985 = vld [vmem:[#allocation11 + $0x50] sm:$0xff]
    %v986 = vld [vmem:[#allocation11 + $0x58] sm:$0xff]
    %v987 = vld [vmem:[#allocation11 + $0x60] sm:$0xff]
    %v988 = vld [vmem:[#allocation11 + $0x68] sm:$0xff]
    %v989 = vld [vmem:[#allocation11 + $0x70] sm:$0xff]
    %v990 = vld [vmem:[#allocation11 + $0x78] sm:$0xff]
    %v991 = vld [vmem:[#allocation11 + $0x80] sm:$0xff]
    %v992 = vld [vmem:[#allocation11 + $0x88] sm:$0xff]
    %v993 = vld [vmem:[#allocation11 + $0x90] sm:$0xff]
    %v994 = vld [vmem:[#allocation11 + $0x98] sm:$0xff]
    %v995 = vld [vmem:[#allocation11 + $0xa0] sm:$0xff]
    %v996 = vld [vmem:[#allocation11 + $0xa8] sm:$0xff]
    %v997 = vld [vmem:[#allocation11 + $0xb0] sm:$0xff]
    %v998 = vld [vmem:[#allocation11 + $0xb8] sm:$0xff]
    %v999 = vld [vmem:[#allocation11 + $0xc0] sm:$0xff]
    %v1000 = vld [vmem:[#allocation11 + $0xc8] sm:$0xff]
    %v1001 = vld [vmem:[#allocation11 + $0xd0] sm:$0xff]
    %v1002 = vld [vmem:[#allocation11 + $0xd8] sm:$0xff]
    %v1003 = vld [vmem:[#allocation11 + $0xe0] sm:$0xff]
    %v1004 = vld [vmem:[#allocation11 + $0xe8] sm:$0xff]
    %v1005 = vld [vmem:[#allocation11 + $0xf0] sm:$0xff]
    %v1006 = vld [vmem:[#allocation11 + $0xf8] sm:$0xff]
    %v1007 = vld [vmem:[#allocation11 + $0x100] sm:$0xff]
    %v1008 = vld [vmem:[#allocation11 + $0x108] sm:$0xff]
    %v1009 = vld [vmem:[#allocation11 + $0x110] sm:$0xff]
    %v1010 = vld [vmem:[#allocation11 + $0x118] sm:$0xff]
    %v1011 = vld [vmem:[#allocation11 + $0x120] sm:$0xff]
    %v1012 = vld [vmem:[#allocation11 + $0x128] sm:$0xff]
    %v1013 = vld [vmem:[#allocation11 + $0x130] sm:$0xff]
    %v1014 = vld [vmem:[#allocation11 + $0x138] sm:$0xff]
    %v1015 = vld [vmem:[#allocation11 + $0x140] sm:$0xff]
    %v1016 = vld [vmem:[#allocation11 + $0x148] sm:$0xff]
    %v1017 = vld [vmem:[#allocation11 + $0x150] sm:$0xff]
    %v1018 = vld [vmem:[#allocation11 + $0x158] sm:$0xff]
    %v1019 = vld [vmem:[#allocation11 + $0x160] sm:$0xff]
    %v1020 = vld [vmem:[#allocation11 + $0x168] sm:$0xff]
    %v1021 = vld [vmem:[#allocation11 + $0x170] sm:$0xff]
    %v1022 = vld [vmem:[#allocation11 + $0x178] sm:$0xff]
    %v1023 = vld [vmem:[#allocation11 + $0x180] sm:$0xff]
    %v1024 = vld [vmem:[#allocation11 + $0x188] sm:$0xff]
    %v1025 = vld [vmem:[#allocation11 + $0x190] sm:$0xff]
    %v1026 = vld [vmem:[#allocation11 + $0x198] sm:$0xff]
    %v1027 = vld [vmem:[#allocation11 + $0x1a0] sm:$0xff]
    %v1028 = vld [vmem:[#allocation11 + $0x1a8] sm:$0xff]
    %v1029 = vld [vmem:[#allocation11 + $0x1b0] sm:$0xff]
    %v1030 = vld [vmem:[#allocation11 + $0x1b8] sm:$0xff]
    %v1031 = vld [vmem:[#allocation11 + $0x1c0] sm:$0xff]
    %v1032 = vld [vmem:[#allocation11 + $0x1c8] sm:$0xff]
    %v1033 = vld [vmem:[#allocation11 + $0x1d0] sm:$0xff]
    %v1034 = vld [vmem:[#allocation11 + $0x1d8] sm:$0xff]
    %v1035 = vld [vmem:[#allocation11 + $0x1e0] sm:$0xff]
    %v1036 = vld [vmem:[#allocation11 + $0x1e8] sm:$0xff]
    %v1037 = vld [vmem:[#allocation11 + $0x1f0] sm:$0xff]
    %v1038 = vld [vmem:[#allocation11 + $0x1f8] sm:$0xff]
    %v1039 = vld [vmem:[#allocation11 + $0x200] sm:$0xff]
    %v1040 = vld [vmem:[#allocation11 + $0x208] sm:$0xff]
    %v1041 = vld [vmem:[#allocation11 + $0x210] sm:$0xff]
    %v1042 = vld [vmem:[#allocation11 + $0x218] sm:$0xff]
    %v1043 = vld [vmem:[#allocation11 + $0x220] sm:$0xff]
    %v1044 = vld [vmem:[#allocation11 + $0x228] sm:$0xff]
    %v1045 = vld [vmem:[#allocation11 + $0x230] sm:$0xff]
    %v1046 = vld [vmem:[#allocation11 + $0x238] sm:$0xff]
    %v1047 = vld [vmem:[#allocation11 + $0x240] sm:$0xff]
    %v1048 = vld [vmem:[#allocation11 + $0x248] sm:$0xff]
    %v1049 = vld [vmem:[#allocation11 + $0x250] sm:$0xff]
    %v1050 = vld [vmem:[#allocation11 + $0x258] sm:$0xff]
    %v1051 = vld [vmem:[#allocation11 + $0x260] sm:$0xff]
    %v1052 = vld [vmem:[#allocation11 + $0x268] sm:$0xff]
    %v1053 = vld [vmem:[#allocation11 + $0x270] sm:$0xff]
    %v1054 = vld [vmem:[#allocation11 + $0x278] sm:$0xff]
    %v1055 = vld [vmem:[#allocation11 + $0x280] sm:$0xff]
    %v1056 = vld [vmem:[#allocation11 + $0x288] sm:$0xff]
    %v1057 = vld [vmem:[#allocation11 + $0x290] sm:$0xff]
    %v1058 = vld [vmem:[#allocation11 + $0x298] sm:$0xff]
    %v1059 = vld [vmem:[#allocation11 + $0x2a0] sm:$0xff]
    %v1060 = vld [vmem:[#allocation11 + $0x2a8] sm:$0xff]
    %v1061 = vld [vmem:[#allocation11 + $0x2b0] sm:$0xff]
    %v1062 = vld [vmem:[#allocation11 + $0x2b8] sm:$0xff]
    %v1063 = vld [vmem:[#allocation11 + $0x2c0] sm:$0xff]
    %v1064 = vld [vmem:[#allocation11 + $0x2c8] sm:$0xff]
    %v1065 = vld [vmem:[#allocation11 + $0x2d0] sm:$0xff]
    %v1066 = vld [vmem:[#allocation11 + $0x2d8] sm:$0xff]
    %v1067 = vld [vmem:[#allocation11 + $0x2e0] sm:$0xff]
    %v1068 = vld [vmem:[#allocation11 + $0x2e8] sm:$0xff]
    %v1069 = vld [vmem:[#allocation11 + $0x2f0] sm:$0xff]
    %v1070 = vld [vmem:[#allocation11 + $0x2f8] sm:$0xff]
    %v1071 = vld [vmem:[#allocation11 + $0x300] sm:$0xff]
    %v1072 = vld [vmem:[#allocation11 + $0x308] sm:$0xff]
    %v1073 = vld [vmem:[#allocation11 + $0x310] sm:$0xff]
    %v1074 = vld [vmem:[#allocation11 + $0x318] sm:$0xff]
    %v1075 = vld [vmem:[#allocation11 + $0x320] sm:$0xff]
    %v1076 = vld [vmem:[#allocation11 + $0x328] sm:$0xff]
    %v1077 = vld [vmem:[#allocation11 + $0x330] sm:$0xff]
    %v1078 = vld [vmem:[#allocation11 + $0x338] sm:$0xff]
    %v1079 = vld [vmem:[#allocation11 + $0x340] sm:$0xff]
    %v1080 = vld [vmem:[#allocation11 + $0x348] sm:$0xff]
    %v1081 = vld [vmem:[#allocation11 + $0x350] sm:$0xff]
    %v1082 = vld [vmem:[#allocation11 + $0x358] sm:$0xff]
    %v1083 = vld [vmem:[#allocation11 + $0x360] sm:$0xff]
    %v1084 = vld [vmem:[#allocation11 + $0x368] sm:$0xff]
    %v1085 = vld [vmem:[#allocation11 + $0x370] sm:$0xff]
    %v1086 = vld [vmem:[#allocation11 + $0x378] sm:$0xff]
    %v1087 = vld [vmem:[#allocation11 + $0x380] sm:$0xff]
    %v1088 = vld [vmem:[#allocation11 + $0x388] sm:$0xff]
    %v1089 = vld [vmem:[#allocation11 + $0x390] sm:$0xff]
    %v1090 = vld [vmem:[#allocation11 + $0x398] sm:$0xff]
    %v1091 = vld [vmem:[#allocation11 + $0x3a0] sm:$0xff]
    %v1092 = vld [vmem:[#allocation11 + $0x3a8] sm:$0xff]
    %v1093 = vld [vmem:[#allocation11 + $0x3b0] sm:$0xff]
    %v1094 = vld [vmem:[#allocation11 + $0x3b8] sm:$0xff]
    %v1095 = vld [vmem:[#allocation11 + $0x3c0] sm:$0xff]
    %v1096 = vld [vmem:[#allocation11 + $0x3c8] sm:$0xff]
    %v1097 = vld [vmem:[#allocation11 + $0x3d0] sm:$0xff]
    %v1098 = vld [vmem:[#allocation11 + $0x3d8] sm:$0xff]
    %v1099 = vld [vmem:[#allocation11 + $0x3e0] sm:$0xff]
    %v1100 = vld [vmem:[#allocation11 + $0x3e8] sm:$0xff]
    %v1101 = vld [vmem:[#allocation11 + $0x3f0] sm:$0xff]
    %v1102 = vld [vmem:[#allocation11 + $0x3f8] sm:$0xff]
    %v1103 = vld [vmem:[%s10] sm:$0xf]
    %v1105 = vlaneseq
    %v1106 = vshrl.u32 %v1105, 7
    %v1107 = vsub.s32 0, %v1106
    %v1108 = vrot.slane %v1103, %v1107
    %v1109 = vlaneseq
    %v1110 = vshrl.u32 %v1109, 7
    %v1111 = vsub.s32 1, %v1110
    %v1112 = vrot.slane %v1103, %v1111
    %v1113 = vlaneseq
    %v1114 = vshrl.u32 %v1113, 7
    %v1115 = vsub.s32 2, %v1114
    %v1116 = vrot.slane %v1103, %v1115
    %v1117 = vlaneseq
    %v1118 = vshrl.u32 %v1117, 7
    %v1119 = vsub.s32 3, %v1118
    %v1120 = vrot.slane %v1103, %v1119
    %v1253 = vunpack.c.l.b16 %v975
    %v1254 = vunpack.c.h.b16 %v975
    %v1255 = vunpack.c.l.b16 %v976
    %v1256 = vunpack.c.h.b16 %v976
    %v1257 = vunpack.c.l.b16 %v977
    %v1258 = vunpack.c.h.b16 %v977
    %v1259 = vunpack.c.l.b16 %v978
    %v1260 = vunpack.c.h.b16 %v978
    %v1261 = vunpack.c.l.b16 %v979
    %v1262 = vunpack.c.h.b16 %v979
    %v1263 = vunpack.c.l.b16 %v980
    %v1264 = vunpack.c.h.b16 %v980
    %v1265 = vunpack.c.l.b16 %v981
    %v1266 = vunpack.c.h.b16 %v981
    %v1267 = vunpack.c.l.b16 %v982
    %v1268 = vunpack.c.h.b16 %v982
    %v1269 = vunpack.c.l.b16 %v983
    %v1270 = vunpack.c.h.b16 %v983
    %v1271 = vunpack.c.l.b16 %v984
    %v1272 = vunpack.c.h.b16 %v984
    %v1273 = vunpack.c.l.b16 %v985
    %v1274 = vunpack.c.h.b16 %v985
    %v1275 = vunpack.c.l.b16 %v986
    %v1276 = vunpack.c.h.b16 %v986
    %v1277 = vunpack.c.l.b16 %v987
    %v1278 = vunpack.c.h.b16 %v987
    %v1279 = vunpack.c.l.b16 %v988
    %v1280 = vunpack.c.h.b16 %v988
    %v1281 = vunpack.c.l.b16 %v989
    %v1282 = vunpack.c.h.b16 %v989
    %v1283 = vunpack.c.l.b16 %v990
    %v1284 = vunpack.c.h.b16 %v990
    %v1285 = vunpack.c.l.b16 %v991
    %v1286 = vunpack.c.h.b16 %v991
    %v1287 = vunpack.c.l.b16 %v992
    %v1288 = vunpack.c.h.b16 %v992
    %v1289 = vunpack.c.l.b16 %v993
    %v1290 = vunpack.c.h.b16 %v993
    %v1291 = vunpack.c.l.b16 %v994
    %v1292 = vunpack.c.h.b16 %v994
    %v1293 = vunpack.c.l.b16 %v995
    %v1294 = vunpack.c.h.b16 %v995
    %v1295 = vunpack.c.l.b16 %v996
    %v1296 = vunpack.c.h.b16 %v996
    %v1297 = vunpack.c.l.b16 %v997
    %v1298 = vunpack.c.h.b16 %v997
    %v1299 = vunpack.c.l.b16 %v998
    %v1300 = vunpack.c.h.b16 %v998
    %v1301 = vunpack.c.l.b16 %v999
    %v1302 = vunpack.c.h.b16 %v999
    %v1303 = vunpack.c.l.b16 %v1000
    %v1304 = vunpack.c.h.b16 %v1000
    %v1305 = vunpack.c.l.b16 %v1001
    %v1306 = vunpack.c.h.b16 %v1001
    %v1307 = vunpack.c.l.b16 %v1002
    %v1308 = vunpack.c.h.b16 %v1002
    %v1309 = vunpack.c.l.b16 %v1003
    %v1310 = vunpack.c.h.b16 %v1003
    %v1311 = vunpack.c.l.b16 %v1004
    %v1312 = vunpack.c.h.b16 %v1004
    %v1313 = vunpack.c.l.b16 %v1005
    %v1314 = vunpack.c.h.b16 %v1005
    %v1315 = vunpack.c.l.b16 %v1006
    %v1316 = vunpack.c.h.b16 %v1006
    %v1317 = vunpack.c.l.b16 %v1007
    %v1318 = vunpack.c.h.b16 %v1007
    %v1319 = vunpack.c.l.b16 %v1008
    %v1320 = vunpack.c.h.b16 %v1008
    %v1321 = vunpack.c.l.b16 %v1009
    %v1322 = vunpack.c.h.b16 %v1009
    %v1323 = vunpack.c.l.b16 %v1010
    %v1324 = vunpack.c.h.b16 %v1010
    %v1325 = vunpack.c.l.b16 %v1011
    %v1326 = vunpack.c.h.b16 %v1011
    %v1327 = vunpack.c.l.b16 %v1012
    %v1328 = vunpack.c.h.b16 %v1012
    %v1329 = vunpack.c.l.b16 %v1013
    %v1330 = vunpack.c.h.b16 %v1013
    %v1331 = vunpack.c.l.b16 %v1014
    %v1332 = vunpack.c.h.b16 %v1014
    %v1333 = vunpack.c.l.b16 %v1015
    %v1334 = vunpack.c.h.b16 %v1015
    %v1335 = vunpack.c.l.b16 %v1016
    %v1336 = vunpack.c.h.b16 %v1016
    %v1337 = vunpack.c.l.b16 %v1017
    %v1338 = vunpack.c.h.b16 %v1017
    %v1339 = vunpack.c.l.b16 %v1018
    %v1340 = vunpack.c.h.b16 %v1018
    %v1341 = vunpack.c.l.b16 %v1019
    %v1342 = vunpack.c.h.b16 %v1019
    %v1343 = vunpack.c.l.b16 %v1020
    %v1344 = vunpack.c.h.b16 %v1020
    %v1345 = vunpack.c.l.b16 %v1021
    %v1346 = vunpack.c.h.b16 %v1021
    %v1347 = vunpack.c.l.b16 %v1022
    %v1348 = vunpack.c.h.b16 %v1022
    %v1349 = vunpack.c.l.b16 %v1023
    %v1350 = vunpack.c.h.b16 %v1023
    %v1351 = vunpack.c.l.b16 %v1024
    %v1352 = vunpack.c.h.b16 %v1024
    %v1353 = vunpack.c.l.b16 %v1025
    %v1354 = vunpack.c.h.b16 %v1025
    %v1355 = vunpack.c.l.b16 %v1026
    %v1356 = vunpack.c.h.b16 %v1026
    %v1357 = vunpack.c.l.b16 %v1027
    %v1358 = vunpack.c.h.b16 %v1027
    %v1359 = vunpack.c.l.b16 %v1028
    %v1360 = vunpack.c.h.b16 %v1028
    %v1361 = vunpack.c.l.b16 %v1029
    %v1362 = vunpack.c.h.b16 %v1029
    %v1363 = vunpack.c.l.b16 %v1030
    %v1364 = vunpack.c.h.b16 %v1030
    %v1365 = vunpack.c.l.b16 %v1031
    %v1366 = vunpack.c.h.b16 %v1031
    %v1367 = vunpack.c.l.b16 %v1032
    %v1368 = vunpack.c.h.b16 %v1032
    %v1369 = vunpack.c.l.b16 %v1033
    %v1370 = vunpack.c.h.b16 %v1033
    %v1371 = vunpack.c.l.b16 %v1034
    %v1372 = vunpack.c.h.b16 %v1034
    %v1373 = vunpack.c.l.b16 %v1035
    %v1374 = vunpack.c.h.b16 %v1035
    %v1375 = vunpack.c.l.b16 %v1036
    %v1376 = vunpack.c.h.b16 %v1036
    %v1377 = vunpack.c.l.b16 %v1037
    %v1378 = vunpack.c.h.b16 %v1037
    %v1379 = vunpack.c.l.b16 %v1038
    %v1380 = vunpack.c.h.b16 %v1038
    %v1381 = vunpack.c.l.b16 %v1039
    %v1382 = vunpack.c.h.b16 %v1039
    %v1383 = vunpack.c.l.b16 %v1040
    %v1384 = vunpack.c.h.b16 %v1040
    %v1385 = vunpack.c.l.b16 %v1041
    %v1386 = vunpack.c.h.b16 %v1041
    %v1387 = vunpack.c.l.b16 %v1042
    %v1388 = vunpack.c.h.b16 %v1042
    %v1389 = vunpack.c.l.b16 %v1043
    %v1390 = vunpack.c.h.b16 %v1043
    %v1391 = vunpack.c.l.b16 %v1044
    %v1392 = vunpack.c.h.b16 %v1044
    %v1393 = vunpack.c.l.b16 %v1045
    %v1394 = vunpack.c.h.b16 %v1045
    %v1395 = vunpack.c.l.b16 %v1046
    %v1396 = vunpack.c.h.b16 %v1046
    %v1397 = vunpack.c.l.b16 %v1047
    %v1398 = vunpack.c.h.b16 %v1047
    %v1399 = vunpack.c.l.b16 %v1048
    %v1400 = vunpack.c.h.b16 %v1048
    %v1401 = vunpack.c.l.b16 %v1049
    %v1402 = vunpack.c.h.b16 %v1049
    %v1403 = vunpack.c.l.b16 %v1050
    %v1404 = vunpack.c.h.b16 %v1050
    %v1405 = vunpack.c.l.b16 %v1051
    %v1406 = vunpack.c.h.b16 %v1051
    %v1407 = vunpack.c.l.b16 %v1052
    %v1408 = vunpack.c.h.b16 %v1052
    %v1409 = vunpack.c.l.b16 %v1053
    %v1410 = vunpack.c.h.b16 %v1053
    %v1411 = vunpack.c.l.b16 %v1054
    %v1412 = vunpack.c.h.b16 %v1054
    %v1413 = vunpack.c.l.b16 %v1055
    %v1414 = vunpack.c.h.b16 %v1055
    %v1415 = vunpack.c.l.b16 %v1056
    %v1416 = vunpack.c.h.b16 %v1056
    %v1417 = vunpack.c.l.b16 %v1057
    %v1418 = vunpack.c.h.b16 %v1057
    %v1419 = vunpack.c.l.b16 %v1058
    %v1420 = vunpack.c.h.b16 %v1058
    %v1421 = vunpack.c.l.b16 %v1059
    %v1422 = vunpack.c.h.b16 %v1059
    %v1423 = vunpack.c.l.b16 %v1060
    %v1424 = vunpack.c.h.b16 %v1060
    %v1425 = vunpack.c.l.b16 %v1061
    %v1426 = vunpack.c.h.b16 %v1061
    %v1427 = vunpack.c.l.b16 %v1062
    %v1428 = vunpack.c.h.b16 %v1062
    %v1429 = vunpack.c.l.b16 %v1063
    %v1430 = vunpack.c.h.b16 %v1063
    %v1431 = vunpack.c.l.b16 %v1064
    %v1432 = vunpack.c.h.b16 %v1064
    %v1433 = vunpack.c.l.b16 %v1065
    %v1434 = vunpack.c.h.b16 %v1065
    %v1435 = vunpack.c.l.b16 %v1066
    %v1436 = vunpack.c.h.b16 %v1066
    %v1437 = vunpack.c.l.b16 %v1067
    %v1438 = vunpack.c.h.b16 %v1067
    %v1439 = vunpack.c.l.b16 %v1068
    %v1440 = vunpack.c.h.b16 %v1068
    %v1441 = vunpack.c.l.b16 %v1069
    %v1442 = vunpack.c.h.b16 %v1069
    %v1443 = vunpack.c.l.b16 %v1070
    %v1444 = vunpack.c.h.b16 %v1070
    %v1445 = vunpack.c.l.b16 %v1071
    %v1446 = vunpack.c.h.b16 %v1071
    %v1447 = vunpack.c.l.b16 %v1072
    %v1448 = vunpack.c.h.b16 %v1072
    %v1449 = vunpack.c.l.b16 %v1073
    %v1450 = vunpack.c.h.b16 %v1073
    %v1451 = vunpack.c.l.b16 %v1074
    %v1452 = vunpack.c.h.b16 %v1074
    %v1453 = vunpack.c.l.b16 %v1075
    %v1454 = vunpack.c.h.b16 %v1075
    %v1455 = vunpack.c.l.b16 %v1076
    %v1456 = vunpack.c.h.b16 %v1076
    %v1457 = vunpack.c.l.b16 %v1077
    %v1458 = vunpack.c.h.b16 %v1077
    %v1459 = vunpack.c.l.b16 %v1078
    %v1460 = vunpack.c.h.b16 %v1078
    %v1461 = vunpack.c.l.b16 %v1079
    %v1462 = vunpack.c.h.b16 %v1079
    %v1463 = vunpack.c.l.b16 %v1080
    %v1464 = vunpack.c.h.b16 %v1080
    %v1465 = vunpack.c.l.b16 %v1081
    %v1466 = vunpack.c.h.b16 %v1081
    %v1467 = vunpack.c.l.b16 %v1082
    %v1468 = vunpack.c.h.b16 %v1082
    %v1469 = vunpack.c.l.b16 %v1083
    %v1470 = vunpack.c.h.b16 %v1083
    %v1471 = vunpack.c.l.b16 %v1084
    %v1472 = vunpack.c.h.b16 %v1084
    %v1473 = vunpack.c.l.b16 %v1085
    %v1474 = vunpack.c.h.b16 %v1085
    %v1475 = vunpack.c.l.b16 %v1086
    %v1476 = vunpack.c.h.b16 %v1086
    %v1477 = vunpack.c.l.b16 %v1087
    %v1478 = vunpack.c.h.b16 %v1087
    %v1479 = vunpack.c.l.b16 %v1088
    %v1480 = vunpack.c.h.b16 %v1088
    %v1481 = vunpack.c.l.b16 %v1089
    %v1482 = vunpack.c.h.b16 %v1089
    %v1483 = vunpack.c.l.b16 %v1090
    %v1484 = vunpack.c.h.b16 %v1090
    %v1485 = vunpack.c.l.b16 %v1091
    %v1486 = vunpack.c.h.b16 %v1091
    %v1487 = vunpack.c.l.b16 %v1092
    %v1488 = vunpack.c.h.b16 %v1092
    %v1489 = vunpack.c.l.b16 %v1093
    %v1490 = vunpack.c.h.b16 %v1093
    %v1491 = vunpack.c.l.b16 %v1094
    %v1492 = vunpack.c.h.b16 %v1094
    %v1493 = vunpack.c.l.b16 %v1095
    %v1494 = vunpack.c.h.b16 %v1095
    %v1495 = vunpack.c.l.b16 %v1096
    %v1496 = vunpack.c.h.b16 %v1096
    %v1497 = vunpack.c.l.b16 %v1097
    %v1498 = vunpack.c.h.b16 %v1097
    %v1499 = vunpack.c.l.b16 %v1098
    %v1500 = vunpack.c.h.b16 %v1098
    %v1501 = vunpack.c.l.b16 %v1099
    %v1502 = vunpack.c.h.b16 %v1099
    %v1503 = vunpack.c.l.b16 %v1100
    %v1504 = vunpack.c.h.b16 %v1100
    %v1505 = vunpack.c.l.b16 %v1101
    %v1506 = vunpack.c.h.b16 %v1101
    %v1507 = vunpack.c.l.b16 %v1102
    %v1508 = vunpack.c.h.b16 %v1102
    %v1509 = vpack.c.b16 %v1257, %v1253
    %v1510 = vpack.c.b16 %v1258, %v1254
    %v1511 = vpack.c.b16 %v1259, %v1255
    %v1512 = vpack.c.b16 %v1260, %v1256
    %v1513 = vpack.c.b16 %v1265, %v1261
    %v1514 = vpack.c.b16 %v1266, %v1262
    %v1515 = vpack.c.b16 %v1267, %v1263
    %v1516 = vpack.c.b16 %v1268, %v1264
    %v1517 = vpack.c.b16 %v1273, %v1269
    %v1518 = vpack.c.b16 %v1274, %v1270
    %v1519 = vpack.c.b16 %v1275, %v1271
    %v1520 = vpack.c.b16 %v1276, %v1272
    %v1521 = vpack.c.b16 %v1281, %v1277
    %v1522 = vpack.c.b16 %v1282, %v1278
    %v1523 = vpack.c.b16 %v1283, %v1279
    %v1524 = vpack.c.b16 %v1284, %v1280
    %v1525 = vpack.c.b16 %v1289, %v1285
    %v1526 = vpack.c.b16 %v1290, %v1286
    %v1527 = vpack.c.b16 %v1291, %v1287
    %v1528 = vpack.c.b16 %v1292, %v1288
    %v1529 = vpack.c.b16 %v1297, %v1293
    %v1530 = vpack.c.b16 %v1298, %v1294
    %v1531 = vpack.c.b16 %v1299, %v1295
    %v1532 = vpack.c.b16 %v1300, %v1296
    %v1533 = vpack.c.b16 %v1305, %v1301
    %v1534 = vpack.c.b16 %v1306, %v1302
    %v1535 = vpack.c.b16 %v1307, %v1303
    %v1536 = vpack.c.b16 %v1308, %v1304
    %v1537 = vpack.c.b16 %v1313, %v1309
    %v1538 = vpack.c.b16 %v1314, %v1310
    %v1539 = vpack.c.b16 %v1315, %v1311
    %v1540 = vpack.c.b16 %v1316, %v1312
    %v1541 = vpack.c.b16 %v1321, %v1317
    %v1542 = vpack.c.b16 %v1322, %v1318
    %v1543 = vpack.c.b16 %v1323, %v1319
    %v1544 = vpack.c.b16 %v1324, %v1320
    %v1545 = vpack.c.b16 %v1329, %v1325
    %v1546 = vpack.c.b16 %v1330, %v1326
    %v1547 = vpack.c.b16 %v1331, %v1327
    %v1548 = vpack.c.b16 %v1332, %v1328
    %v1549 = vpack.c.b16 %v1337, %v1333
    %v1550 = vpack.c.b16 %v1338, %v1334
    %v1551 = vpack.c.b16 %v1339, %v1335
    %v1552 = vpack.c.b16 %v1340, %v1336
    %v1553 = vpack.c.b16 %v1345, %v1341
    %v1554 = vpack.c.b16 %v1346, %v1342
    %v1555 = vpack.c.b16 %v1347, %v1343
    %v1556 = vpack.c.b16 %v1348, %v1344
    %v1557 = vpack.c.b16 %v1353, %v1349
    %v1558 = vpack.c.b16 %v1354, %v1350
    %v1559 = vpack.c.b16 %v1355, %v1351
    %v1560 = vpack.c.b16 %v1356, %v1352
    %v1561 = vpack.c.b16 %v1361, %v1357
    %v1562 = vpack.c.b16 %v1362, %v1358
    %v1563 = vpack.c.b16 %v1363, %v1359
    %v1564 = vpack.c.b16 %v1364, %v1360
    %v1565 = vpack.c.b16 %v1369, %v1365
    %v1566 = vpack.c.b16 %v1370, %v1366
    %v1567 = vpack.c.b16 %v1371, %v1367
    %v1568 = vpack.c.b16 %v1372, %v1368
    %v1569 = vpack.c.b16 %v1377, %v1373
    %v1570 = vpack.c.b16 %v1378, %v1374
    %v1571 = vpack.c.b16 %v1379, %v1375
    %v1572 = vpack.c.b16 %v1380, %v1376
    %v1573 = vpack.c.b16 %v1385, %v1381
    %v1574 = vpack.c.b16 %v1386, %v1382
    %v1575 = vpack.c.b16 %v1387, %v1383
    %v1576 = vpack.c.b16 %v1388, %v1384
    %v1577 = vpack.c.b16 %v1393, %v1389
    %v1578 = vpack.c.b16 %v1394, %v1390
    %v1579 = vpack.c.b16 %v1395, %v1391
    %v1580 = vpack.c.b16 %v1396, %v1392
    %v1581 = vpack.c.b16 %v1401, %v1397
    %v1582 = vpack.c.b16 %v1402, %v1398
    %v1583 = vpack.c.b16 %v1403, %v1399
    %v1584 = vpack.c.b16 %v1404, %v1400
    %v1585 = vpack.c.b16 %v1409, %v1405
    %v1586 = vpack.c.b16 %v1410, %v1406
    %v1587 = vpack.c.b16 %v1411, %v1407
    %v1588 = vpack.c.b16 %v1412, %v1408
    %v1589 = vpack.c.b16 %v1417, %v1413
    %v1590 = vpack.c.b16 %v1418, %v1414
    %v1591 = vpack.c.b16 %v1419, %v1415
    %v1592 = vpack.c.b16 %v1420, %v1416
    %v1593 = vpack.c.b16 %v1425, %v1421
    %v1594 = vpack.c.b16 %v1426, %v1422
    %v1595 = vpack.c.b16 %v1427, %v1423
    %v1596 = vpack.c.b16 %v1428, %v1424
    %v1597 = vpack.c.b16 %v1433, %v1429
    %v1598 = vpack.c.b16 %v1434, %v1430
    %v1599 = vpack.c.b16 %v1435, %v1431
    %v1600 = vpack.c.b16 %v1436, %v1432
    %v1601 = vpack.c.b16 %v1441, %v1437
    %v1602 = vpack.c.b16 %v1442, %v1438
    %v1603 = vpack.c.b16 %v1443, %v1439
    %v1604 = vpack.c.b16 %v1444, %v1440
    %v1605 = vpack.c.b16 %v1449, %v1445
    %v1606 = vpack.c.b16 %v1450, %v1446
    %v1607 = vpack.c.b16 %v1451, %v1447
    %v1608 = vpack.c.b16 %v1452, %v1448
    %v1609 = vpack.c.b16 %v1457, %v1453
    %v1610 = vpack.c.b16 %v1458, %v1454
    %v1611 = vpack.c.b16 %v1459, %v1455
    %v1612 = vpack.c.b16 %v1460, %v1456
    %v1613 = vpack.c.b16 %v1465, %v1461
    %v1614 = vpack.c.b16 %v1466, %v1462
    %v1615 = vpack.c.b16 %v1467, %v1463
    %v1616 = vpack.c.b16 %v1468, %v1464
    %v1617 = vpack.c.b16 %v1473, %v1469
    %v1618 = vpack.c.b16 %v1474, %v1470
    %v1619 = vpack.c.b16 %v1475, %v1471
    %v1620 = vpack.c.b16 %v1476, %v1472
    %v1621 = vpack.c.b16 %v1481, %v1477
    %v1622 = vpack.c.b16 %v1482, %v1478
    %v1623 = vpack.c.b16 %v1483, %v1479
    %v1624 = vpack.c.b16 %v1484, %v1480
    %v1625 = vpack.c.b16 %v1489, %v1485
    %v1626 = vpack.c.b16 %v1490, %v1486
    %v1627 = vpack.c.b16 %v1491, %v1487
    %v1628 = vpack.c.b16 %v1492, %v1488
    %v1629 = vpack.c.b16 %v1497, %v1493
    %v1630 = vpack.c.b16 %v1498, %v1494
    %v1631 = vpack.c.b16 %v1499, %v1495
    %v1632 = vpack.c.b16 %v1500, %v1496
    %v1633 = vpack.c.b16 %v1505, %v1501
    %v1634 = vpack.c.b16 %v1506, %v1502
    %v1635 = vpack.c.b16 %v1507, %v1503
    %v1636 = vpack.c.b16 %v1508, %v1504
    %1765 = vmatprep.subr.bf16.mxu0 %v1510
    %1766 = vmatpush1.bf16.msra.mxu0 %v1509
    %1767 = vmatprep.subr.bf16.mxu0 %v1514
    %1768 = vmatpush1.bf16.msra.mxu0 %v1513
    %1769 = vmatprep.subr.bf16.mxu0 %v1518
    %1770 = vmatpush1.bf16.msra.mxu0 %v1517
    %1771 = vmatprep.subr.bf16.mxu0 %v1522
    %1772 = vmatpush1.bf16.msra.mxu0 %v1521
    %1773 = vmatprep.subr.bf16.mxu0 %v1526
    %1774 = vmatpush1.bf16.msra.mxu0 %v1525
    %1775 = vmatprep.subr.bf16.mxu0 %v1530
    %1776 = vmatpush1.bf16.msra.mxu0 %v1529
    %1777 = vmatprep.subr.bf16.mxu0 %v1534
    %1778 = vmatpush1.bf16.msra.mxu0 %v1533
    %1779 = vmatprep.subr.bf16.mxu0 %v1538
    %1780 = vmatpush1.bf16.msra.mxu0 %v1537
    %1781 = vmatprep.subr.bf16.mxu0 %v1542
    %1782 = vmatpush1.bf16.msra.mxu0 %v1541
    %1783 = vmatprep.subr.bf16.mxu0 %v1546
    %1784 = vmatpush1.bf16.msra.mxu0 %v1545
    %1785 = vmatprep.subr.bf16.mxu0 %v1550
    %1786 = vmatpush1.bf16.msra.mxu0 %v1549
    %1787 = vmatprep.subr.bf16.mxu0 %v1554
    %1788 = vmatpush1.bf16.msra.mxu0 %v1553
    %1789 = vmatprep.subr.bf16.mxu0 %v1558
    %1790 = vmatpush1.bf16.msra.mxu0 %v1557
    %1791 = vmatprep.subr.bf16.mxu0 %v1562
    %1792 = vmatpush1.bf16.msra.mxu0 %v1561
    %1793 = vmatprep.subr.bf16.mxu0 %v1566
    %1794 = vmatpush1.bf16.msra.mxu0 %v1565
    %1795 = vmatprep.subr.bf16.mxu0 %v1570
    %1796 = vmatpush1.bf16.msra.mxu0 %v1569
    %1797 = vmatprep.mubr.bf16.mxu0 %v972
    %1798 = vmatmul.mubr.bf16.gmra.mrb[0].mxu0 %v971
    %v1799 = vpop.f32.mrb[0].mxu0
    %v1800 = vadd.f32 %v1108, %v1799
    %v1801 = vpop.f32.mrb[0].mxu0
    %v1802 = vadd.f32 %v1112, %v1801
    %v1803 = vpop.f32.mrb[0].mxu0
    %v1804 = vadd.f32 %v1108, %v1803
    %v1805 = vpop.f32.mrb[0].mxu0
    %v1806 = vadd.f32 %v1112, %v1805
    %1807 = vdwg.mxu0
    %1808 = vmatprep.subr.bf16.mxu0 %v1574
    %1809 = vmatpush1.bf16.msra.mxu0 %v1573
    %1810 = vmatprep.subr.bf16.mxu0 %v1578
    %1811 = vmatpush1.bf16.msra.mxu0 %v1577
    %1812 = vmatprep.subr.bf16.mxu0 %v1582
    %1813 = vmatpush1.bf16.msra.mxu0 %v1581
    %1814 = vmatprep.subr.bf16.mxu0 %v1586
    %1815 = vmatpush1.bf16.msra.mxu0 %v1585
    %1816 = vmatprep.subr.bf16.mxu0 %v1590
    %1817 = vmatpush1.bf16.msra.mxu0 %v1589
    %1818 = vmatprep.subr.bf16.mxu0 %v1594
    %1819 = vmatpush1.bf16.msra.mxu0 %v1593
    %1820 = vmatprep.subr.bf16.mxu0 %v1598
    %1821 = vmatpush1.bf16.msra.mxu0 %v1597
    %1822 = vmatprep.subr.bf16.mxu0 %v1602
    %1823 = vmatpush1.bf16.msra.mxu0 %v1601
    %1824 = vmatprep.subr.bf16.mxu0 %v1606
    %1825 = vmatpush1.bf16.msra.mxu0 %v1605
    %1826 = vmatprep.subr.bf16.mxu0 %v1610
    %1827 = vmatpush1.bf16.msra.mxu0 %v1609
    %1828 = vmatprep.subr.bf16.mxu0 %v1614
    %1829 = vmatpush1.bf16.msra.mxu0 %v1613
    %1830 = vmatprep.subr.bf16.mxu0 %v1618
    %1831 = vmatpush1.bf16.msra.mxu0 %v1617
    %1832 = vmatprep.subr.bf16.mxu0 %v1622
    %1833 = vmatpush1.bf16.msra.mxu0 %v1621
    %1834 = vmatprep.subr.bf16.mxu0 %v1626
    %1835 = vmatpush1.bf16.msra.mxu0 %v1625
    %1836 = vmatprep.subr.bf16.mxu0 %v1630
    %1837 = vmatpush1.bf16.msra.mxu0 %v1629
    %1838 = vmatprep.subr.bf16.mxu0 %v1634
    %1839 = vmatpush1.bf16.msra.mxu0 %v1633
    %1840 = vmatprep.mubr.bf16.mxu0 %v974
    %1841 = vmatmul.mubr.bf16.gmra.mrb[0].mxu0 %v973
    %v1842 = vpop.f32.mrb[0].mxu0
    %v1843 = vadd.f32 %v1800, %v1842
    %v1844 = vpop.f32.mrb[0].mxu0
    %v1845 = vadd.f32 %v1802, %v1844
    %v1846 = vpop.f32.mrb[0].mxu0
    %v1847 = vadd.f32 %v1804, %v1846
    %v1848 = vpop.f32.mrb[0].mxu0
    %v1849 = vadd.f32 %v1806, %v1848
    %1850 = vdwg.mxu0
    %1851 = vmatprep.subr.bf16.mxu0 %v1512
    %1852 = vmatpush1.bf16.msra.mxu0 %v1511
    %1853 = vmatprep.subr.bf16.mxu0 %v1516
    %1854 = vmatpush1.bf16.msra.mxu0 %v1515
    %1855 = vmatprep.subr.bf16.mxu0 %v1520
    %1856 = vmatpush1.bf16.msra.mxu0 %v1519
    %1857 = vmatprep.subr.bf16.mxu0 %v1524
    %1858 = vmatpush1.bf16.msra.mxu0 %v1523
    %1859 = vmatprep.subr.bf16.mxu0 %v1528
    %1860 = vmatpush1.bf16.msra.mxu0 %v1527
    %1861 = vmatprep.subr.bf16.mxu0 %v1532
    %1862 = vmatpush1.bf16.msra.mxu0 %v1531
    %1863 = vmatprep.subr.bf16.mxu0 %v1536
    %1864 = vmatpush1.bf16.msra.mxu0 %v1535
    %1865 = vmatprep.subr.bf16.mxu0 %v1540
    %1866 = vmatpush1.bf16.msra.mxu0 %v1539
    %1867 = vmatprep.subr.bf16.mxu0 %v1544
    %1868 = vmatpush1.bf16.msra.mxu0 %v1543
    %1869 = vmatprep.subr.bf16.mxu0 %v1548
    %1870 = vmatpush1.bf16.msra.mxu0 %v1547
    %1871 = vmatprep.subr.bf16.mxu0 %v1552
    %1872 = vmatpush1.bf16.msra.mxu0 %v1551
    %1873 = vmatprep.subr.bf16.mxu0 %v1556
    %1874 = vmatpush1.bf16.msra.mxu0 %v1555
    %1875 = vmatprep.subr.bf16.mxu0 %v1560
    %1876 = vmatpush1.bf16.msra.mxu0 %v1559
    %1877 = vmatprep.subr.bf16.mxu0 %v1564
    %1878 = vmatpush1.bf16.msra.mxu0 %v1563
    %1879 = vmatprep.subr.bf16.mxu0 %v1568
    %1880 = vmatpush1.bf16.msra.mxu0 %v1567
    %1881 = vmatprep.subr.bf16.mxu0 %v1572
    %1882 = vmatpush1.bf16.msra.mxu0 %v1571
    %1883 = vmatprep.mubr.bf16.mxu0 %v972
    %1884 = vmatmul.mubr.bf16.gmra.mrb[0].mxu0 %v971
    %v1885 = vpop.f32.mrb[0].mxu0
    %v1886 = vadd.f32 %v1116, %v1885
    %v1887 = vpop.f32.mrb[0].mxu0
    %v1888 = vadd.f32 %v1120, %v1887
    %v1889 = vpop.f32.mrb[0].mxu0
    %v1890 = vadd.f32 %v1116, %v1889
    %v1891 = vpop.f32.mrb[0].mxu0
    %v1892 = vadd.f32 %v1120, %v1891
    %1893 = vdwg.mxu0
    %1894 = vmatprep.subr.bf16.mxu0 %v1576
    %1895 = vmatpush1.bf16.msra.mxu0 %v1575
    %1896 = vmatprep.subr.bf16.mxu0 %v1580
    %1897 = vmatpush1.bf16.msra.mxu0 %v1579
    %1898 = vmatprep.subr.bf16.mxu0 %v1584
    %1899 = vmatpush1.bf16.msra.mxu0 %v1583
    %1900 = vmatprep.subr.bf16.mxu0 %v1588
    %1901 = vmatpush1.bf16.msra.mxu0 %v1587
    %1902 = vmatprep.subr.bf16.mxu0 %v1592
    %1903 = vmatpush1.bf16.msra.mxu0 %v1591
    %1904 = vmatprep.subr.bf16.mxu0 %v1596
    %1905 = vmatpush1.bf16.msra.mxu0 %v1595
    %1906 = vmatprep.subr.bf16.mxu0 %v1600
    %1907 = vmatpush1.bf16.msra.mxu0 %v1599
    %1908 = vmatprep.subr.bf16.mxu0 %v1604
    %1909 = vmatpush1.bf16.msra.mxu0 %v1603
    %1910 = vmatprep.subr.bf16.mxu0 %v1608
    %1911 = vmatpush1.bf16.msra.mxu0 %v1607
    %1912 = vmatprep.subr.bf16.mxu0 %v1612
    %1913 = vmatpush1.bf16.msra.mxu0 %v1611
    %1914 = vmatprep.subr.bf16.mxu0 %v1616
    %1915 = vmatpush1.bf16.msra.mxu0 %v1615
    %1916 = vmatprep.subr.bf16.mxu0 %v1620
    %1917 = vmatpush1.bf16.msra.mxu0 %v1619
    %1918 = vmatprep.subr.bf16.mxu0 %v1624
    %1919 = vmatpush1.bf16.msra.mxu0 %v1623
    %1920 = vmatprep.subr.bf16.mxu0 %v1628
    %1921 = vmatpush1.bf16.msra.mxu0 %v1627
    %1922 = vmatprep.subr.bf16.mxu0 %v1632
    %1923 = vmatpush1.bf16.msra.mxu0 %v1631
    %1924 = vmatprep.subr.bf16.mxu0 %v1636
    %1925 = vmatpush1.bf16.msra.mxu0 %v1635
    %1926 = vmatprep.mubr.bf16.mxu0 %v974
    %1927 = vmatmul.mubr.bf16.gmra.mrb[0].mxu0 %v973
    %v1928 = vpop.f32.mrb[0].mxu0
    %v1929 = vadd.f32 %v1886, %v1928
    %v1930 = vpop.f32.mrb[0].mxu0
    %v1931 = vadd.f32 %v1888, %v1930
    %v1932 = vpop.f32.mrb[0].mxu0
    %v1933 = vadd.f32 %v1890, %v1932
    %v1934 = vpop.f32.mrb[0].mxu0
    %v1935 = vadd.f32 %v1892, %v1934
    %1936 = vdwg.mxu0
    %v1937 = vmax.f32 %v1843, 0.0
    %v1938 = vmax.f32 %v1845, 0.0
    %v1939 = vmax.f32 %v1929, 0.0
    %v1940 = vmax.f32 %v1931, 0.0
    %v1941 = vmax.f32 %v1847, 0.0
    %v1942 = vmax.f32 %v1849, 0.0
    %v1943 = vmax.f32 %v1933, 0.0
    %v1944 = vmax.f32 %v1935, 0.0
    %v1945 = vmin.f32 %v1937, 6.0
    %v1946 = vmin.f32 %v1938, 6.0
    %v1947 = vmin.f32 %v1939, 6.0
    %v1948 = vmin.f32 %v1940, 6.0
    %v1949 = vmin.f32 %v1941, 6.0
    %v1950 = vmin.f32 %v1942, 6.0
    %v1951 = vmin.f32 %v1943, 6.0
    %v1952 = vmin.f32 %v1944, 6.0
    %v1953 = vpack.c.bf16 %v1949, %v1945
    %v1954 = vpack.c.bf16 %v1950, %v1946
    %v1955 = vpack.c.bf16 %v1951, %v1947
    %v1956 = vpack.c.bf16 %v1952, %v1948
    %v1957 = vld [vmem:[#allocation13] sm:$0xf]
    %v1958 = vld [vmem:[#allocation13 + $0x4] sm:$0xf]
    %v1959 = vld [vmem:[#allocation13 + $0x8] sm:$0xf]
    %v1960 = vld [vmem:[#allocation13 + $0xc] sm:$0xf]
    %v1961 = vld [vmem:[#allocation13 + $0x10] sm:$0xf]
    %v1962 = vld [vmem:[#allocation13 + $0x14] sm:$0xf]
    %v1963 = vld [vmem:[#allocation13 + $0x18] sm:$0xf]
    %v1964 = vld [vmem:[#allocation13 + $0x1c] sm:$0xf]
    %v1965 = vld [vmem:[#allocation13 + $0x20] sm:$0xf]
    %v1966 = vld [vmem:[#allocation13 + $0x24] sm:$0xf]
    %v1967 = vld [vmem:[#allocation13 + $0x28] sm:$0xf]
    %v1968 = vld [vmem:[#allocation13 + $0x2c] sm:$0xf]
    %v1969 = vld [vmem:[#allocation13 + $0x30] sm:$0xf]
    %v1970 = vld [vmem:[#allocation13 + $0x34] sm:$0xf]
    %v1971 = vld [vmem:[#allocation13 + $0x38] sm:$0xf]
    %v1972 = vld [vmem:[#allocation13 + $0x3c] sm:$0xf]
    %v1973 = vld [vmem:[#allocation13 + $0x40] sm:$0xf]
    %v1974 = vld [vmem:[#allocation13 + $0x44] sm:$0xf]
    %v1975 = vld [vmem:[#allocation13 + $0x48] sm:$0xf]
    %v1976 = vld [vmem:[#allocation13 + $0x4c] sm:$0xf]
    %v1977 = vld [vmem:[#allocation13 + $0x50] sm:$0xf]
    %v1978 = vld [vmem:[#allocation13 + $0x54] sm:$0xf]
    %v1979 = vld [vmem:[#allocation13 + $0x58] sm:$0xf]
    %v1980 = vld [vmem:[#allocation13 + $0x5c] sm:$0xf]
    %v1981 = vld [vmem:[#allocation13 + $0x60] sm:$0xf]
    %v1982 = vld [vmem:[#allocation13 + $0x64] sm:$0xf]
    %v1983 = vld [vmem:[#allocation13 + $0x68] sm:$0xf]
    %v1984 = vld [vmem:[#allocation13 + $0x6c] sm:$0xf]
    %v1985 = vld [vmem:[#allocation13 + $0x70] sm:$0xf]
    %v1986 = vld [vmem:[#allocation13 + $0x74] sm:$0xf]
    %v1987 = vld [vmem:[#allocation13 + $0x78] sm:$0xf]
    %v1988 = vld [vmem:[#allocation13 + $0x7c] sm:$0xf]
    %v1989 = vld [vmem:[#allocation13 + $0x80] sm:$0xf]
    %v1990 = vld [vmem:[#allocation13 + $0x84] sm:$0xf]
    %v1991 = vld [vmem:[#allocation13 + $0x88] sm:$0xf]
    %v1992 = vld [vmem:[#allocation13 + $0x8c] sm:$0xf]
    %v1993 = vld [vmem:[#allocation13 + $0x90] sm:$0xf]
    %v1994 = vld [vmem:[#allocation13 + $0x94] sm:$0xf]
    %v1995 = vld [vmem:[#allocation13 + $0x98] sm:$0xf]
    %v1996 = vld [vmem:[#allocation13 + $0x9c] sm:$0xf]
    %v1997 = vld [vmem:[#allocation13 + $0xa0] sm:$0xf]
    %v1998 = vld [vmem:[#allocation13 + $0xa4] sm:$0xf]
    %v1999 = vld [vmem:[#allocation13 + $0xa8] sm:$0xf]
    %v2000 = vld [vmem:[#allocation13 + $0xac] sm:$0xf]
    %v2001 = vld [vmem:[#allocation13 + $0xb0] sm:$0xf]
    %v2002 = vld [vmem:[#allocation13 + $0xb4] sm:$0xf]
    %v2003 = vld [vmem:[#allocation13 + $0xb8] sm:$0xf]
    %v2004 = vld [vmem:[#allocation13 + $0xbc] sm:$0xf]
    %v2005 = vld [vmem:[#allocation13 + $0xc0] sm:$0xf]
    %v2006 = vld [vmem:[#allocation13 + $0xc4] sm:$0xf]
    %v2007 = vld [vmem:[#allocation13 + $0xc8] sm:$0xf]
    %v2008 = vld [vmem:[#allocation13 + $0xcc] sm:$0xf]
    %v2009 = vld [vmem:[#allocation13 + $0xd0] sm:$0xf]
    %v2010 = vld [vmem:[#allocation13 + $0xd4] sm:$0xf]
    %v2011 = vld [vmem:[#allocation13 + $0xd8] sm:$0xf]
    %v2012 = vld [vmem:[#allocation13 + $0xdc] sm:$0xf]
    %v2013 = vld [vmem:[#allocation13 + $0xe0] sm:$0xf]
    %v2014 = vld [vmem:[#allocation13 + $0xe4] sm:$0xf]
    %v2015 = vld [vmem:[#allocation13 + $0xe8] sm:$0xf]
    %v2016 = vld [vmem:[#allocation13 + $0xec] sm:$0xf]
    %v2017 = vld [vmem:[#allocation13 + $0xf0] sm:$0xf]
    %v2018 = vld [vmem:[#allocation13 + $0xf4] sm:$0xf]
    %v2019 = vld [vmem:[#allocation13 + $0xf8] sm:$0xf]
    %v2020 = vld [vmem:[#allocation13 + $0xfc] sm:$0xf]
    %v2021 = vld [vmem:[%s12] sm:$0x1]
    %v2023 = vlaneseq
    %v2024 = vshrl.u32 %v2023, 7
    %v2025 = vsub.s32 0, %v2024
    %v2026 = vrot.slane %v2021, %v2025
    %v2092 = vunpack.c.l.b16 %v1957
    %v2093 = vunpack.c.l.b16 %v1958
    %v2094 = vunpack.c.l.b16 %v1959
    %v2095 = vunpack.c.l.b16 %v1960
    %v2096 = vunpack.c.l.b16 %v1961
    %v2097 = vunpack.c.l.b16 %v1962
    %v2098 = vunpack.c.l.b16 %v1963
    %v2099 = vunpack.c.l.b16 %v1964
    %v2100 = vunpack.c.l.b16 %v1965
    %v2101 = vunpack.c.l.b16 %v1966
    %v2102 = vunpack.c.l.b16 %v1967
    %v2103 = vunpack.c.l.b16 %v1968
    %v2104 = vunpack.c.l.b16 %v1969
    %v2105 = vunpack.c.l.b16 %v1970
    %v2106 = vunpack.c.l.b16 %v1971
    %v2107 = vunpack.c.l.b16 %v1972
    %v2108 = vunpack.c.l.b16 %v1973
    %v2109 = vunpack.c.l.b16 %v1974
    %v2110 = vunpack.c.l.b16 %v1975
    %v2111 = vunpack.c.l.b16 %v1976
    %v2112 = vunpack.c.l.b16 %v1977
    %v2113 = vunpack.c.l.b16 %v1978
    %v2114 = vunpack.c.l.b16 %v1979
    %v2115 = vunpack.c.l.b16 %v1980
    %v2116 = vunpack.c.l.b16 %v1981
    %v2117 = vunpack.c.l.b16 %v1982
    %v2118 = vunpack.c.l.b16 %v1983
    %v2119 = vunpack.c.l.b16 %v1984
    %v2120 = vunpack.c.l.b16 %v1985
    %v2121 = vunpack.c.l.b16 %v1986
    %v2122 = vunpack.c.l.b16 %v1987
    %v2123 = vunpack.c.l.b16 %v1988
    %v2124 = vunpack.c.l.b16 %v1989
    %v2125 = vunpack.c.l.b16 %v1990
    %v2126 = vunpack.c.l.b16 %v1991
    %v2127 = vunpack.c.l.b16 %v1992
    %v2128 = vunpack.c.l.b16 %v1993
    %v2129 = vunpack.c.l.b16 %v1994
    %v2130 = vunpack.c.l.b16 %v1995
    %v2131 = vunpack.c.l.b16 %v1996
    %v2132 = vunpack.c.l.b16 %v1997
    %v2133 = vunpack.c.l.b16 %v1998
    %v2134 = vunpack.c.l.b16 %v1999
    %v2135 = vunpack.c.l.b16 %v2000
    %v2136 = vunpack.c.l.b16 %v2001
    %v2137 = vunpack.c.l.b16 %v2002
    %v2138 = vunpack.c.l.b16 %v2003
    %v2139 = vunpack.c.l.b16 %v2004
    %v2140 = vunpack.c.l.b16 %v2005
    %v2141 = vunpack.c.l.b16 %v2006
    %v2142 = vunpack.c.l.b16 %v2007
    %v2143 = vunpack.c.l.b16 %v2008
    %v2144 = vunpack.c.l.b16 %v2009
    %v2145 = vunpack.c.l.b16 %v2010
    %v2146 = vunpack.c.l.b16 %v2011
    %v2147 = vunpack.c.l.b16 %v2012
    %v2148 = vunpack.c.l.b16 %v2013
    %v2149 = vunpack.c.l.b16 %v2014
    %v2150 = vunpack.c.l.b16 %v2015
    %v2151 = vunpack.c.l.b16 %v2016
    %v2152 = vunpack.c.l.b16 %v2017
    %v2153 = vunpack.c.l.b16 %v2018
    %v2154 = vunpack.c.l.b16 %v2019
    %v2155 = vunpack.c.l.b16 %v2020
    %v2156 = vpack.c.b16 %v2093, %v2092
    %v2157 = vpack.c.b16 %v2095, %v2094
    %v2158 = vpack.c.b16 %v2097, %v2096
    %v2159 = vpack.c.b16 %v2099, %v2098
    %v2160 = vpack.c.b16 %v2101, %v2100
    %v2161 = vpack.c.b16 %v2103, %v2102
    %v2162 = vpack.c.b16 %v2105, %v2104
    %v2163 = vpack.c.b16 %v2107, %v2106
    %v2164 = vpack.c.b16 %v2109, %v2108
    %v2165 = vpack.c.b16 %v2111, %v2110
    %v2166 = vpack.c.b16 %v2113, %v2112
    %v2167 = vpack.c.b16 %v2115, %v2114
    %v2168 = vpack.c.b16 %v2117, %v2116
    %v2169 = vpack.c.b16 %v2119, %v2118
    %v2170 = vpack.c.b16 %v2121, %v2120
    %v2171 = vpack.c.b16 %v2123, %v2122
    %v2172 = vpack.c.b16 %v2125, %v2124
    %v2173 = vpack.c.b16 %v2127, %v2126
    %v2174 = vpack.c.b16 %v2129, %v2128
    %v2175 = vpack.c.b16 %v2131, %v2130
    %v2176 = vpack.c.b16 %v2133, %v2132
    %v2177 = vpack.c.b16 %v2135, %v2134
    %v2178 = vpack.c.b16 %v2137, %v2136
    %v2179 = vpack.c.b16 %v2139, %v2138
    %v2180 = vpack.c.b16 %v2141, %v2140
    %v2181 = vpack.c.b16 %v2143, %v2142
    %v2182 = vpack.c.b16 %v2145, %v2144
    %v2183 = vpack.c.b16 %v2147, %v2146
    %v2184 = vpack.c.b16 %v2149, %v2148
    %v2185 = vpack.c.b16 %v2151, %v2150
    %v2186 = vpack.c.b16 %v2153, %v2152
    %v2187 = vpack.c.b16 %v2155, %v2154
    %2220 = vmatprep.subr.bf16.mxu0 0
    %2221 = vmatpush1.bf16.msra.mxu0 %v2156
    %2222 = vmatprep.subr.bf16.mxu0 0
    %2223 = vmatpush1.bf16.msra.mxu0 %v2157
    %2224 = vmatprep.subr.bf16.mxu0 0
    %2225 = vmatpush1.bf16.msra.mxu0 %v2158
    %2226 = vmatprep.subr.bf16.mxu0 0
    %2227 = vmatpush1.bf16.msra.mxu0 %v2159
    %2228 = vmatprep.subr.bf16.mxu0 0
    %2229 = vmatpush1.bf16.msra.mxu0 %v2160
    %2230 = vmatprep.subr.bf16.mxu0 0
    %2231 = vmatpush1.bf16.msra.mxu0 %v2161
    %2232 = vmatprep.subr.bf16.mxu0 0
    %2233 = vmatpush1.bf16.msra.mxu0 %v2162
    %2234 = vmatprep.subr.bf16.mxu0 0
    %2235 = vmatpush1.bf16.msra.mxu0 %v2163
    %2236 = vmatprep.subr.bf16.mxu0 0
    %2237 = vmatpush1.bf16.msra.mxu0 %v2164
    %2238 = vmatprep.subr.bf16.mxu0 0
    %2239 = vmatpush1.bf16.msra.mxu0 %v2165
    %2240 = vmatprep.subr.bf16.mxu0 0
    %2241 = vmatpush1.bf16.msra.mxu0 %v2166
    %2242 = vmatprep.subr.bf16.mxu0 0
    %2243 = vmatpush1.bf16.msra.mxu0 %v2167
    %2244 = vmatprep.subr.bf16.mxu0 0
    %2245 = vmatpush1.bf16.msra.mxu0 %v2168
    %2246 = vmatprep.subr.bf16.mxu0 0
    %2247 = vmatpush1.bf16.msra.mxu0 %v2169
    %2248 = vmatprep.subr.bf16.mxu0 0
    %2249 = vmatpush1.bf16.msra.mxu0 %v2170
    %2250 = vmatprep.subr.bf16.mxu0 0
    %2251 = vmatpush1.bf16.msra.mxu0 %v2171
    %2252 = vmatprep.mubr.bf16.mxu0 %v1954
    %2253 = vmatmul.mubr.bf16.gmra.mrb[0].mxu0 %v1953
    %v2254 = vpop.f32.mrb[0].mxu0
    %v2255 = vadd.f32 %v2026, %v2254
    %v2256 = vpop.f32.mrb[0].mxu0
    %v2257 = vpop.f32.mrb[0].mxu0
    %v2258 = vadd.f32 %v2026, %v2257
    %v2259 = vpop.f32.mrb[0].mxu0
    %2260 = vdwg.mxu0
    %2261 = vmatprep.subr.bf16.mxu0 0
    %2262 = vmatpush1.bf16.msra.mxu0 %v2172
    %2263 = vmatprep.subr.bf16.mxu0 0
    %2264 = vmatpush1.bf16.msra.mxu0 %v2173
    %2265 = vmatprep.subr.bf16.mxu0 0
    %2266 = vmatpush1.bf16.msra.mxu0 %v2174
    %2267 = vmatprep.subr.bf16.mxu0 0
    %2268 = vmatpush1.bf16.msra.mxu0 %v2175
    %2269 = vmatprep.subr.bf16.mxu0 0
    %2270 = vmatpush1.bf16.msra.mxu0 %v2176
    %2271 = vmatprep.subr.bf16.mxu0 0
    %2272 = vmatpush1.bf16.msra.mxu0 %v2177
    %2273 = vmatprep.subr.bf16.mxu0 0
    %2274 = vmatpush1.bf16.msra.mxu0 %v2178
    %2275 = vmatprep.subr.bf16.mxu0 0
    %2276 = vmatpush1.bf16.msra.mxu0 %v2179
    %2277 = vmatprep.subr.bf16.mxu0 0
    %2278 = vmatpush1.bf16.msra.mxu0 %v2180
    %2279 = vmatprep.subr.bf16.mxu0 0
    %2280 = vmatpush1.bf16.msra.mxu0 %v2181
    %2281 = vmatprep.subr.bf16.mxu0 0
    %2282 = vmatpush1.bf16.msra.mxu0 %v2182
    %2283 = vmatprep.subr.bf16.mxu0 0
    %2284 = vmatpush1.bf16.msra.mxu0 %v2183
    %2285 = vmatprep.subr.bf16.mxu0 0
    %2286 = vmatpush1.bf16.msra.mxu0 %v2184
    %2287 = vmatprep.subr.bf16.mxu0 0
    %2288 = vmatpush1.bf16.msra.mxu0 %v2185
    %2289 = vmatprep.subr.bf16.mxu0 0
    %2290 = vmatpush1.bf16.msra.mxu0 %v2186
    %2291 = vmatprep.subr.bf16.mxu0 0
    %2292 = vmatpush1.bf16.msra.mxu0 %v2187
    %2293 = vmatprep.mubr.bf16.mxu0 %v1956
    %2294 = vmatmul.mubr.bf16.gmra.mrb[0].mxu0 %v1955
    %v2295 = vpop.f32.mrb[0].mxu0
    %v2296 = vadd.f32 %v2255, %v2295
    %v2297 = vpop.f32.mrb[0].mxu0
    %v2298 = vpop.f32.mrb[0].mxu0
    %v2299 = vadd.f32 %v2258, %v2298
    %v2300 = vpop.f32.mrb[0].mxu0
    %2301 = vdwg.mxu0
    %v2302 = vpack.c.bf16 %v2299, %v2296
    %v2304 = vunpack.c.l.b16 %v2302
    %v2305 = vunpack.c.h.b16 %v2302
    %v2306 = vpack.c.b16 %v2304, %v2304
    %v2307 = vpack.c.b16 %v2305, %v2305
    %2310 = vst [vmem:[#allocation14] sm:$0xf] %v2306
    %2311 = vst [vmem:[#allocation14 + $0x4] sm:$0xf] %v2307
    // Predicated region
    $region82: #{tpu_custom_call.1} parent=1 // pred_check
      _
    $region83: #{tpu_custom_call.1} parent=1 // pred_check_branch
      %2313 = sbr.rel (0) target = $region85
    $region84: #{tpu_custom_call.1} parent=1 // pred_region
      %s2315 = ssub.s32 128, 128
      %2316 = vsyncadd [#allocation4], %s2315
      %s2317 = sshll.u32 [#allocation14], 4
      %s2318 = int_to_ptr.vmem [resolvable:$true] %s2317
      %2323 = dma.vmem_to_hbm [thread:$0]  %s2318, 128, %s13, [#allocation4], 64, 64, 4
    $region85: #{tpu_custom_call.1} parent=1 // pred_fallthru
      _
    // Predicated region
    $region86: #{tpu_custom_call.1} parent=1 // pred_check
      _
    $region87: #{tpu_custom_call.1} parent=1 // pred_check_branch
      %2325 = sbr.rel (0) target = $region89
    $region88: #{tpu_custom_call.1} parent=1 // pred_region
      %2326 = dma.done [#allocation4], 128
    $region89: #{tpu_custom_call.1} parent=1 // pred_fallthru
      _
    %2327 = vsyncpa [#allocation3], 1
    %2328 = vsyncpa [#allocation6], 1
    %2329 = vsyncpa [#allocation9], 1
    %2330 = vsyncpa [#allocation12], 1
    %2331 = vsyncpa [#allocation4], 1

</llo_original>
